<compile_context>
chip_gen: v7x
topology: tpu7x:2x2x1
jax: 0.10.0
libtpu: 0.0.40
codegen_flags: <defaults>
</compile_context>

<pallas_src>
import functools

import jax
import jax.numpy as jnp
from jax import lax
from jax.experimental import pallas as pl
from jax.experimental.pallas import tpu as pltpu

EPS = 1e-5
LANE = 128
COMPUTE_DTYPE = jnp.bfloat16            # matmul operands; accumulation stays f32
VMEM_LIMIT_BYTES = 48 * 1024 * 1024     # explicit VMEM budget
MAX_TILE_ROWS = 256                     # keep the (rows, 128) f32 accumulator small


def _round_up(x, m):
    return (x + m - 1) // m * m


def _pick_tile_h(ho, slab_w, max_rows=MAX_TILE_ROWS):
    """Largest divisor TH of Ho with TH*slab_w <= max_rows (fallback 1)."""
    best = 1
    for th in range(1, ho + 1):
        if ho % th == 0 and th * slab_w <= max_rows:
            best = th
    return best


def _halo_row_tiles(flat, tile_h, slab_w, halo, n_tiles):
    """Gather overlapping row-tiles (halo rows duplicated, cheap) along axis -2.

    flat: (..., R, C) flattened spatial rows, already padded with `halo` extra
    rows at the end.  Returns (lead*n_tiles, ..., L, C) with
    L = (tile_h + halo) * slab_w + halo.
    """
    L = (tile_h + halo) * slab_w + halo
    tiles = [lax.slice_in_dim(flat, r * tile_h * slab_w,
                              r * tile_h * slab_w + L, axis=-2)
             for r in range(n_tiles)]
    st = jnp.stack(tiles, axis=1)
    return st.reshape((flat.shape[0] * n_tiles,) + st.shape[2:])


# ----------------------------- Pallas kernels ------------------------------

def _accum_taps(tap, w_ref, rows, n_out):
    """sum_k tap(k) @ w[k]  with f32 accumulation (9 MXU matmuls, static unroll)."""
    acc = jnp.zeros((rows, n_out), jnp.float32)
    for k in range(9):
        acc += jnp.dot(tap(k), w_ref[k], preferred_element_type=jnp.float32)
    return acc


def make_conv1_kernel(stride, tile_h, wo, e, out_dtype):
    """3x3 conv (stride folded into s*s phases) + folded-BN bias + ReLU."""
    wp = wo + e
    rows = tile_h * wp

    def kernel(x_ref, w_ref, b_ref, o_ref):
        # x_ref: (1, s*s, L, Cin)  w_ref: (9, Cin, Cout)  b_ref: (1, Cout)
        def tap(k):
            dy, dx = k // 3, k % 3
            phase = (dy % stride) * stride + (dx % stride)
            start = (dy // stride) * wp + (dx // stride)
            return x_ref[0, phase, start:start + rows, :]

        acc = _accum_taps(tap, w_ref, rows, w_ref.shape[2])
        o_ref[0] = jnp.maximum(acc + b_ref[...], 0.0).astype(out_dtype)

    return kernel


def make_conv2_mix_kernel(tile_h, wo, has_downsample):
    """Fused: grouped 3x3 conv + BN + ReLU + 1x1 mix + shortcut + add + ReLU."""
    wp = wo + 2
    rows = tile_h * wp

    def mixed_residual(y_ref, w2_ref, b2_ref, wmix_ref):
        def tap(k):
            dy, dx = k // 3, k % 3
            start = dy * wp + dx
            return y_ref[0, start:start + rows, :]

        acc = _accum_taps(tap, w2_ref, rows, w2_ref.shape[2])
        y2 = jnp.maximum(acc + b2_ref[...], 0.0).astype(wmix_ref.dtype)
        return jnp.dot(y2, wmix_ref[...], preferred_element_type=jnp.float32)

    if has_downsample:
        def kernel(y_ref, sc_ref, w2_ref, b2_ref, wmix_ref, wds_ref, bds_ref, o_ref):
            mixed = mixed_residual(y_ref, w2_ref, b2_ref, wmix_ref)
            sc = jnp.dot(sc_ref[0], wds_ref[...],
                         preferred_element_type=jnp.float32) + bds_ref[...]
            o_ref[0] = jnp.maximum(mixed + sc, 0.0).astype(o_ref.dtype)
    else:
        def kernel(y_ref, sc_ref, w2_ref, b2_ref, wmix_ref, o_ref):
            mixed = mixed_residual(y_ref, w2_ref, b2_ref, wmix_ref)
            o_ref[0] = jnp.maximum(mixed + sc_ref[0].astype(jnp.float32),
                                   0.0).astype(o_ref.dtype)

    return kernel


# --------------------- parameter preparation (runs once) --------------------

def prepare_params(params, in_chan, out_chan, num_group,
                   compute_dtype=COMPUTE_DTYPE):
    """Fold eval-mode BN into conv weights, build the block-diagonal grouped
    weight, pad channels to the 128-lane width, pre-transpose to matmul layout."""
    cpin = _round_up(in_chan, LANE)
    cpout = _round_up(out_chan, LANE)

    def fold(bn):
        gamma, beta, mean, var = bn
        scale = gamma / jnp.sqrt(var + EPS)
        return scale, beta - mean * scale

    prep = {}

    scale1, bias1 = fold(params['bn1'])
    w1 = jnp.transpose(params['w1'], (2, 3, 1, 0)) * scale1          # (3,3,Cin,Cout)
    w1 = jnp.pad(w1, ((0, 0), (0, 0), (0, cpin - in_chan), (0, cpout - out_chan)))
    prep['w1'] = w1.reshape(9, cpin, cpout).astype(compute_dtype)
    prep['b1'] = jnp.pad(bias1, (0, cpout - out_chan)).reshape(1, cpout).astype(jnp.float32)

    # Grouped conv -> block-diagonal weight inside a single 128-lane chunk.
    scale2, bias2 = fold(params['bn2'])
    cg = out_chan // num_group
    blocks = jnp.transpose(params['w2'].reshape(num_group, cg, cg, 3, 3),
                           (0, 3, 4, 2, 1))                          # (G,3,3,cg_in,cg_out)
    eye = jnp.eye(num_group, dtype=params['w2'].dtype)
    w2 = jnp.einsum('gh,gyxij->yxgihj', eye, blocks).reshape(3, 3, out_chan, out_chan)
    w2 = w2 * scale2
    w2 = jnp.pad(w2, ((0, 0), (0, 0), (0, cpout - out_chan), (0, cpout - out_chan)))
    prep['w2'] = w2.reshape(9, cpout, cpout).astype(compute_dtype)
    prep['b2'] = jnp.pad(bias2, (0, cpout - out_chan)).reshape(1, cpout).astype(jnp.float32)

    wmix = params['wmix'][:, :, 0, 0].T                              # (Cin=Cout, Cout)
    wmix = jnp.pad(wmix, ((0, cpout - out_chan), (0, cpout - out_chan)))
    prep['wmix'] = wmix.astype(compute_dtype)

    if 'wds' in params:
        sds, bds = fold(params['bnds'])
        wds = params['wds'][:, :, 0, 0].T * sds                      # (Cin, Cout)
        wds = jnp.pad(wds, ((0, cpin - in_chan), (0, cpout - out_chan)))
        prep['wds'] = wds.astype(compute_dtype)
        prep['bds'] = jnp.pad(bds, (0, cpout - out_chan)).reshape(1, cpout).astype(jnp.float32)
    return prep


# ------------------------------- forward ------------------------------------

def basic_block_forward(x_nchw, prep, *, stride, in_chan, out_chan):
    if stride not in (1, 2):
        raise ValueError("stride must be 1 or 2")
    has_ds = 'wds' in prep
    if not has_ds and (stride != 1 or in_chan != out_chan):
        raise ValueError("identity shortcut requires stride==1 and in_chan==out_chan")

    cpin = _round_up(in_chan, LANE)
    cpout = _round_up(out_chan, LANE)

    x = jnp.transpose(x_nchw, (0, 2, 3, 1)).astype(COMPUTE_DTYPE)    # NCHW -> NHWC
    N, H, W, _ = x.shape
    x = jnp.pad(x, ((0, 0), (0, 0), (0, 0), (0, cpin - in_chan)))    # lane-dense channels
    Ho = (H - 1) // stride + 1
    Wo = (W - 1) // stride + 1

    # ---------------- stage 1: 3x3 conv (stride) + BN + ReLU -----------------
    # Strided conv -> unit-stride conv over s*s spatial phases of the padded
    # input; each tap becomes a contiguous row-slab of the flattened phase.
    e1 = 2 // stride
    s2 = stride * stride
    hp1, wp1 = Ho + e1, Wo + e1
    x_pad = jnp.pad(x, ((0, 0), (1, 1), (1, 1), (0, 0)))
    phases = []
    for py in range(stride):
        for px in range(stride):
            ph = x_pad[:, py:py + stride * hp1:stride, px:px + stride * wp1:stride, :]
            ph = jnp.pad(ph, ((0, 0), (0, hp1 - ph.shape[1]),
                              (0, wp1 - ph.shape[2]), (0, 0)))
            phases.append(ph)
    xph = jnp.stack(phases, axis=1).reshape(N, s2, hp1 * wp1, cpin)
    xph = jnp.pad(xph, ((0, 0), (0, 0), (0, e1), (0, 0)))            # slab overrun rows

    th1 = _pick_tile_h(Ho, wp1)
    t1 = Ho // th1
    rows1 = th1 * wp1
    l1 = (th1 + e1) * wp1 + e1
    x_tiled = _halo_row_tiles(xph, th1, wp1, e1, t1)                 # (N*t1, s2, l1, cpin)

    y1_slab = pl.pallas_call(
        make_conv1_kernel(stride, th1, Wo, e1, COMPUTE_DTYPE),
        out_shape=jax.ShapeDtypeStruct((N * t1, rows1, cpout), COMPUTE_DTYPE),
        grid=(N * t1,),
        in_specs=[
            pl.BlockSpec((1, s2, l1, cpin), lambda i: (i, 0, 0, 0)),
            pl.BlockSpec((9, cpin, cpout), lambda i: (0, 0, 0)),
            pl.BlockSpec((1, cpout), lambda i: (0, 0)),
        ],
        out_specs=pl.BlockSpec((1, rows1, cpout), lambda i: (i, 0, 0)),
        compiler_params=pltpu.CompilerParams(
            dimension_semantics=("parallel",),
            vmem_limit_bytes=VMEM_LIMIT_BYTES),
    )(x_tiled, prep['w1'], prep['b1'])

    # strip the over-computed pad column(s)
    y1 = y1_slab.reshape(N, Ho, wp1, cpout)[:, :, :Wo, :]            # (N,Ho,Wo,cpout)

    # ---- stage 2 (fused): grouped 3x3 conv + BN + ReLU + 1x1 mix
    #                       + shortcut (1x1 ds conv + BN | identity) + add + ReLU
    wp2 = Wo + 2
    y1_pad = jnp.pad(y1, ((0, 0), (1, 1), (1, 1), (0, 0)))
    yflat = y1_pad.reshape(N, (Ho + 2) * wp2, cpout)
    yflat = jnp.pad(yflat, ((0, 0), (0, 2), (0, 0)))

    th2 = _pick_tile_h(Ho, wp2)
    t2 = Ho // th2
    rows2 = th2 * wp2
    l2 = (th2 + 2) * wp2 + 2
    y_tiled = _halo_row_tiles(yflat, th2, wp2, 2, t2)                # (N*t2, l2, cpout)

    if has_ds:
        sc = x[:, ::stride, ::stride, :][:, :Ho, :Wo, :]             # (N,Ho,Wo,cpin)
    else:
        sc = x                                                       # stride==1, cpin==cpout
    sc = jnp.pad(sc, ((0, 0), (0, 0), (0, 2), (0, 0)))               # match slab layout
    sc_c = sc.shape[-1]
    sc_tiled = sc.reshape(N * t2, rows2, sc_c)

    in_specs = [
        pl.BlockSpec((1, l2, cpout), lambda i: (i, 0, 0)),
        pl.BlockSpec((1, rows2, sc_c), lambda i: (i, 0, 0)),
        pl.BlockSpec((9, cpout, cpout), lambda i: (0, 0, 0)),
        pl.BlockSpec((1, cpout), lambda i: (0, 0)),
        pl.BlockSpec((cpout, cpout), lambda i: (0, 0)),
    ]
    args = [y_tiled, sc_tiled, prep['w2'], prep['b2'], prep['wmix']]
    if has_ds:
        in_specs += [pl.BlockSpec((cpin, cpout), lambda i: (0, 0)),
                     pl.BlockSpec((1, cpout), lambda i: (0, 0))]
        args += [prep['wds'], prep['bds']]

    out_slab = pl.pallas_call(
        make_conv2_mix_kernel(th2, Wo, has_ds),
        out_shape=jax.ShapeDtypeStruct((N * t2, rows2, cpout), jnp.float32),
        grid=(N * t2,),
        in_specs=in_specs,
        out_specs=pl.BlockSpec((1, rows2, cpout), lambda i: (i, 0, 0)),
        compiler_params=pltpu.CompilerParams(
            dimension_semantics=("parallel",),
            vmem_limit_bytes=VMEM_LIMIT_BYTES),
    )(*args)

    out = out_slab.reshape(N, Ho, wp2, cpout)[:, :, :Wo, :out_chan]
    return jnp.transpose(out, (0, 3, 1, 2))                          # NHWC -> NCHW (f32)


# --------------------------- params / reference -----------------------------

def _bn_init(keys, c):
    gamma = 1.0 + 0.1 * jax.random.normal(keys[0], (c,), jnp.float32)
    beta = 0.1 * jax.random.normal(keys[1], (c,), jnp.float32)
    mean = 0.1 * jax.random.normal(keys[2], (c,), jnp.float32)
    var = 1.0 + 0.1 * jnp.abs(jax.random.normal(keys[3], (c,), jnp.float32))
    return (gamma, beta, mean, var)


def init_params(key, in_chan, out_chan, stride, num_group):
    ks = jax.random.split(key, 16)
    nrm = lambda k, s: 0.1 * jax.random.normal(k, s, jnp.float32)
    params = dict(
        w1=nrm(ks[0], (out_chan, in_chan, 3, 3)),
        bn1=_bn_init(ks[1:5], out_chan),
        w2=nrm(ks[5], (out_chan, out_chan // num_group, 3, 3)),
        bn2=_bn_init(ks[6:10], out_chan),
        wmix=nrm(ks[10], (out_chan, out_chan, 1, 1)),
    )
    if in_chan != out_chan or stride != 1:
        params['wds'] = nrm(ks[11], (out_chan, in_chan, 1, 1))
        params['bnds'] = _bn_init(ks[12:16], out_chan)
    return params


def ref_forward(x_nchw, params, stride, num_group):
    """Pure-JAX f32 reference (lax.conv) mirroring the PyTorch forward (eval BN)."""
    dn = ('NCHW', 'OIHW', 'NCHW')
    hp = lax.Precision.HIGHEST

    def bn(v, p):
        gamma, beta, mean, var = p
        sc = gamma / jnp.sqrt(var + EPS)
        return v * sc.reshape(1, -1, 1, 1) + (beta - mean * sc).reshape(1, -1, 1, 1)

    r = lax.conv_general_dilated(x_nchw, params['w1'], (stride, stride),
                                 ((1, 1), (1, 1)), dimension_numbers=dn,
                                 precision=hp)
    r = jax.nn.relu(bn(r, params['bn1']))
    r = lax.conv_general_dilated(r, params['w2'], (1, 1), ((1, 1), (1, 1)),
                                 dimension_numbers=dn,
                                 feature_group_count=num_group, precision=hp)
    r = jax.nn.relu(bn(r, params['bn2']))
    r = lax.conv_general_dilated(r, params['wmix'], (1, 1), ((0, 0), (0, 0)),
                                 dimension_numbers=dn, precision=hp)
    shortcut = x_nchw
    if 'wds' in params:
        shortcut = lax.conv_general_dilated(x_nchw, params['wds'],
                                            (stride, stride), ((0, 0), (0, 0)),
                                            dimension_numbers=dn, precision=hp)
        shortcut = bn(shortcut, params['bnds'])
    return jax.nn.relu(shortcut + r)


if __name__ == "__main__":
    key = jax.random.PRNGKey(0)

    configs = [
        # downsample path: in_chan != out_chan, stride 2, grouped conv
        dict(N=2, in_chan=16, H=16, W=16, out_chan=32, stride=2, num_group=4),
        # identity-shortcut path: stride 1, in_chan == out_chan
        dict(N=2, in_chan=32, H=8, W=8, out_chan=32, stride=1, num_group=4),
    ]

    ok = True
    for i, cfg in enumerate(configs):
        kx, kp, key = jax.random.split(key, 3)
        x = jax.random.normal(kx, (cfg['N'], cfg['in_chan'], cfg['H'], cfg['W']),
                              jnp.float32)
        params = init_params(kp, cfg['in_chan'], cfg['out_chan'],
                             cfg['stride'], cfg['num_group'])
        prep = prepare_params(params, cfg['in_chan'], cfg['out_chan'],
                              cfg['num_group'])
        fwd = jax.jit(functools.partial(
            basic_block_forward, stride=cfg['stride'],
            in_chan=cfg['in_chan'], out_chan=cfg['out_chan']))

        out = jax.block_until_ready(fwd(x, prep))
        ref = jax.block_until_ready(
            ref_forward(x, params, cfg['stride'], cfg['num_group']))

        max_err = float(jnp.max(jnp.abs(out - ref)))
        # bf16 operands (f32 accumulation) vs the f32 reference: allow 5e-2.
        if out.shape != ref.shape or not (max_err < 5e-2):
            ok = False
            print(f"MISMATCH cfg{i} shape={out.shape} ref_shape={ref.shape} "
                  f"max_abs_err={max_err}")

    if ok:
        print("KERNEL_OK")
</pallas_src>

<mosaic_0001>
module attributes {stable_mosaic.version = 11 : i64} {
  func.func @kernel(%arg0: i32, %arg1: memref<1x4x82x128xbf16, #tpu.memory_space<vmem>>, %arg2: memref<9x128x128xbf16, #tpu.memory_space<vmem>>, %arg3: memref<1x128xf32, #tpu.memory_space<vmem>>, %arg4: memref<1x72x128xbf16, #tpu.memory_space<vmem>>) attributes {dimension_semantics = [#tpu.dimension_semantics<parallel>], iteration_bounds = array<i64: 2>, scalar_prefetch = 0 : i64, scratch_operands = 0 : i64, tpu.core_type = #tpu.core_type<tc>, window_params = [{transform_indices = @transform_0, window_bounds = array<i64: 1, 4, 82, 128>}, {pipeline_mode = #tpu.pipeline_mode<synchronous>, transform_indices = @transform_1, window_bounds = array<i64: 9, 128, 128>}, {pipeline_mode = #tpu.pipeline_mode<synchronous>, transform_indices = @transform_2, window_bounds = array<i64: 1, 128>}, {transform_indices = @transform_3, window_bounds = array<i64: 1, 72, 128>}]} {
    %cst = arith.constant 0.000000e+00 : f32
    %0 = vector.broadcast %cst : f32 to vector<72x128xf32>
    %c0 = arith.constant 0 : index
    %c0_0 = arith.constant 0 : index
    %c0_1 = arith.constant 0 : index
    %c0_2 = arith.constant 0 : index
    %1 = vector.load %arg1[%c0, %c0_0, %c0_1, %c0_2] : memref<1x4x82x128xbf16, #tpu.memory_space<vmem>>, vector<1x1x72x128xbf16>
    %2 = vector.shape_cast %1 : vector<1x1x72x128xbf16> to vector<72x128xbf16>
    %c0_3 = arith.constant 0 : index
    %c0_4 = arith.constant 0 : index
    %c0_5 = arith.constant 0 : index
    %3 = vector.load %arg2[%c0_3, %c0_4, %c0_5] : memref<9x128x128xbf16, #tpu.memory_space<vmem>>, vector<1x128x128xbf16>
    %4 = vector.shape_cast %3 : vector<1x128x128xbf16> to vector<128x128xbf16>
    %cst_6 = arith.constant dense<0.000000e+00> : vector<72x128xf32>
    %5 = tpu.matmul %2, %4, %cst_6 {dimension_numbers = #tpu.dot_dimension_numbers<[1], [0], [0], [1], [0, 0, 1, 1], [], []>} : vector<72x128xbf16>, vector<128x128xbf16>, vector<72x128xf32> -> vector<72x128xf32>
    %6 = arith.addf %0, %5 : vector<72x128xf32>
    %c0_7 = arith.constant 0 : index
    %c1 = arith.constant 1 : index
    %c0_8 = arith.constant 0 : index
    %c0_9 = arith.constant 0 : index
    %7 = vector.load %arg1[%c0_7, %c1, %c0_8, %c0_9] : memref<1x4x82x128xbf16, #tpu.memory_space<vmem>>, vector<1x1x72x128xbf16>
    %8 = vector.shape_cast %7 : vector<1x1x72x128xbf16> to vector<72x128xbf16>
    %c1_10 = arith.constant 1 : index
    %c0_11 = arith.constant 0 : index
    %c0_12 = arith.constant 0 : index
    %9 = vector.load %arg2[%c1_10, %c0_11, %c0_12] : memref<9x128x128xbf16, #tpu.memory_space<vmem>>, vector<1x128x128xbf16>
    %10 = vector.shape_cast %9 : vector<1x128x128xbf16> to vector<128x128xbf16>
    %cst_13 = arith.constant dense<0.000000e+00> : vector<72x128xf32>
    %11 = tpu.matmul %8, %10, %cst_13 {dimension_numbers = #tpu.dot_dimension_numbers<[1], [0], [0], [1], [0, 0, 1, 1], [], []>} : vector<72x128xbf16>, vector<128x128xbf16>, vector<72x128xf32> -> vector<72x128xf32>
    %12 = arith.addf %6, %11 : vector<72x128xf32>
    %c0_14 = arith.constant 0 : index
    %c0_15 = arith.constant 0 : index
    %c1_16 = arith.constant 1 : index
    %c0_17 = arith.constant 0 : index
    %13 = vector.load %arg1[%c0_14, %c0_15, %c1_16, %c0_17] : memref<1x4x82x128xbf16, #tpu.memory_space<vmem>>, vector<1x1x72x128xbf16>
    %14 = vector.shape_cast %13 : vector<1x1x72x128xbf16> to vector<72x128xbf16>
    %c2 = arith.constant 2 : index
    %c0_18 = arith.constant 0 : index
    %c0_19 = arith.constant 0 : index
    %15 = vector.load %arg2[%c2, %c0_18, %c0_19] : memref<9x128x128xbf16, #tpu.memory_space<vmem>>, vector<1x128x128xbf16>
    %16 = vector.shape_cast %15 : vector<1x128x128xbf16> to vector<128x128xbf16>
    %cst_20 = arith.constant dense<0.000000e+00> : vector<72x128xf32>
    %17 = tpu.matmul %14, %16, %cst_20 {dimension_numbers = #tpu.dot_dimension_numbers<[1], [0], [0], [1], [0, 0, 1, 1], [], []>} : vector<72x128xbf16>, vector<128x128xbf16>, vector<72x128xf32> -> vector<72x128xf32>
    %18 = arith.addf %12, %17 : vector<72x128xf32>
    %c0_21 = arith.constant 0 : index
    %c2_22 = arith.constant 2 : index
    %c0_23 = arith.constant 0 : index
    %c0_24 = arith.constant 0 : index
    %19 = vector.load %arg1[%c0_21, %c2_22, %c0_23, %c0_24] : memref<1x4x82x128xbf16, #tpu.memory_space<vmem>>, vector<1x1x72x128xbf16>
    %20 = vector.shape_cast %19 : vector<1x1x72x128xbf16> to vector<72x128xbf16>
    %c3 = arith.constant 3 : index
    %c0_25 = arith.constant 0 : index
    %c0_26 = arith.constant 0 : index
    %21 = vector.load %arg2[%c3, %c0_25, %c0_26] : memref<9x128x128xbf16, #tpu.memory_space<vmem>>, vector<1x128x128xbf16>
    %22 = vector.shape_cast %21 : vector<1x128x128xbf16> to vector<128x128xbf16>
    %cst_27 = arith.constant dense<0.000000e+00> : vector<72x128xf32>
    %23 = tpu.matmul %20, %22, %cst_27 {dimension_numbers = #tpu.dot_dimension_numbers<[1], [0], [0], [1], [0, 0, 1, 1], [], []>} : vector<72x128xbf16>, vector<128x128xbf16>, vector<72x128xf32> -> vector<72x128xf32>
    %24 = arith.addf %18, %23 : vector<72x128xf32>
    %c0_28 = arith.constant 0 : index
    %c3_29 = arith.constant 3 : index
    %c0_30 = arith.constant 0 : index
    %c0_31 = arith.constant 0 : index
    %25 = vector.load %arg1[%c0_28, %c3_29, %c0_30, %c0_31] : memref<1x4x82x128xbf16, #tpu.memory_space<vmem>>, vector<1x1x72x128xbf16>
    %26 = vector.shape_cast %25 : vector<1x1x72x128xbf16> to vector<72x128xbf16>
    %c4 = arith.constant 4 : index
    %c0_32 = arith.constant 0 : index
    %c0_33 = arith.constant 0 : index
    %27 = vector.load %arg2[%c4, %c0_32, %c0_33] : memref<9x128x128xbf16, #tpu.memory_space<vmem>>, vector<1x128x128xbf16>
    %28 = vector.shape_cast %27 : vector<1x128x128xbf16> to vector<128x128xbf16>
    %cst_34 = arith.constant dense<0.000000e+00> : vector<72x128xf32>
    %29 = tpu.matmul %26, %28, %cst_34 {dimension_numbers = #tpu.dot_dimension_numbers<[1], [0], [0], [1], [0, 0, 1, 1], [], []>} : vector<72x128xbf16>, vector<128x128xbf16>, vector<72x128xf32> -> vector<72x128xf32>
    %30 = arith.addf %24, %29 : vector<72x128xf32>
    %c0_35 = arith.constant 0 : index
    %c2_36 = arith.constant 2 : index
    %c1_37 = arith.constant 1 : index
    %c0_38 = arith.constant 0 : index
    %31 = vector.load %arg1[%c0_35, %c2_36, %c1_37, %c0_38] : memref<1x4x82x128xbf16, #tpu.memory_space<vmem>>, vector<1x1x72x128xbf16>
    %32 = vector.shape_cast %31 : vector<1x1x72x128xbf16> to vector<72x128xbf16>
    %c5 = arith.constant 5 : index
    %c0_39 = arith.constant 0 : index
    %c0_40 = arith.constant 0 : index
    %33 = vector.load %arg2[%c5, %c0_39, %c0_40] : memref<9x128x128xbf16, #tpu.memory_space<vmem>>, vector<1x128x128xbf16>
    %34 = vector.shape_cast %33 : vector<1x128x128xbf16> to vector<128x128xbf16>
    %cst_41 = arith.constant dense<0.000000e+00> : vector<72x128xf32>
    %35 = tpu.matmul %32, %34, %cst_41 {dimension_numbers = #tpu.dot_dimension_numbers<[1], [0], [0], [1], [0, 0, 1, 1], [], []>} : vector<72x128xbf16>, vector<128x128xbf16>, vector<72x128xf32> -> vector<72x128xf32>
    %36 = arith.addf %30, %35 : vector<72x128xf32>
    %c0_42 = arith.constant 0 : index
    %c0_43 = arith.constant 0 : index
    %c9 = arith.constant 9 : index
    %c0_44 = arith.constant 0 : index
    %37 = vector.load %arg1[%c0_42, %c0_43, %c9, %c0_44] : memref<1x4x82x128xbf16, #tpu.memory_space<vmem>>, vector<1x1x72x128xbf16>
    %38 = vector.shape_cast %37 : vector<1x1x72x128xbf16> to vector<72x128xbf16>
    %c6 = arith.constant 6 : index
    %c0_45 = arith.constant 0 : index
    %c0_46 = arith.constant 0 : index
    %39 = vector.load %arg2[%c6, %c0_45, %c0_46] : memref<9x128x128xbf16, #tpu.memory_space<vmem>>, vector<1x128x128xbf16>
    %40 = vector.shape_cast %39 : vector<1x128x128xbf16> to vector<128x128xbf16>
    %cst_47 = arith.constant dense<0.000000e+00> : vector<72x128xf32>
    %41 = tpu.matmul %38, %40, %cst_47 {dimension_numbers = #tpu.dot_dimension_numbers<[1], [0], [0], [1], [0, 0, 1, 1], [], []>} : vector<72x128xbf16>, vector<128x128xbf16>, vector<72x128xf32> -> vector<72x128xf32>
    %42 = arith.addf %36, %41 : vector<72x128xf32>
    %c0_48 = arith.constant 0 : index
    %c1_49 = arith.constant 1 : index
    %c9_50 = arith.constant 9 : index
    %c0_51 = arith.constant 0 : index
    %43 = vector.load %arg1[%c0_48, %c1_49, %c9_50, %c0_51] : memref<1x4x82x128xbf16, #tpu.memory_space<vmem>>, vector<1x1x72x128xbf16>
    %44 = vector.shape_cast %43 : vector<1x1x72x128xbf16> to vector<72x128xbf16>
    %c7 = arith.constant 7 : index
    %c0_52 = arith.constant 0 : index
    %c0_53 = arith.constant 0 : index
    %45 = vector.load %arg2[%c7, %c0_52, %c0_53] : memref<9x128x128xbf16, #tpu.memory_space<vmem>>, vector<1x128x128xbf16>
    %46 = vector.shape_cast %45 : vector<1x128x128xbf16> to vector<128x128xbf16>
    %cst_54 = arith.constant dense<0.000000e+00> : vector<72x128xf32>
    %47 = tpu.matmul %44, %46, %cst_54 {dimension_numbers = #tpu.dot_dimension_numbers<[1], [0], [0], [1], [0, 0, 1, 1], [], []>} : vector<72x128xbf16>, vector<128x128xbf16>, vector<72x128xf32> -> vector<72x128xf32>
    %48 = arith.addf %42, %47 : vector<72x128xf32>
    %c0_55 = arith.constant 0 : index
    %c0_56 = arith.constant 0 : index
    %c10 = arith.constant 10 : index
    %c0_57 = arith.constant 0 : index
    %49 = vector.load %arg1[%c0_55, %c0_56, %c10, %c0_57] : memref<1x4x82x128xbf16, #tpu.memory_space<vmem>>, vector<1x1x72x128xbf16>
    %50 = vector.shape_cast %49 : vector<1x1x72x128xbf16> to vector<72x128xbf16>
    %c8 = arith.constant 8 : index
    %c0_58 = arith.constant 0 : index
    %c0_59 = arith.constant 0 : index
    %51 = vector.load %arg2[%c8, %c0_58, %c0_59] : memref<9x128x128xbf16, #tpu.memory_space<vmem>>, vector<1x128x128xbf16>
    %52 = vector.shape_cast %51 : vector<1x128x128xbf16> to vector<128x128xbf16>
    %cst_60 = arith.constant dense<0.000000e+00> : vector<72x128xf32>
    %53 = tpu.matmul %50, %52, %cst_60 {dimension_numbers = #tpu.dot_dimension_numbers<[1], [0], [0], [1], [0, 0, 1, 1], [], []>} : vector<72x128xbf16>, vector<128x128xbf16>, vector<72x128xf32> -> vector<72x128xf32>
    %54 = arith.addf %48, %53 : vector<72x128xf32>
    %c0_61 = arith.constant 0 : index
    %c0_62 = arith.constant 0 : index
    %55 = vector.load %arg3[%c0_61, %c0_62] : memref<1x128xf32, #tpu.memory_space<vmem>>, vector<1x128xf32>
    %56 = vector.broadcast %55 : vector<1x128xf32> to vector<72x128xf32>
    %57 = arith.addf %54, %56 : vector<72x128xf32>
    %cst_63 = arith.constant 0.000000e+00 : f32
    %58 = vector.broadcast %cst_63 : f32 to vector<72x128xf32>
    %59 = arith.maximumf %57, %58 : vector<72x128xf32>
    %60 = arith.truncf %59 : vector<72x128xf32> to vector<72x128xbf16>
    %c0_64 = arith.constant 0 : index
    %c0_65 = arith.constant 0 : index
    %c0_66 = arith.constant 0 : index
    %61 = vector.load %arg4[%c0_64, %c0_65, %c0_66] : memref<1x72x128xbf16, #tpu.memory_space<vmem>>, vector<1x72x128xbf16>
    %62 = vector.shape_cast %61 : vector<1x72x128xbf16> to vector<72x128xbf16>
    %63 = vector.shape_cast %60 : vector<72x128xbf16> to vector<1x72x128xbf16>
    tpu.vector_store %arg4[%c0_64, %c0_65, %c0_66], %63 {strides = array<i32>} : memref<1x72x128xbf16, #tpu.memory_space<vmem>>, vector<1x72x128xbf16>,
    return
  }
  func.func @transform_0(%arg0: i32) -> (i32, i32, i32, i32) {
    %c0_i32 = arith.constant 0 : i32
    %c0_i32_0 = arith.constant 0 : i32
    %c0_i32_1 = arith.constant 0 : i32
    %c0_i32_2 = arith.constant 0 : i32
    return %arg0, %c0_i32, %c0_i32_0, %c0_i32_1 : i32, i32, i32, i32
  }
  func.func @transform_1(%arg0: i32) -> (i32, i32, i32) {
    %c0_i32 = arith.constant 0 : i32
    %c0_i32_0 = arith.constant 0 : i32
    %c0_i32_1 = arith.constant 0 : i32
    %c0_i32_2 = arith.constant 0 : i32
    return %c0_i32, %c0_i32_0, %c0_i32_1 : i32, i32, i32
  }
  func.func @transform_2(%arg0: i32) -> (i32, i32) {
    %c0_i32 = arith.constant 0 : i32
    %c0_i32_0 = arith.constant 0 : i32
    %c0_i32_1 = arith.constant 0 : i32
    return %c0_i32, %c0_i32_0 : i32, i32
  }
  func.func @transform_3(%arg0: i32) -> (i32, i32, i32) {
    %c0_i32 = arith.constant 0 : i32
    %c0_i32_0 = arith.constant 0 : i32
    %c0_i32_1 = arith.constant 0 : i32
    return %arg0, %c0_i32, %c0_i32_0 : i32, i32, i32
  }
}

module attributes {stable_mosaic.version = 11 : i64} {
  func.func @kernel(%arg0: i32, %arg1: memref<1x102x128xbf16, #tpu.memory_space<vmem>>, %arg2: memref<1x80x128xbf16, #tpu.memory_space<vmem>>, %arg3: memref<9x128x128xbf16, #tpu.memory_space<vmem>>, %arg4: memref<1x128xf32, #tpu.memory_space<vmem>>, %arg5: memref<128x128xbf16, #tpu.memory_space<vmem>>, %arg6: memref<128x128xbf16, #tpu.memory_space<vmem>>, %arg7: memref<1x128xf32, #tpu.memory_space<vmem>>, %arg8: memref<1x80x128xf32, #tpu.memory_space<vmem>>) attributes {dimension_semantics = [#tpu.dimension_semantics<parallel>], iteration_bounds = array<i64: 2>, scalar_prefetch = 0 : i64, scratch_operands = 0 : i64, tpu.core_type = #tpu.core_type<tc>, window_params = [{transform_indices = @transform_0, window_bounds = array<i64: 1, 102, 128>}, {transform_indices = @transform_1, window_bounds = array<i64: 1, 80, 128>}, {pipeline_mode = #tpu.pipeline_mode<synchronous>, transform_indices = @transform_2, window_bounds = array<i64: 9, 128, 128>}, {pipeline_mode = #tpu.pipeline_mode<synchronous>, transform_indices = @transform_3, window_bounds = array<i64: 1, 128>}, {pipeline_mode = #tpu.pipeline_mode<synchronous>, transform_indices = @transform_4, window_bounds = array<i64: 128, 128>}, {pipeline_mode = #tpu.pipeline_mode<synchronous>, transform_indices = @transform_5, window_bounds = array<i64: 128, 128>}, {pipeline_mode = #tpu.pipeline_mode<synchronous>, transform_indices = @transform_6, window_bounds = array<i64: 1, 128>}, {transform_indices = @transform_7, window_bounds = array<i64: 1, 80, 128>}]} {
    %cst = arith.constant 0.000000e+00 : f32
    %0 = vector.broadcast %cst : f32 to vector<80x128xf32>
    %c0 = arith.constant 0 : index
    %c0_0 = arith.constant 0 : index
    %c0_1 = arith.constant 0 : index
    %1 = vector.load %arg1[%c0, %c0_0, %c0_1] : memref<1x102x128xbf16, #tpu.memory_space<vmem>>, vector<1x80x128xbf16>
    %2 = vector.shape_cast %1 : vector<1x80x128xbf16> to vector<80x128xbf16>
    %c0_2 = arith.constant 0 : index
    %c0_3 = arith.constant 0 : index
    %c0_4 = arith.constant 0 : index
    %3 = vector.load %arg3[%c0_2, %c0_3, %c0_4] : memref<9x128x128xbf16, #tpu.memory_space<vmem>>, vector<1x128x128xbf16>
    %4 = vector.shape_cast %3 : vector<1x128x128xbf16> to vector<128x128xbf16>
    %cst_5 = arith.constant dense<0.000000e+00> : vector<80x128xf32>
    %5 = tpu.matmul %2, %4, %cst_5 {dimension_numbers = #tpu.dot_dimension_numbers<[1], [0], [0], [1], [0, 0, 1, 1], [], []>} : vector<80x128xbf16>, vector<128x128xbf16>, vector<80x128xf32> -> vector<80x128xf32>
    %6 = arith.addf %0, %5 : vector<80x128xf32>
    %c0_6 = arith.constant 0 : index
    %c1 = arith.constant 1 : index
    %c0_7 = arith.constant 0 : index
    %7 = vector.load %arg1[%c0_6, %c1, %c0_7] : memref<1x102x128xbf16, #tpu.memory_space<vmem>>, vector<1x80x128xbf16>
    %8 = vector.shape_cast %7 : vector<1x80x128xbf16> to vector<80x128xbf16>
    %c1_8 = arith.constant 1 : index
    %c0_9 = arith.constant 0 : index
    %c0_10 = arith.constant 0 : index
    %9 = vector.load %arg3[%c1_8, %c0_9, %c0_10] : memref<9x128x128xbf16, #tpu.memory_space<vmem>>, vector<1x128x128xbf16>
    %10 = vector.shape_cast %9 : vector<1x128x128xbf16> to vector<128x128xbf16>
    %cst_11 = arith.constant dense<0.000000e+00> : vector<80x128xf32>
    %11 = tpu.matmul %8, %10, %cst_11 {dimension_numbers = #tpu.dot_dimension_numbers<[1], [0], [0], [1], [0, 0, 1, 1], [], []>} : vector<80x128xbf16>, vector<128x128xbf16>, vector<80x128xf32> -> vector<80x128xf32>
    %12 = arith.addf %6, %11 : vector<80x128xf32>
    %c0_12 = arith.constant 0 : index
    %c2 = arith.constant 2 : index
    %c0_13 = arith.constant 0 : index
    %13 = vector.load %arg1[%c0_12, %c2, %c0_13] : memref<1x102x128xbf16, #tpu.memory_space<vmem>>, vector<1x80x128xbf16>
    %14 = vector.shape_cast %13 : vector<1x80x128xbf16> to vector<80x128xbf16>
    %c2_14 = arith.constant 2 : index
    %c0_15 = arith.constant 0 : index
    %c0_16 = arith.constant 0 : index
    %15 = vector.load %arg3[%c2_14, %c0_15, %c0_16] : memref<9x128x128xbf16, #tpu.memory_space<vmem>>, vector<1x128x128xbf16>
    %16 = vector.shape_cast %15 : vector<1x128x128xbf16> to vector<128x128xbf16>
    %cst_17 = arith.constant dense<0.000000e+00> : vector<80x128xf32>
    %17 = tpu.matmul %14, %16, %cst_17 {dimension_numbers = #tpu.dot_dimension_numbers<[1], [0], [0], [1], [0, 0, 1, 1], [], []>} : vector<80x128xbf16>, vector<128x128xbf16>, vector<80x128xf32> -> vector<80x128xf32>
    %18 = arith.addf %12, %17 : vector<80x128xf32>
    %c0_18 = arith.constant 0 : index
    %c10 = arith.constant 10 : index
    %c0_19 = arith.constant 0 : index
    %19 = vector.load %arg1[%c0_18, %c10, %c0_19] : memref<1x102x128xbf16, #tpu.memory_space<vmem>>, vector<1x80x128xbf16>
    %20 = vector.shape_cast %19 : vector<1x80x128xbf16> to vector<80x128xbf16>
    %c3 = arith.constant 3 : index
    %c0_20 = arith.constant 0 : index
    %c0_21 = arith.constant 0 : index
    %21 = vector.load %arg3[%c3, %c0_20, %c0_21] : memref<9x128x128xbf16, #tpu.memory_space<vmem>>, vector<1x128x128xbf16>
    %22 = vector.shape_cast %21 : vector<1x128x128xbf16> to vector<128x128xbf16>
    %cst_22 = arith.constant dense<0.000000e+00> : vector<80x128xf32>
    %23 = tpu.matmul %20, %22, %cst_22 {dimension_numbers = #tpu.dot_dimension_numbers<[1], [0], [0], [1], [0, 0, 1, 1], [], []>} : vector<80x128xbf16>, vector<128x128xbf16>, vector<80x128xf32> -> vector<80x128xf32>
    %24 = arith.addf %18, %23 : vector<80x128xf32>
    %c0_23 = arith.constant 0 : index
    %c11 = arith.constant 11 : index
    %c0_24 = arith.constant 0 : index
    %25 = vector.load %arg1[%c0_23, %c11, %c0_24] : memref<1x102x128xbf16, #tpu.memory_space<vmem>>, vector<1x80x128xbf16>
    %26 = vector.shape_cast %25 : vector<1x80x128xbf16> to vector<80x128xbf16>
    %c4 = arith.constant 4 : index
    %c0_25 = arith.constant 0 : index
    %c0_26 = arith.constant 0 : index
    %27 = vector.load %arg3[%c4, %c0_25, %c0_26] : memref<9x128x128xbf16, #tpu.memory_space<vmem>>, vector<1x128x128xbf16>
    %28 = vector.shape_cast %27 : vector<1x128x128xbf16> to vector<128x128xbf16>
    %cst_27 = arith.constant dense<0.000000e+00> : vector<80x128xf32>
    %29 = tpu.matmul %26, %28, %cst_27 {dimension_numbers = #tpu.dot_dimension_numbers<[1], [0], [0], [1], [0, 0, 1, 1], [], []>} : vector<80x128xbf16>, vector<128x128xbf16>, vector<80x128xf32> -> vector<80x128xf32>
    %30 = arith.addf %24, %29 : vector<80x128xf32>
    %c0_28 = arith.constant 0 : index
    %c12 = arith.constant 12 : index
    %c0_29 = arith.constant 0 : index
    %31 = vector.load %arg1[%c0_28, %c12, %c0_29] : memref<1x102x128xbf16, #tpu.memory_space<vmem>>, vector<1x80x128xbf16>
    %32 = vector.shape_cast %31 : vector<1x80x128xbf16> to vector<80x128xbf16>
    %c5 = arith.constant 5 : index
    %c0_30 = arith.constant 0 : index
    %c0_31 = arith.constant 0 : index
    %33 = vector.load %arg3[%c5, %c0_30, %c0_31] : memref<9x128x128xbf16, #tpu.memory_space<vmem>>, vector<1x128x128xbf16>
    %34 = vector.shape_cast %33 : vector<1x128x128xbf16> to vector<128x128xbf16>
    %cst_32 = arith.constant dense<0.000000e+00> : vector<80x128xf32>
    %35 = tpu.matmul %32, %34, %cst_32 {dimension_numbers = #tpu.dot_dimension_numbers<[1], [0], [0], [1], [0, 0, 1, 1], [], []>} : vector<80x128xbf16>, vector<128x128xbf16>, vector<80x128xf32> -> vector<80x128xf32>
    %36 = arith.addf %30, %35 : vector<80x128xf32>
    %c0_33 = arith.constant 0 : index
    %c20 = arith.constant 20 : index
    %c0_34 = arith.constant 0 : index
    %37 = vector.load %arg1[%c0_33, %c20, %c0_34] : memref<1x102x128xbf16, #tpu.memory_space<vmem>>, vector<1x80x128xbf16>
    %38 = vector.shape_cast %37 : vector<1x80x128xbf16> to vector<80x128xbf16>
    %c6 = arith.constant 6 : index
    %c0_35 = arith.constant 0 : index
    %c0_36 = arith.constant 0 : index
    %39 = vector.load %arg3[%c6, %c0_35, %c0_36] : memref<9x128x128xbf16, #tpu.memory_space<vmem>>, vector<1x128x128xbf16>
    %40 = vector.shape_cast %39 : vector<1x128x128xbf16> to vector<128x128xbf16>
    %cst_37 = arith.constant dense<0.000000e+00> : vector<80x128xf32>
    %41 = tpu.matmul %38, %40, %cst_37 {dimension_numbers = #tpu.dot_dimension_numbers<[1], [0], [0], [1], [0, 0, 1, 1], [], []>} : vector<80x128xbf16>, vector<128x128xbf16>, vector<80x128xf32> -> vector<80x128xf32>
    %42 = arith.addf %36, %41 : vector<80x128xf32>
    %c0_38 = arith.constant 0 : index
    %c21 = arith.constant 21 : index
    %c0_39 = arith.constant 0 : index
    %43 = vector.load %arg1[%c0_38, %c21, %c0_39] : memref<1x102x128xbf16, #tpu.memory_space<vmem>>, vector<1x80x128xbf16>
    %44 = vector.shape_cast %43 : vector<1x80x128xbf16> to vector<80x128xbf16>
    %c7 = arith.constant 7 : index
    %c0_40 = arith.constant 0 : index
    %c0_41 = arith.constant 0 : index
    %45 = vector.load %arg3[%c7, %c0_40, %c0_41] : memref<9x128x128xbf16, #tpu.memory_space<vmem>>, vector<1x128x128xbf16>
    %46 = vector.shape_cast %45 : vector<1x128x128xbf16> to vector<128x128xbf16>
    %cst_42 = arith.constant dense<0.000000e+00> : vector<80x128xf32>
    %47 = tpu.matmul %44, %46, %cst_42 {dimension_numbers = #tpu.dot_dimension_numbers<[1], [0], [0], [1], [0, 0, 1, 1], [], []>} : vector<80x128xbf16>, vector<128x128xbf16>, vector<80x128xf32> -> vector<80x128xf32>
    %48 = arith.addf %42, %47 : vector<80x128xf32>
    %c0_43 = arith.constant 0 : index
    %c22 = arith.constant 22 : index
    %c0_44 = arith.constant 0 : index
    %49 = vector.load %arg1[%c0_43, %c22, %c0_44] : memref<1x102x128xbf16, #tpu.memory_space<vmem>>, vector<1x80x128xbf16>
    %50 = vector.shape_cast %49 : vector<1x80x128xbf16> to vector<80x128xbf16>
    %c8 = arith.constant 8 : index
    %c0_45 = arith.constant 0 : index
    %c0_46 = arith.constant 0 : index
    %51 = vector.load %arg3[%c8, %c0_45, %c0_46] : memref<9x128x128xbf16, #tpu.memory_space<vmem>>, vector<1x128x128xbf16>
    %52 = vector.shape_cast %51 : vector<1x128x128xbf16> to vector<128x128xbf16>
    %cst_47 = arith.constant dense<0.000000e+00> : vector<80x128xf32>
    %53 = tpu.matmul %50, %52, %cst_47 {dimension_numbers = #tpu.dot_dimension_numbers<[1], [0], [0], [1], [0, 0, 1, 1], [], []>} : vector<80x128xbf16>, vector<128x128xbf16>, vector<80x128xf32> -> vector<80x128xf32>
    %54 = arith.addf %48, %53 : vector<80x128xf32>
    %c0_48 = arith.constant 0 : index
    %c0_49 = arith.constant 0 : index
    %55 = vector.load %arg4[%c0_48, %c0_49] : memref<1x128xf32, #tpu.memory_space<vmem>>, vector<1x128xf32>
    %56 = vector.broadcast %55 : vector<1x128xf32> to vector<80x128xf32>
    %57 = arith.addf %54, %56 : vector<80x128xf32>
    %cst_50 = arith.constant 0.000000e+00 : f32
    %58 = vector.broadcast %cst_50 : f32 to vector<80x128xf32>
    %59 = arith.maximumf %57, %58 : vector<80x128xf32>
    %60 = arith.truncf %59 : vector<80x128xf32> to vector<80x128xbf16>
    %c0_51 = arith.constant 0 : index
    %c0_52 = arith.constant 0 : index
    %61 = vector.load %arg5[%c0_51, %c0_52] : memref<128x128xbf16, #tpu.memory_space<vmem>>, vector<128x128xbf16>
    %cst_53 = arith.constant dense<0.000000e+00> : vector<80x128xf32>
    %62 = tpu.matmul %60, %61, %cst_53 {dimension_numbers = #tpu.dot_dimension_numbers<[1], [0], [0], [1], [0, 0, 1, 1], [], []>} : vector<80x128xbf16>, vector<128x128xbf16>, vector<80x128xf32> -> vector<80x128xf32>
    %c0_54 = arith.constant 0 : index
    %c0_55 = arith.constant 0 : index
    %c0_56 = arith.constant 0 : index
    %63 = vector.load %arg2[%c0_54, %c0_55, %c0_56] : memref<1x80x128xbf16, #tpu.memory_space<vmem>>, vector<1x80x128xbf16>
    %64 = vector.shape_cast %63 : vector<1x80x128xbf16> to vector<80x128xbf16>
    %c0_57 = arith.constant 0 : index
    %c0_58 = arith.constant 0 : index
    %65 = vector.load %arg6[%c0_57, %c0_58] : memref<128x128xbf16, #tpu.memory_space<vmem>>, vector<128x128xbf16>
    %cst_59 = arith.constant dense<0.000000e+00> : vector<80x128xf32>
    %66 = tpu.matmul %64, %65, %cst_59 {dimension_numbers = #tpu.dot_dimension_numbers<[1], [0], [0], [1], [0, 0, 1, 1], [], []>} : vector<80x128xbf16>, vector<128x128xbf16>, vector<80x128xf32> -> vector<80x128xf32>
    %c0_60 = arith.constant 0 : index
    %c0_61 = arith.constant 0 : index
    %67 = vector.load %arg7[%c0_60, %c0_61] : memref<1x128xf32, #tpu.memory_space<vmem>>, vector<1x128xf32>
    %68 = vector.broadcast %67 : vector<1x128xf32> to vector<80x128xf32>
    %69 = arith.addf %66, %68 : vector<80x128xf32>
    %70 = arith.addf %62, %69 : vector<80x128xf32>
    %cst_62 = arith.constant 0.000000e+00 : f32
    %71 = vector.broadcast %cst_62 : f32 to vector<80x128xf32>
    %72 = arith.maximumf %70, %71 : vector<80x128xf32>
    %c0_63 = arith.constant 0 : index
    %c0_64 = arith.constant 0 : index
    %c0_65 = arith.constant 0 : index
    %73 = vector.load %arg8[%c0_63, %c0_64, %c0_65] : memref<1x80x128xf32, #tpu.memory_space<vmem>>, vector<1x80x128xf32>
    %74 = vector.shape_cast %73 : vector<1x80x128xf32> to vector<80x128xf32>
    %75 = vector.shape_cast %72 : vector<80x128xf32> to vector<1x80x128xf32>
    tpu.vector_store %arg8[%c0_63, %c0_64, %c0_65], %75 {strides = array<i32>} : memref<1x80x128xf32, #tpu.memory_space<vmem>>, vector<1x80x128xf32>,
    return
  }
  func.func @transform_0(%arg0: i32) -> (i32, i32, i32) {
    %c0_i32 = arith.constant 0 : i32
    %c0_i32_0 = arith.constant 0 : i32
    %c0_i32_1 = arith.constant 0 : i32
    return %arg0, %c0_i32, %c0_i32_0 : i32, i32, i32
  }
  func.func @transform_1(%arg0: i32) -> (i32, i32, i32) {
    %c0_i32 = arith.constant 0 : i32
    %c0_i32_0 = arith.constant 0 : i32
    %c0_i32_1 = arith.constant 0 : i32
    return %arg0, %c0_i32, %c0_i32_0 : i32, i32, i32
  }
  func.func @transform_2(%arg0: i32) -> (i32, i32, i32) {
    %c0_i32 = arith.constant 0 : i32
    %c0_i32_0 = arith.constant 0 : i32
    %c0_i32_1 = arith.constant 0 : i32
    %c0_i32_2 = arith.constant 0 : i32
    return %c0_i32, %c0_i32_0, %c0_i32_1 : i32, i32, i32
  }
  func.func @transform_3(%arg0: i32) -> (i32, i32) {
    %c0_i32 = arith.constant 0 : i32
    %c0_i32_0 = arith.constant 0 : i32
    %c0_i32_1 = arith.constant 0 : i32
    return %c0_i32, %c0_i32_0 : i32, i32
  }
  func.func @transform_4(%arg0: i32) -> (i32, i32) {
    %c0_i32 = arith.constant 0 : i32
    %c0_i32_0 = arith.constant 0 : i32
    %c0_i32_1 = arith.constant 0 : i32
    return %c0_i32, %c0_i32_0 : i32, i32
  }
  func.func @transform_5(%arg0: i32) -> (i32, i32) {
    %c0_i32 = arith.constant 0 : i32
    %c0_i32_0 = arith.constant 0 : i32
    %c0_i32_1 = arith.constant 0 : i32
    return %c0_i32, %c0_i32_0 : i32, i32
  }
  func.func @transform_6(%arg0: i32) -> (i32, i32) {
    %c0_i32 = arith.constant 0 : i32
    %c0_i32_0 = arith.constant 0 : i32
    %c0_i32_1 = arith.constant 0 : i32
    return %c0_i32, %c0_i32_0 : i32, i32
  }
  func.func @transform_7(%arg0: i32) -> (i32, i32, i32) {
    %c0_i32 = arith.constant 0 : i32
    %c0_i32_0 = arith.constant 0 : i32
    %c0_i32_1 = arith.constant 0 : i32
    return %arg0, %c0_i32, %c0_i32_0 : i32, i32, i32
  }
}

</mosaic_0001>

<llo_original>
// kernel: basic_block_forward.2
$region0: #{basic_block_forward.2}
  #allocation0 [shape = 'u32[]', space=smem, size = 0x4, offset = 0x4, fixed_abs, tag = 'smem constant byte address 0x4 - core index']
  #allocation1 [shape = 'u32[144,128]{1,0:T(1,128)}', space=vmem, size = 0x12000, scoped, tag = 'internal scratch']
  %s0 = inlined_call_operand.vmem [shape: bf16[2,4,82,128], index: 0, kind: input, shape index: {}]
  %s1 = inlined_call_operand.vmem [shape: bf16[9,128,128], index: 1, kind: input, shape index: {}]
  %s2 = inlined_call_operand.vmem [shape: f32[1,128], index: 2, kind: input, shape index: {}]
  %s3 = inlined_call_operand.vmem [shape: bf16[2,72,128], index: 3, kind: output, shape index: {}]
  %s4 = sld [smem:[#allocation0]]
  $region45: #{basic_block_forward.2} parent=0
    _
  %s6 = ssub.s32 1, %s4
  %s7 = scalar_select 0, %s6, %s4
  loop: start=0, step=1, limit=4
  $region2: #{basic_block_forward.2} parent=0 // loop_pre_header
    _
  $region3: #{basic_block_forward.2} parent=0 // loop_header
    %s9 = sphi 0, %s13
    %p10 = scmp.ge.s32.totalorder %s9, 4
    %s19 = sphi 0, %s21
    %s22 = sphi 0, %s19
    %s23 = sphi 0, %s22
    %s39 = sphi 0, %s23
    %s43 = sphi 0, %s43
    %s45 = sphi 0, %s43
    %s46 = sphi 0, %s45
    %s60 = sphi 0, %s46
    %s64 = sphi 0, %s64
    %s66 = sphi 0, %s64
    %s67 = sphi 0, %s66
    %s81 = sphi 0, %s67
    %s87 = sphi 0, %s89
    %s90 = sphi 0, %s87
    %s91 = sphi 0, %s90
    %s107 = sphi 0, %s91
  $region4: #{basic_block_forward.2} parent=0 // loop_header_branch
    %12 = sbr.rel (%p10) target = $region8
  $region5: #{basic_block_forward.2} parent=0 // loop_body
    %s14 = ssub.s32 %s9, 1
    %s15 = ssub.s32 %s9, 2
    %s16 = sadd.s32 %s9, 1
    %s17 = ssub.s32 %s9, %s16
    %p18 = scmp.eq.s32.totalorder %s17, 0
    %s20 = sadd.s32 %s19, 1
    %s21 = scalar_select %p18, %s19, %s20
    %p24 = pneg %p18
    %p25 = scmp.eq.s32.totalorder %s9, 1
    %p26 = por %p24, %p25
    %p27 = scmp.ne.s32.totalorder %s19, %s22
    %p28 = scmp.eq.s32.totalorder %s9, 0
    %p29 = por %p27, %p28
    %p30 = scmp.ne.s32.totalorder %s19, %s22
    %p31 = scmp.eq.s32.totalorder %s14, 1
    %p32 = por %p30, %p31
    %p33 = scmp.ne.s32.totalorder %s22, %s23
    %p34 = scmp.eq.s32.totalorder %s14, 0
    %p35 = por %p33, %p34
    %p36 = scmp.ne.s32.totalorder %s22, %s23
    %p37 = scmp.eq.s32.totalorder %s15, 1
    %p38 = por %p36, %p37
    %p40 = scmp.ne.s32.totalorder %s23, %s39
    %p41 = scmp.eq.s32.totalorder %s15, 0
    %p42 = por %p40, %p41
    %s44 = sadd.s32 %s43, 1
    %p47 = scmp.eq.s32.totalorder %s9, 1
    %p48 = scmp.ne.s32.totalorder %s43, %s45
    %p49 = scmp.eq.s32.totalorder %s9, 0
    %p50 = por %p48, %p49
    %p51 = scmp.ne.s32.totalorder %s43, %s45
    %p52 = scmp.eq.s32.totalorder %s14, 1
    %p53 = por %p51, %p52
    %p54 = scmp.ne.s32.totalorder %s45, %s46
    %p55 = scmp.eq.s32.totalorder %s14, 0
    %p56 = por %p54, %p55
    %p57 = scmp.ne.s32.totalorder %s45, %s46
    %p58 = scmp.eq.s32.totalorder %s15, 1
    %p59 = por %p57, %p58
    %p61 = scmp.ne.s32.totalorder %s46, %s60
    %p62 = scmp.eq.s32.totalorder %s15, 0
    %p63 = por %p61, %p62
    %s65 = sadd.s32 %s64, 1
    %p68 = scmp.eq.s32.totalorder %s9, 1
    %p69 = scmp.ne.s32.totalorder %s64, %s66
    %p70 = scmp.eq.s32.totalorder %s9, 0
    %p71 = por %p69, %p70
    %p72 = scmp.ne.s32.totalorder %s64, %s66
    %p73 = scmp.eq.s32.totalorder %s14, 1
    %p74 = por %p72, %p73
    %p75 = scmp.ne.s32.totalorder %s66, %s67
    %p76 = scmp.eq.s32.totalorder %s14, 0
    %p77 = por %p75, %p76
    %p78 = scmp.ne.s32.totalorder %s66, %s67
    %p79 = scmp.eq.s32.totalorder %s15, 1
    %p80 = por %p78, %p79
    %p82 = scmp.ne.s32.totalorder %s67, %s81
    %p83 = scmp.eq.s32.totalorder %s15, 0
    %p84 = por %p82, %p83
    %s85 = ssub.s32 %s9, %s16
    %p86 = scmp.eq.s32.totalorder %s85, 0
    %s88 = sadd.s32 %s87, 1
    %s89 = scalar_select %p86, %s87, %s88
    %p92 = pneg %p86
    %p93 = scmp.eq.s32.totalorder %s9, 1
    %p94 = por %p92, %p93
    %p95 = scmp.ne.s32.totalorder %s87, %s90
    %p96 = scmp.eq.s32.totalorder %s9, 0
    %p97 = por %p95, %p96
    %p98 = scmp.ne.s32.totalorder %s87, %s90
    %p99 = scmp.eq.s32.totalorder %s14, 1
    %p100 = por %p98, %p99
    %p101 = scmp.ne.s32.totalorder %s90, %s91
    %p102 = scmp.eq.s32.totalorder %s14, 0
    %p103 = por %p101, %p102
    %p104 = scmp.ne.s32.totalorder %s90, %s91
    %p105 = scmp.eq.s32.totalorder %s15, 1
    %p106 = por %p104, %p105
    %p108 = scmp.ne.s32.totalorder %s91, %s107
    %p109 = scmp.eq.s32.totalorder %s15, 0
    %p110 = por %p108, %p109
    %p111 = scmp.le.s32.totalorder 1, %s9
    %p112 = scmp.lt.s32.totalorder %s9, 3
    %p113 = pnand %p111, %p112
    %p114 = pneg %p113
    // Predicated region
    $region9: #{basic_block_forward.2} parent=5 // pred_check
      _
    $region10: #{basic_block_forward.2} parent=5 // pred_check_branch
      %116 = sbr.rel (%p113) target = $region12
    $region11: #{basic_block_forward.2} parent=5 // pred_region
      %s117 = ssub.s32 %s9, 1
      // Predicated region
      $region13: #{basic_block_forward.2} parent=11 // pred_check
        %p118 = pneg %p56
      $region14: #{basic_block_forward.2} parent=11 // pred_check_branch
        %120 = sbr.rel (%p118) target = $region16
      $region15: #{basic_block_forward.2} parent=11 // pred_region
        _
      $region16: #{basic_block_forward.2} parent=11 // pred_fallthru
        _
      // Predicated region
      $region17: #{basic_block_forward.2} parent=11 // pred_check
        %p121 = pneg %p77
      $region18: #{basic_block_forward.2} parent=11 // pred_check_branch
        %123 = sbr.rel (%p121) target = $region20
      $region19: #{basic_block_forward.2} parent=11 // pred_region
        _
      $region20: #{basic_block_forward.2} parent=11 // pred_fallthru
        _
    $region12: #{basic_block_forward.2} parent=5 // pred_fallthru
      _
    %p124 = scmp.lt.s32.totalorder %s9, 2
    // Predicated region
    $region21: #{basic_block_forward.2} parent=5 // pred_check
      %p125 = pneg %p124
    $region22: #{basic_block_forward.2} parent=5 // pred_check_branch
      %127 = sbr.rel (%p125) target = $region24
    $region23: #{basic_block_forward.2} parent=5 // pred_region
      // Predicated region
      $region25: #{basic_block_forward.2} parent=23 // pred_check
        %p128 = pneg %p29
      $region26: #{basic_block_forward.2} parent=23 // pred_check_branch
        %130 = sbr.rel (%p128) target = $region28
      $region27: #{basic_block_forward.2} parent=23 // pred_region
        %p131 = scmp.lt.s32.totalorder %s9, 1
        %s132 = scalar_select %p131, %s9, 1
        %s133 = smul.addr %s132, 44
        %s134 = smul.addr %s133, 4
        %s135 = scalar_lea.vmem %s0, %s134
      $region28: #{basic_block_forward.2} parent=23 // pred_fallthru
        _
    $region24: #{basic_block_forward.2} parent=5 // pred_fallthru
      _
    %p136 = scmp.le.s32.totalorder 1, %s9
    %p137 = scmp.lt.s32.totalorder %s9, 3
    %p138 = pnand %p136, %p137
    %p139 = pneg %p138
    // Predicated region
    $region29: #{basic_block_forward.2} parent=5 // pred_check
      _
    $region30: #{basic_block_forward.2} parent=5 // pred_check_branch
      %141 = sbr.rel (%p138) target = $region32
    $region31: #{basic_block_forward.2} parent=5 // pred_region
      %s142 = ssub.s32 %s9, 1
      %p143 = scmp.lt.s32.totalorder %s14, 1
      %s144 = scalar_select %p143, %s14, 1
      %s145 = smul.addr %s144, 44
      %s146 = smul.addr %s145, 4
      %s147 = scalar_lea.vmem %s0, %s146
      %p148 = pneg %p35
      %p149 = pneg %p32
      %p150 = pneg %p56
      %p151 = pneg %p53
      %p152 = pneg %p77
      %p153 = pneg %p74
      %p154 = pneg %p103
      %p155 = pneg %p100
      %p156 = scmp.lt.s32.totalorder %s14, 1
      %s157 = scalar_select %p156, %s14, 1
      %s158 = smul.addr %s157, 9
      %s159 = smul.addr %s158, 4
      %s160 = scalar_lea.vmem %s3, %s159
      %p161 = scmp.lt.s32.totalorder %s14, 1
      %s162 = scalar_select %p161, %s14, 1
      %s163 = smul.addr %s162, 44
      %s164 = smul.addr %s163, 4
      %s165 = scalar_lea.vmem %s0, %s164
      %p166 = scmp.lt.s32.totalorder %s14, 1
      %s167 = scalar_select %p166, %s14, 1
      %s168 = smul.addr %s167, 9
      %s169 = smul.addr %s168, 4
      %s170 = scalar_lea.vmem %s3, %s169
      %v172 = vld [vmem:[%s165] sm:$0xf]
      %v173 = vld [vmem:[%s165 + $0x4] sm:$0xf]
      %v174 = vld [vmem:[%s165 + $0x8] sm:$0xf]
      %v175 = vld [vmem:[%s165 + $0xc] sm:$0xf]
      %v176 = vld [vmem:[%s165 + $0x10] sm:$0xf]
      %v177 = vld [vmem:[%s165 + $0x14] sm:$0xf]
      %v178 = vld [vmem:[%s165 + $0x18] sm:$0xf]
      %v179 = vld [vmem:[%s165 + $0x1c] sm:$0xf]
      %v180 = vld [vmem:[%s165 + $0x20] sm:$0xf]
      %v181 = vld [vmem:[%s1] sm:$0xf]
      %v182 = vld [vmem:[%s1 + $0x4] sm:$0xf]
      %v183 = vld [vmem:[%s1 + $0x8] sm:$0xf]
      %v184 = vld [vmem:[%s1 + $0xc] sm:$0xf]
      %v185 = vld [vmem:[%s1 + $0x10] sm:$0xf]
      %v186 = vld [vmem:[%s1 + $0x14] sm:$0xf]
      %v187 = vld [vmem:[%s1 + $0x18] sm:$0xf]
      %v188 = vld [vmem:[%s1 + $0x1c] sm:$0xf]
      %v189 = vld [vmem:[%s1 + $0x20] sm:$0xf]
      %v190 = vld [vmem:[%s1 + $0x24] sm:$0xf]
      %v191 = vld [vmem:[%s1 + $0x28] sm:$0xf]
      %v192 = vld [vmem:[%s1 + $0x2c] sm:$0xf]
      %v193 = vld [vmem:[%s1 + $0x30] sm:$0xf]
      %v194 = vld [vmem:[%s1 + $0x34] sm:$0xf]
      %v195 = vld [vmem:[%s1 + $0x38] sm:$0xf]
      %v196 = vld [vmem:[%s1 + $0x3c] sm:$0xf]
      %s197 = scalar_lea.vmem %s165, 44
      %v198 = vld [vmem:[%s197] sm:$0xf]
      %v199 = vld [vmem:[%s197 + $0x4] sm:$0xf]
      %v200 = vld [vmem:[%s197 + $0x8] sm:$0xf]
      %v201 = vld [vmem:[%s197 + $0xc] sm:$0xf]
      %v202 = vld [vmem:[%s197 + $0x10] sm:$0xf]
      %v203 = vld [vmem:[%s197 + $0x14] sm:$0xf]
      %v204 = vld [vmem:[%s197 + $0x18] sm:$0xf]
      %v205 = vld [vmem:[%s197 + $0x1c] sm:$0xf]
      %v206 = vld [vmem:[%s197 + $0x20] sm:$0xf]
      %s207 = scalar_lea.vmem %s1, 64
      %v208 = vld [vmem:[%s207] sm:$0xf]
      %v209 = vld [vmem:[%s207 + $0x4] sm:$0xf]
      %v210 = vld [vmem:[%s207 + $0x8] sm:$0xf]
      %v211 = vld [vmem:[%s207 + $0xc] sm:$0xf]
      %v212 = vld [vmem:[%s207 + $0x10] sm:$0xf]
      %v213 = vld [vmem:[%s207 + $0x14] sm:$0xf]
      %v214 = vld [vmem:[%s207 + $0x18] sm:$0xf]
      %v215 = vld [vmem:[%s207 + $0x1c] sm:$0xf]
      %v216 = vld [vmem:[%s207 + $0x20] sm:$0xf]
      %v217 = vld [vmem:[%s207 + $0x24] sm:$0xf]
      %v218 = vld [vmem:[%s207 + $0x28] sm:$0xf]
      %v219 = vld [vmem:[%s207 + $0x2c] sm:$0xf]
      %v220 = vld [vmem:[%s207 + $0x30] sm:$0xf]
      %v221 = vld [vmem:[%s207 + $0x34] sm:$0xf]
      %v222 = vld [vmem:[%s207 + $0x38] sm:$0xf]
      %v223 = vld [vmem:[%s207 + $0x3c] sm:$0xf]
      %v233 = vunpack.c.l.b16 %v198
      %v234 = vunpack.c.l.b16 %v199
      %v235 = vunpack.c.l.b16 %v200
      %v236 = vunpack.c.l.b16 %v201
      %v237 = vunpack.c.l.b16 %v202
      %v238 = vunpack.c.l.b16 %v203
      %v239 = vunpack.c.l.b16 %v204
      %v240 = vunpack.c.l.b16 %v205
      %v241 = vunpack.c.l.b16 %v206
      %v242 = vpack.c.b16 %v234, %v233
      %v243 = vpack.c.b16 %v236, %v235
      %v244 = vpack.c.b16 %v238, %v237
      %v245 = vpack.c.b16 %v240, %v239
      %v246 = vpack.c.b16 %v241, %v241
      %v268 = vunpack.c.l.b16 %v208
      %v269 = vunpack.c.l.b16 %v209
      %v270 = vunpack.c.l.b16 %v210
      %v271 = vunpack.c.l.b16 %v211
      %v272 = vunpack.c.l.b16 %v212
      %v273 = vunpack.c.l.b16 %v213
      %v274 = vunpack.c.l.b16 %v214
      %v275 = vunpack.c.l.b16 %v215
      %v276 = vunpack.c.l.b16 %v216
      %v277 = vunpack.c.l.b16 %v217
      %v278 = vunpack.c.l.b16 %v218
      %v279 = vunpack.c.l.b16 %v219
      %v280 = vunpack.c.l.b16 %v220
      %v281 = vunpack.c.l.b16 %v221
      %v282 = vunpack.c.l.b16 %v222
      %v283 = vunpack.c.l.b16 %v223
      %v284 = vpack.c.b16 %v269, %v268
      %v285 = vpack.c.b16 %v271, %v270
      %v286 = vpack.c.b16 %v273, %v272
      %v287 = vpack.c.b16 %v275, %v274
      %v288 = vpack.c.b16 %v277, %v276
      %v289 = vpack.c.b16 %v279, %v278
      %v290 = vpack.c.b16 %v281, %v280
      %v291 = vpack.c.b16 %v283, %v282
      %300 = vmatprep.subr.bf16.mxu0 0
      %301 = vmatpush1.bf16.msra.mxu0 %v284
      %302 = vmatprep.subr.bf16.mxu0 0
      %303 = vmatpush1.bf16.msra.mxu0 %v285
      %304 = vmatprep.subr.bf16.mxu0 0
      %305 = vmatpush1.bf16.msra.mxu0 %v286
      %306 = vmatprep.subr.bf16.mxu0 0
      %307 = vmatpush1.bf16.msra.mxu0 %v287
      %308 = vmatprep.subr.bf16.mxu0 0
      %309 = vmatpush1.bf16.msra.mxu0 %v288
      %310 = vmatprep.subr.bf16.mxu0 0
      %311 = vmatpush1.bf16.msra.mxu0 %v289
      %312 = vmatprep.subr.bf16.mxu0 0
      %313 = vmatpush1.bf16.msra.mxu0 %v290
      %314 = vmatprep.subr.bf16.mxu0 0
      %315 = vmatpush1.bf16.msra.mxu0 %v291
      %316 = vmatprep.subr.bf16.mxu0 0
      %317 = vmatpush1.bf16.msra.mxu0 0
      %318 = vmatprep.subr.bf16.mxu0 0
      %319 = vmatpush1.bf16.msra.mxu0 0
      %320 = vmatprep.subr.bf16.mxu0 0
      %321 = vmatpush1.bf16.msra.mxu0 0
      %322 = vmatprep.subr.bf16.mxu0 0
      %323 = vmatpush1.bf16.msra.mxu0 0
      %324 = vmatprep.subr.bf16.mxu0 0
      %325 = vmatpush1.bf16.msra.mxu0 0
      %326 = vmatprep.subr.bf16.mxu0 0
      %327 = vmatpush1.bf16.msra.mxu0 0
      %328 = vmatprep.subr.bf16.mxu0 0
      %329 = vmatpush1.bf16.msra.mxu0 0
      %330 = vmatprep.subr.bf16.mxu0 0
      %331 = vmatpush1.bf16.msra.mxu0 0
      %332 = vmatprep.mubr.bf16.mxu0 0
      %333 = vmatmul.mubr.bf16.gmra.mrb[0].mxu0 %v242
      %v334 = vpop.f32.mrb[0].mxu0
      %v335 = vadd.f32 0.0, %v334
      %v336 = vpop.f32.mrb[0].mxu0
      %v337 = vpop.f32.mrb[0].mxu0
      %v338 = vadd.f32 0.0, %v337
      %v339 = vpop.f32.mrb[0].mxu0
      %340 = vmatprep.mubr.bf16.mxu0 0
      %341 = vmatmul.mubr.bf16.gmra.mrb[0].mxu0 %v243
      %v342 = vpop.f32.mrb[0].mxu0
      %v343 = vadd.f32 0.0, %v342
      %v344 = vpop.f32.mrb[0].mxu0
      %v345 = vpop.f32.mrb[0].mxu0
      %v346 = vadd.f32 0.0, %v345
      %v347 = vpop.f32.mrb[0].mxu0
      %348 = vmatprep.mubr.bf16.mxu0 0
      %349 = vmatmul.mubr.bf16.gmra.mrb[0].mxu0 %v244
      %v350 = vpop.f32.mrb[0].mxu0
      %v351 = vadd.f32 0.0, %v350
      %v352 = vpop.f32.mrb[0].mxu0
      %v353 = vpop.f32.mrb[0].mxu0
      %v354 = vadd.f32 0.0, %v353
      %v355 = vpop.f32.mrb[0].mxu0
      %356 = vmatprep.mubr.bf16.mxu0 0
      %357 = vmatmul.mubr.bf16.gmra.mrb[0].mxu0 %v245
      %v358 = vpop.f32.mrb[0].mxu0
      %v359 = vadd.f32 0.0, %v358
      %v360 = vpop.f32.mrb[0].mxu0
      %v361 = vpop.f32.mrb[0].mxu0
      %v362 = vadd.f32 0.0, %v361
      %v363 = vpop.f32.mrb[0].mxu0
      %364 = vmatprep.mubr.bf16.mxu0 0
      %365 = vmatmul.mubr.bf16.gmra.mrb[0].mxu0 %v246
      %v366 = vpop.f32.mrb[0].mxu0
      %v367 = vadd.f32 0.0, %v366
      %v368 = vpop.f32.mrb[0].mxu0
      %v369 = vpop.f32.mrb[0].mxu0
      %v370 = vpop.f32.mrb[0].mxu0
      %371 = vdwg.mxu0
      %v381 = vunpack.c.l.b16 %v172
      %v382 = vunpack.c.l.b16 %v173
      %v383 = vunpack.c.l.b16 %v174
      %v384 = vunpack.c.l.b16 %v175
      %v385 = vunpack.c.l.b16 %v176
      %v386 = vunpack.c.l.b16 %v177
      %v387 = vunpack.c.l.b16 %v178
      %v388 = vunpack.c.l.b16 %v179
      %v389 = vunpack.c.l.b16 %v180
      %v390 = vpack.c.b16 %v382, %v381
      %v391 = vpack.c.b16 %v384, %v383
      %v392 = vpack.c.b16 %v386, %v385
      %v393 = vpack.c.b16 %v388, %v387
      %v394 = vpack.c.b16 %v389, %v389
      %v416 = vunpack.c.l.b16 %v181
      %v417 = vunpack.c.l.b16 %v182
      %v418 = vunpack.c.l.b16 %v183
      %v419 = vunpack.c.l.b16 %v184
      %v420 = vunpack.c.l.b16 %v185
      %v421 = vunpack.c.l.b16 %v186
      %v422 = vunpack.c.l.b16 %v187
      %v423 = vunpack.c.l.b16 %v188
      %v424 = vunpack.c.l.b16 %v189
      %v425 = vunpack.c.l.b16 %v190
      %v426 = vunpack.c.l.b16 %v191
      %v427 = vunpack.c.l.b16 %v192
      %v428 = vunpack.c.l.b16 %v193
      %v429 = vunpack.c.l.b16 %v194
      %v430 = vunpack.c.l.b16 %v195
      %v431 = vunpack.c.l.b16 %v196
      %v432 = vpack.c.b16 %v417, %v416
      %v433 = vpack.c.b16 %v419, %v418
      %v434 = vpack.c.b16 %v421, %v420
      %v435 = vpack.c.b16 %v423, %v422
      %v436 = vpack.c.b16 %v425, %v424
      %v437 = vpack.c.b16 %v427, %v426
      %v438 = vpack.c.b16 %v429, %v428
      %v439 = vpack.c.b16 %v431, %v430
      %448 = vmatprep.subr.bf16.mxu0 0
      %449 = vmatpush1.bf16.msra.mxu0 %v432
      %450 = vmatprep.subr.bf16.mxu0 0
      %451 = vmatpush1.bf16.msra.mxu0 %v433
      %452 = vmatprep.subr.bf16.mxu0 0
      %453 = vmatpush1.bf16.msra.mxu0 %v434
      %454 = vmatprep.subr.bf16.mxu0 0
      %455 = vmatpush1.bf16.msra.mxu0 %v435
      %456 = vmatprep.subr.bf16.mxu0 0
      %457 = vmatpush1.bf16.msra.mxu0 %v436
      %458 = vmatprep.subr.bf16.mxu0 0
      %459 = vmatpush1.bf16.msra.mxu0 %v437
      %460 = vmatprep.subr.bf16.mxu0 0
      %461 = vmatpush1.bf16.msra.mxu0 %v438
      %462 = vmatprep.subr.bf16.mxu0 0
      %463 = vmatpush1.bf16.msra.mxu0 %v439
      %464 = vmatprep.subr.bf16.mxu0 0
      %465 = vmatpush1.bf16.msra.mxu0 0
      %466 = vmatprep.subr.bf16.mxu0 0
      %467 = vmatpush1.bf16.msra.mxu0 0
      %468 = vmatprep.subr.bf16.mxu0 0
      %469 = vmatpush1.bf16.msra.mxu0 0
      %470 = vmatprep.subr.bf16.mxu0 0
      %471 = vmatpush1.bf16.msra.mxu0 0
      %472 = vmatprep.subr.bf16.mxu0 0
      %473 = vmatpush1.bf16.msra.mxu0 0
      %474 = vmatprep.subr.bf16.mxu0 0
      %475 = vmatpush1.bf16.msra.mxu0 0
      %476 = vmatprep.subr.bf16.mxu0 0
      %477 = vmatpush1.bf16.msra.mxu0 0
      %478 = vmatprep.subr.bf16.mxu0 0
      %479 = vmatpush1.bf16.msra.mxu0 0
      %480 = vmatprep.mubr.bf16.mxu0 0
      %481 = vmatmul.mubr.bf16.gmra.mrb[0].mxu0 %v390
      %v482 = vpop.f32.mrb[0].mxu0
      %v483 = vadd.f32 %v335, %v482
      %v484 = vpop.f32.mrb[0].mxu0
      %v485 = vpop.f32.mrb[0].mxu0
      %v486 = vadd.f32 %v338, %v485
      %v487 = vpop.f32.mrb[0].mxu0
      %488 = vmatprep.mubr.bf16.mxu0 0
      %489 = vmatmul.mubr.bf16.gmra.mrb[0].mxu0 %v391
      %v490 = vpop.f32.mrb[0].mxu0
      %v491 = vadd.f32 %v343, %v490
      %v492 = vpop.f32.mrb[0].mxu0
      %v493 = vpop.f32.mrb[0].mxu0
      %v494 = vadd.f32 %v346, %v493
      %v495 = vpop.f32.mrb[0].mxu0
      %496 = vmatprep.mubr.bf16.mxu0 0
      %497 = vmatmul.mubr.bf16.gmra.mrb[0].mxu0 %v392
      %v498 = vpop.f32.mrb[0].mxu0
      %v499 = vadd.f32 %v351, %v498
      %v500 = vpop.f32.mrb[0].mxu0
      %v501 = vpop.f32.mrb[0].mxu0
      %v502 = vadd.f32 %v354, %v501
      %v503 = vpop.f32.mrb[0].mxu0
      %504 = vmatprep.mubr.bf16.mxu0 0
      %505 = vmatmul.mubr.bf16.gmra.mrb[0].mxu0 %v393
      %v506 = vpop.f32.mrb[0].mxu0
      %v507 = vadd.f32 %v359, %v506
      %v508 = vpop.f32.mrb[0].mxu0
      %v509 = vpop.f32.mrb[0].mxu0
      %v510 = vadd.f32 %v362, %v509
      %v511 = vpop.f32.mrb[0].mxu0
      %512 = vmatprep.mubr.bf16.mxu0 0
      %513 = vmatmul.mubr.bf16.gmra.mrb[0].mxu0 %v394
      %v514 = vpop.f32.mrb[0].mxu0
      %v515 = vadd.f32 %v367, %v514
      %v516 = vpop.f32.mrb[0].mxu0
      %v517 = vpop.f32.mrb[0].mxu0
      %v518 = vpop.f32.mrb[0].mxu0
      %519 = vdwg.mxu0
      %v520 = vld [vmem:[%s165] sm:$0xf]
      %v521 = vld [vmem:[%s165 + $0x4] sm:$0xf]
      %v522 = vld [vmem:[%s165 + $0x8] sm:$0xf]
      %v523 = vld [vmem:[%s165 + $0xc] sm:$0xf]
      %v524 = vld [vmem:[%s165 + $0x10] sm:$0xf]
      %v525 = vld [vmem:[%s165 + $0x14] sm:$0xf]
      %v526 = vld [vmem:[%s165 + $0x18] sm:$0xf]
      %v527 = vld [vmem:[%s165 + $0x1c] sm:$0xf]
      %v528 = vld [vmem:[%s165 + $0x20] sm:$0xf]
      %v529 = vld [vmem:[%s165 + $0x24] sm:$0x1]
      %s530 = scalar_lea.vmem %s1, 128
      %v531 = vld [vmem:[%s530] sm:$0xf]
      %v532 = vld [vmem:[%s530 + $0x4] sm:$0xf]
      %v533 = vld [vmem:[%s530 + $0x8] sm:$0xf]
      %v534 = vld [vmem:[%s530 + $0xc] sm:$0xf]
      %v535 = vld [vmem:[%s530 + $0x10] sm:$0xf]
      %v536 = vld [vmem:[%s530 + $0x14] sm:$0xf]
      %v537 = vld [vmem:[%s530 + $0x18] sm:$0xf]
      %v538 = vld [vmem:[%s530 + $0x1c] sm:$0xf]
      %v539 = vld [vmem:[%s530 + $0x20] sm:$0xf]
      %v540 = vld [vmem:[%s530 + $0x24] sm:$0xf]
      %v541 = vld [vmem:[%s530 + $0x28] sm:$0xf]
      %v542 = vld [vmem:[%s530 + $0x2c] sm:$0xf]
      %v543 = vld [vmem:[%s530 + $0x30] sm:$0xf]
      %v544 = vld [vmem:[%s530 + $0x34] sm:$0xf]
      %v545 = vld [vmem:[%s530 + $0x38] sm:$0xf]
      %v546 = vld [vmem:[%s530 + $0x3c] sm:$0xf]
      %v557 = vunpack.c.l.b16 %v520
      %v558 = vunpack.c.l.b16 %v521
      %v559 = vunpack.c.l.b16 %v522
      %v560 = vunpack.c.l.b16 %v523
      %v561 = vunpack.c.l.b16 %v524
      %v562 = vunpack.c.l.b16 %v525
      %v563 = vunpack.c.l.b16 %v526
      %v564 = vunpack.c.l.b16 %v527
      %v565 = vunpack.c.l.b16 %v528
      %v566 = vunpack.c.l.b16 %v529
      %v567 = vpack.c.b16 %v558, %v557
      %v568 = vpack.c.b16 %v560, %v559
      %v569 = vpack.c.b16 %v562, %v561
      %v570 = vpack.c.b16 %v564, %v563
      %v571 = vpack.c.b16 %v566, %v565
      %vm572 = vsmask.f32 7424
      %v574 = vshrl.u32 %v567, 16
      %v576 = vshll.u32 %v567, 16
      %v578 = vrot.slane %v576, 1
      %v579 = vor.u32 %v574, %v578
      %v581 = vshll.u32 %v568, 16
      %v583 = vrot.slane %v581, 1
      %v584 = vsel %vm572, %v579, %v583
      %v585 = vshrl.u32 %v568, 16
      %v587 = vor.u32 %v585, %v583
      %v589 = vshll.u32 %v569, 16
      %v591 = vrot.slane %v589, 1
      %v592 = vsel %vm572, %v587, %v591
      %v593 = vshrl.u32 %v569, 16
      %v595 = vor.u32 %v593, %v591
      %v597 = vshll.u32 %v570, 16
      %v599 = vrot.slane %v597, 1
      %v600 = vsel %vm572, %v595, %v599
      %v601 = vshrl.u32 %v570, 16
      %v603 = vor.u32 %v601, %v599
      %v605 = vshll.u32 %v571, 16
      %v607 = vrot.slane %v605, 1
      %v608 = vsel %vm572, %v603, %v607
      %v609 = vshrl.u32 %v571, 16
      %v611 = vor.u32 %v609, %v607
      %v633 = vunpack.c.l.b16 %v531
      %v634 = vunpack.c.l.b16 %v532
      %v635 = vunpack.c.l.b16 %v533
      %v636 = vunpack.c.l.b16 %v534
      %v637 = vunpack.c.l.b16 %v535
      %v638 = vunpack.c.l.b16 %v536
      %v639 = vunpack.c.l.b16 %v537
      %v640 = vunpack.c.l.b16 %v538
      %v641 = vunpack.c.l.b16 %v539
      %v642 = vunpack.c.l.b16 %v540
      %v643 = vunpack.c.l.b16 %v541
      %v644 = vunpack.c.l.b16 %v542
      %v645 = vunpack.c.l.b16 %v543
      %v646 = vunpack.c.l.b16 %v544
      %v647 = vunpack.c.l.b16 %v545
      %v648 = vunpack.c.l.b16 %v546
      %v649 = vpack.c.b16 %v634, %v633
      %v650 = vpack.c.b16 %v636, %v635
      %v651 = vpack.c.b16 %v638, %v637
      %v652 = vpack.c.b16 %v640, %v639
      %v653 = vpack.c.b16 %v642, %v641
      %v654 = vpack.c.b16 %v644, %v643
      %v655 = vpack.c.b16 %v646, %v645
      %v656 = vpack.c.b16 %v648, %v647
      %665 = vmatprep.subr.bf16.mxu0 0
      %666 = vmatpush1.bf16.msra.mxu0 %v649
      %667 = vmatprep.subr.bf16.mxu0 0
      %668 = vmatpush1.bf16.msra.mxu0 %v650
      %669 = vmatprep.subr.bf16.mxu0 0
      %670 = vmatpush1.bf16.msra.mxu0 %v651
      %671 = vmatprep.subr.bf16.mxu0 0
      %672 = vmatpush1.bf16.msra.mxu0 %v652
      %673 = vmatprep.subr.bf16.mxu0 0
      %674 = vmatpush1.bf16.msra.mxu0 %v653
      %675 = vmatprep.subr.bf16.mxu0 0
      %676 = vmatpush1.bf16.msra.mxu0 %v654
      %677 = vmatprep.subr.bf16.mxu0 0
      %678 = vmatpush1.bf16.msra.mxu0 %v655
      %679 = vmatprep.subr.bf16.mxu0 0
      %680 = vmatpush1.bf16.msra.mxu0 %v656
      %681 = vmatprep.subr.bf16.mxu0 0
      %682 = vmatpush1.bf16.msra.mxu0 0
      %683 = vmatprep.subr.bf16.mxu0 0
      %684 = vmatpush1.bf16.msra.mxu0 0
      %685 = vmatprep.subr.bf16.mxu0 0
      %686 = vmatpush1.bf16.msra.mxu0 0
      %687 = vmatprep.subr.bf16.mxu0 0
      %688 = vmatpush1.bf16.msra.mxu0 0
      %689 = vmatprep.subr.bf16.mxu0 0
      %690 = vmatpush1.bf16.msra.mxu0 0
      %691 = vmatprep.subr.bf16.mxu0 0
      %692 = vmatpush1.bf16.msra.mxu0 0
      %693 = vmatprep.subr.bf16.mxu0 0
      %694 = vmatpush1.bf16.msra.mxu0 0
      %695 = vmatprep.subr.bf16.mxu0 0
      %696 = vmatpush1.bf16.msra.mxu0 0
      %697 = vmatprep.mubr.bf16.mxu0 0
      %698 = vmatmul.mubr.bf16.gmra.mrb[0].mxu0 %v584
      %v699 = vpop.f32.mrb[0].mxu0
      %v700 = vadd.f32 0.0, %v699
      %v701 = vpop.f32.mrb[0].mxu0
      %v702 = vpop.f32.mrb[0].mxu0
      %v703 = vadd.f32 0.0, %v702
      %v704 = vpop.f32.mrb[0].mxu0
      %705 = vmatprep.mubr.bf16.mxu0 0
      %706 = vmatmul.mubr.bf16.gmra.mrb[0].mxu0 %v592
      %v707 = vpop.f32.mrb[0].mxu0
      %v708 = vadd.f32 0.0, %v707
      %v709 = vpop.f32.mrb[0].mxu0
      %v710 = vpop.f32.mrb[0].mxu0
      %v711 = vadd.f32 0.0, %v710
      %v712 = vpop.f32.mrb[0].mxu0
      %713 = vmatprep.mubr.bf16.mxu0 0
      %714 = vmatmul.mubr.bf16.gmra.mrb[0].mxu0 %v600
      %v715 = vpop.f32.mrb[0].mxu0
      %v716 = vadd.f32 0.0, %v715
      %v717 = vpop.f32.mrb[0].mxu0
      %v718 = vpop.f32.mrb[0].mxu0
      %v719 = vadd.f32 0.0, %v718
      %v720 = vpop.f32.mrb[0].mxu0
      %721 = vmatprep.mubr.bf16.mxu0 0
      %722 = vmatmul.mubr.bf16.gmra.mrb[0].mxu0 %v608
      %v723 = vpop.f32.mrb[0].mxu0
      %v724 = vadd.f32 0.0, %v723
      %v725 = vpop.f32.mrb[0].mxu0
      %v726 = vpop.f32.mrb[0].mxu0
      %v727 = vadd.f32 0.0, %v726
      %v728 = vpop.f32.mrb[0].mxu0
      %729 = vmatprep.mubr.bf16.mxu0 0
      %730 = vmatmul.mubr.bf16.gmra.mrb[0].mxu0 %v611
      %v731 = vpop.f32.mrb[0].mxu0
      %v732 = vadd.f32 0.0, %v731
      %v733 = vpop.f32.mrb[0].mxu0
      %v734 = vpop.f32.mrb[0].mxu0
      %v735 = vpop.f32.mrb[0].mxu0
      %736 = vdwg.mxu0
      %v737 = vadd.f32 %v483, %v700
      %v738 = vadd.f32 %v486, %v703
      %v739 = vadd.f32 %v491, %v708
      %v740 = vadd.f32 %v494, %v711
      %v741 = vadd.f32 %v499, %v716
      %v742 = vadd.f32 %v502, %v719
      %v743 = vadd.f32 %v507, %v724
      %v744 = vadd.f32 %v510, %v727
      %v745 = vadd.f32 %v515, %v732
      %s746 = scalar_lea.vmem %s165, 88
      %v747 = vld [vmem:[%s746] sm:$0xf]
      %v748 = vld [vmem:[%s746 + $0x4] sm:$0xf]
      %v749 = vld [vmem:[%s746 + $0x8] sm:$0xf]
      %v750 = vld [vmem:[%s746 + $0xc] sm:$0xf]
      %v751 = vld [vmem:[%s746 + $0x10] sm:$0xf]
      %v752 = vld [vmem:[%s746 + $0x14] sm:$0xf]
      %v753 = vld [vmem:[%s746 + $0x18] sm:$0xf]
      %v754 = vld [vmem:[%s746 + $0x1c] sm:$0xf]
      %v755 = vld [vmem:[%s746 + $0x20] sm:$0xf]
      %s756 = scalar_lea.vmem %s1, 192
      %v757 = vld [vmem:[%s756] sm:$0xf]
      %v758 = vld [vmem:[%s756 + $0x4] sm:$0xf]
      %v759 = vld [vmem:[%s756 + $0x8] sm:$0xf]
      %v760 = vld [vmem:[%s756 + $0xc] sm:$0xf]
      %v761 = vld [vmem:[%s756 + $0x10] sm:$0xf]
      %v762 = vld [vmem:[%s756 + $0x14] sm:$0xf]
      %v763 = vld [vmem:[%s756 + $0x18] sm:$0xf]
      %v764 = vld [vmem:[%s756 + $0x1c] sm:$0xf]
      %v765 = vld [vmem:[%s756 + $0x20] sm:$0xf]
      %v766 = vld [vmem:[%s756 + $0x24] sm:$0xf]
      %v767 = vld [vmem:[%s756 + $0x28] sm:$0xf]
      %v768 = vld [vmem:[%s756 + $0x2c] sm:$0xf]
      %v769 = vld [vmem:[%s756 + $0x30] sm:$0xf]
      %v770 = vld [vmem:[%s756 + $0x34] sm:$0xf]
      %v771 = vld [vmem:[%s756 + $0x38] sm:$0xf]
      %v772 = vld [vmem:[%s756 + $0x3c] sm:$0xf]
      %v782 = vunpack.c.l.b16 %v747
      %v783 = vunpack.c.l.b16 %v748
      %v784 = vunpack.c.l.b16 %v749
      %v785 = vunpack.c.l.b16 %v750
      %v786 = vunpack.c.l.b16 %v751
      %v787 = vunpack.c.l.b16 %v752
      %v788 = vunpack.c.l.b16 %v753
      %v789 = vunpack.c.l.b16 %v754
      %v790 = vunpack.c.l.b16 %v755
      %v791 = vpack.c.b16 %v783, %v782
      %v792 = vpack.c.b16 %v785, %v784
      %v793 = vpack.c.b16 %v787, %v786
      %v794 = vpack.c.b16 %v789, %v788
      %v795 = vpack.c.b16 %v790, %v790
      %v817 = vunpack.c.l.b16 %v757
      %v818 = vunpack.c.l.b16 %v758
      %v819 = vunpack.c.l.b16 %v759
      %v820 = vunpack.c.l.b16 %v760
      %v821 = vunpack.c.l.b16 %v761
      %v822 = vunpack.c.l.b16 %v762
      %v823 = vunpack.c.l.b16 %v763
      %v824 = vunpack.c.l.b16 %v764
      %v825 = vunpack.c.l.b16 %v765
      %v826 = vunpack.c.l.b16 %v766
      %v827 = vunpack.c.l.b16 %v767
      %v828 = vunpack.c.l.b16 %v768
      %v829 = vunpack.c.l.b16 %v769
      %v830 = vunpack.c.l.b16 %v770
      %v831 = vunpack.c.l.b16 %v771
      %v832 = vunpack.c.l.b16 %v772
      %v833 = vpack.c.b16 %v818, %v817
      %v834 = vpack.c.b16 %v820, %v819
      %v835 = vpack.c.b16 %v822, %v821
      %v836 = vpack.c.b16 %v824, %v823
      %v837 = vpack.c.b16 %v826, %v825
      %v838 = vpack.c.b16 %v828, %v827
      %v839 = vpack.c.b16 %v830, %v829
      %v840 = vpack.c.b16 %v832, %v831
      %849 = vmatprep.subr.bf16.mxu0 0
      %850 = vmatpush1.bf16.msra.mxu0 %v833
      %851 = vmatprep.subr.bf16.mxu0 0
      %852 = vmatpush1.bf16.msra.mxu0 %v834
      %853 = vmatprep.subr.bf16.mxu0 0
      %854 = vmatpush1.bf16.msra.mxu0 %v835
      %855 = vmatprep.subr.bf16.mxu0 0
      %856 = vmatpush1.bf16.msra.mxu0 %v836
      %857 = vmatprep.subr.bf16.mxu0 0
      %858 = vmatpush1.bf16.msra.mxu0 %v837
      %859 = vmatprep.subr.bf16.mxu0 0
      %860 = vmatpush1.bf16.msra.mxu0 %v838
      %861 = vmatprep.subr.bf16.mxu0 0
      %862 = vmatpush1.bf16.msra.mxu0 %v839
      %863 = vmatprep.subr.bf16.mxu0 0
      %864 = vmatpush1.bf16.msra.mxu0 %v840
      %865 = vmatprep.subr.bf16.mxu0 0
      %866 = vmatpush1.bf16.msra.mxu0 0
      %867 = vmatprep.subr.bf16.mxu0 0
      %868 = vmatpush1.bf16.msra.mxu0 0
      %869 = vmatprep.subr.bf16.mxu0 0
      %870 = vmatpush1.bf16.msra.mxu0 0
      %871 = vmatprep.subr.bf16.mxu0 0
      %872 = vmatpush1.bf16.msra.mxu0 0
      %873 = vmatprep.subr.bf16.mxu0 0
      %874 = vmatpush1.bf16.msra.mxu0 0
      %875 = vmatprep.subr.bf16.mxu0 0
      %876 = vmatpush1.bf16.msra.mxu0 0
      %877 = vmatprep.subr.bf16.mxu0 0
      %878 = vmatpush1.bf16.msra.mxu0 0
      %879 = vmatprep.subr.bf16.mxu0 0
      %880 = vmatpush1.bf16.msra.mxu0 0
      %881 = vmatprep.mubr.bf16.mxu0 0
      %882 = vmatmul.mubr.bf16.gmra.mrb[0].mxu0 %v791
      %v883 = vpop.f32.mrb[0].mxu0
      %v884 = vadd.f32 0.0, %v883
      %v885 = vpop.f32.mrb[0].mxu0
      %v886 = vpop.f32.mrb[0].mxu0
      %v887 = vadd.f32 0.0, %v886
      %v888 = vpop.f32.mrb[0].mxu0
      %889 = vmatprep.mubr.bf16.mxu0 0
      %890 = vmatmul.mubr.bf16.gmra.mrb[0].mxu0 %v792
      %v891 = vpop.f32.mrb[0].mxu0
      %v892 = vadd.f32 0.0, %v891
      %v893 = vpop.f32.mrb[0].mxu0
      %v894 = vpop.f32.mrb[0].mxu0
      %v895 = vadd.f32 0.0, %v894
      %v896 = vpop.f32.mrb[0].mxu0
      %897 = vmatprep.mubr.bf16.mxu0 0
      %898 = vmatmul.mubr.bf16.gmra.mrb[0].mxu0 %v793
      %v899 = vpop.f32.mrb[0].mxu0
      %v900 = vadd.f32 0.0, %v899
      %v901 = vpop.f32.mrb[0].mxu0
      %v902 = vpop.f32.mrb[0].mxu0
      %v903 = vadd.f32 0.0, %v902
      %v904 = vpop.f32.mrb[0].mxu0
      %905 = vmatprep.mubr.bf16.mxu0 0
      %906 = vmatmul.mubr.bf16.gmra.mrb[0].mxu0 %v794
      %v907 = vpop.f32.mrb[0].mxu0
      %v908 = vadd.f32 0.0, %v907
      %v909 = vpop.f32.mrb[0].mxu0
      %v910 = vpop.f32.mrb[0].mxu0
      %v911 = vadd.f32 0.0, %v910
      %v912 = vpop.f32.mrb[0].mxu0
      %913 = vmatprep.mubr.bf16.mxu0 0
      %914 = vmatmul.mubr.bf16.gmra.mrb[0].mxu0 %v795
      %v915 = vpop.f32.mrb[0].mxu0
      %v916 = vadd.f32 0.0, %v915
      %v917 = vpop.f32.mrb[0].mxu0
      %v918 = vpop.f32.mrb[0].mxu0
      %v919 = vpop.f32.mrb[0].mxu0
      %920 = vdwg.mxu0
      %v921 = vadd.f32 %v737, %v884
      %v922 = vadd.f32 %v738, %v887
      %v923 = vadd.f32 %v739, %v892
      %v924 = vadd.f32 %v740, %v895
      %v925 = vadd.f32 %v741, %v900
      %v926 = vadd.f32 %v742, %v903
      %v927 = vadd.f32 %v743, %v908
      %v928 = vadd.f32 %v744, %v911
      %v929 = vadd.f32 %v745, %v916
      %s930 = scalar_lea.vmem %s165, 132
      %v931 = vld [vmem:[%s930] sm:$0xf]
      %v932 = vld [vmem:[%s930 + $0x4] sm:$0xf]
      %v933 = vld [vmem:[%s930 + $0x8] sm:$0xf]
      %v934 = vld [vmem:[%s930 + $0xc] sm:$0xf]
      %v935 = vld [vmem:[%s930 + $0x10] sm:$0xf]
      %v936 = vld [vmem:[%s930 + $0x14] sm:$0xf]
      %v937 = vld [vmem:[%s930 + $0x18] sm:$0xf]
      %v938 = vld [vmem:[%s930 + $0x1c] sm:$0xf]
      %v939 = vld [vmem:[%s930 + $0x20] sm:$0xf]
      %s940 = scalar_lea.vmem %s1, 256
      %v941 = vld [vmem:[%s940] sm:$0xf]
      %v942 = vld [vmem:[%s940 + $0x4] sm:$0xf]
      %v943 = vld [vmem:[%s940 + $0x8] sm:$0xf]
      %v944 = vld [vmem:[%s940 + $0xc] sm:$0xf]
      %v945 = vld [vmem:[%s940 + $0x10] sm:$0xf]
      %v946 = vld [vmem:[%s940 + $0x14] sm:$0xf]
      %v947 = vld [vmem:[%s940 + $0x18] sm:$0xf]
      %v948 = vld [vmem:[%s940 + $0x1c] sm:$0xf]
      %v949 = vld [vmem:[%s940 + $0x20] sm:$0xf]
      %v950 = vld [vmem:[%s940 + $0x24] sm:$0xf]
      %v951 = vld [vmem:[%s940 + $0x28] sm:$0xf]
      %v952 = vld [vmem:[%s940 + $0x2c] sm:$0xf]
      %v953 = vld [vmem:[%s940 + $0x30] sm:$0xf]
      %v954 = vld [vmem:[%s940 + $0x34] sm:$0xf]
      %v955 = vld [vmem:[%s940 + $0x38] sm:$0xf]
      %v956 = vld [vmem:[%s940 + $0x3c] sm:$0xf]
      %v966 = vunpack.c.l.b16 %v931
      %v967 = vunpack.c.l.b16 %v932
      %v968 = vunpack.c.l.b16 %v933
      %v969 = vunpack.c.l.b16 %v934
      %v970 = vunpack.c.l.b16 %v935
      %v971 = vunpack.c.l.b16 %v936
      %v972 = vunpack.c.l.b16 %v937
      %v973 = vunpack.c.l.b16 %v938
      %v974 = vunpack.c.l.b16 %v939
      %v975 = vpack.c.b16 %v967, %v966
      %v976 = vpack.c.b16 %v969, %v968
      %v977 = vpack.c.b16 %v971, %v970
      %v978 = vpack.c.b16 %v973, %v972
      %v979 = vpack.c.b16 %v974, %v974
      %v1001 = vunpack.c.l.b16 %v941
      %v1002 = vunpack.c.l.b16 %v942
      %v1003 = vunpack.c.l.b16 %v943
      %v1004 = vunpack.c.l.b16 %v944
      %v1005 = vunpack.c.l.b16 %v945
      %v1006 = vunpack.c.l.b16 %v946
      %v1007 = vunpack.c.l.b16 %v947
      %v1008 = vunpack.c.l.b16 %v948
      %v1009 = vunpack.c.l.b16 %v949
      %v1010 = vunpack.c.l.b16 %v950
      %v1011 = vunpack.c.l.b16 %v951
      %v1012 = vunpack.c.l.b16 %v952
      %v1013 = vunpack.c.l.b16 %v953
      %v1014 = vunpack.c.l.b16 %v954
      %v1015 = vunpack.c.l.b16 %v955
      %v1016 = vunpack.c.l.b16 %v956
      %v1017 = vpack.c.b16 %v1002, %v1001
      %v1018 = vpack.c.b16 %v1004, %v1003
      %v1019 = vpack.c.b16 %v1006, %v1005
      %v1020 = vpack.c.b16 %v1008, %v1007
      %v1021 = vpack.c.b16 %v1010, %v1009
      %v1022 = vpack.c.b16 %v1012, %v1011
      %v1023 = vpack.c.b16 %v1014, %v1013
      %v1024 = vpack.c.b16 %v1016, %v1015
      %1033 = vmatprep.subr.bf16.mxu0 0
      %1034 = vmatpush1.bf16.msra.mxu0 %v1017
      %1035 = vmatprep.subr.bf16.mxu0 0
      %1036 = vmatpush1.bf16.msra.mxu0 %v1018
      %1037 = vmatprep.subr.bf16.mxu0 0
      %1038 = vmatpush1.bf16.msra.mxu0 %v1019
      %1039 = vmatprep.subr.bf16.mxu0 0
      %1040 = vmatpush1.bf16.msra.mxu0 %v1020
      %1041 = vmatprep.subr.bf16.mxu0 0
      %1042 = vmatpush1.bf16.msra.mxu0 %v1021
      %1043 = vmatprep.subr.bf16.mxu0 0
      %1044 = vmatpush1.bf16.msra.mxu0 %v1022
      %1045 = vmatprep.subr.bf16.mxu0 0
      %1046 = vmatpush1.bf16.msra.mxu0 %v1023
      %1047 = vmatprep.subr.bf16.mxu0 0
      %1048 = vmatpush1.bf16.msra.mxu0 %v1024
      %1049 = vmatprep.subr.bf16.mxu0 0
      %1050 = vmatpush1.bf16.msra.mxu0 0
      %1051 = vmatprep.subr.bf16.mxu0 0
      %1052 = vmatpush1.bf16.msra.mxu0 0
      %1053 = vmatprep.subr.bf16.mxu0 0
      %1054 = vmatpush1.bf16.msra.mxu0 0
      %1055 = vmatprep.subr.bf16.mxu0 0
      %1056 = vmatpush1.bf16.msra.mxu0 0
      %1057 = vmatprep.subr.bf16.mxu0 0
      %1058 = vmatpush1.bf16.msra.mxu0 0
      %1059 = vmatprep.subr.bf16.mxu0 0
      %1060 = vmatpush1.bf16.msra.mxu0 0
      %1061 = vmatprep.subr.bf16.mxu0 0
      %1062 = vmatpush1.bf16.msra.mxu0 0
      %1063 = vmatprep.subr.bf16.mxu0 0
      %1064 = vmatpush1.bf16.msra.mxu0 0
      %1065 = vmatprep.mubr.bf16.mxu0 0
      %1066 = vmatmul.mubr.bf16.gmra.mrb[0].mxu0 %v975
      %v1067 = vpop.f32.mrb[0].mxu0
      %v1068 = vadd.f32 0.0, %v1067
      %v1069 = vpop.f32.mrb[0].mxu0
      %v1070 = vpop.f32.mrb[0].mxu0
      %v1071 = vadd.f32 0.0, %v1070
      %v1072 = vpop.f32.mrb[0].mxu0
      %1073 = vmatprep.mubr.bf16.mxu0 0
      %1074 = vmatmul.mubr.bf16.gmra.mrb[0].mxu0 %v976
      %v1075 = vpop.f32.mrb[0].mxu0
      %v1076 = vadd.f32 0.0, %v1075
      %v1077 = vpop.f32.mrb[0].mxu0
      %v1078 = vpop.f32.mrb[0].mxu0
      %v1079 = vadd.f32 0.0, %v1078
      %v1080 = vpop.f32.mrb[0].mxu0
      %1081 = vmatprep.mubr.bf16.mxu0 0
      %1082 = vmatmul.mubr.bf16.gmra.mrb[0].mxu0 %v977
      %v1083 = vpop.f32.mrb[0].mxu0
      %v1084 = vadd.f32 0.0, %v1083
      %v1085 = vpop.f32.mrb[0].mxu0
      %v1086 = vpop.f32.mrb[0].mxu0
      %v1087 = vadd.f32 0.0, %v1086
      %v1088 = vpop.f32.mrb[0].mxu0
      %1089 = vmatprep.mubr.bf16.mxu0 0
      %1090 = vmatmul.mubr.bf16.gmra.mrb[0].mxu0 %v978
      %v1091 = vpop.f32.mrb[0].mxu0
      %v1092 = vadd.f32 0.0, %v1091
      %v1093 = vpop.f32.mrb[0].mxu0
      %v1094 = vpop.f32.mrb[0].mxu0
      %v1095 = vadd.f32 0.0, %v1094
      %v1096 = vpop.f32.mrb[0].mxu0
      %1097 = vmatprep.mubr.bf16.mxu0 0
      %1098 = vmatmul.mubr.bf16.gmra.mrb[0].mxu0 %v979
      %v1099 = vpop.f32.mrb[0].mxu0
      %v1100 = vadd.f32 0.0, %v1099
      %v1101 = vpop.f32.mrb[0].mxu0
      %v1102 = vpop.f32.mrb[0].mxu0
      %v1103 = vpop.f32.mrb[0].mxu0
      %1104 = vdwg.mxu0
      %v1105 = vadd.f32 %v921, %v1068
      %v1106 = vadd.f32 %v922, %v1071
      %v1107 = vadd.f32 %v923, %v1076
      %v1108 = vadd.f32 %v924, %v1079
      %v1109 = vadd.f32 %v925, %v1084
      %v1110 = vadd.f32 %v926, %v1087
      %v1111 = vadd.f32 %v927, %v1092
      %v1112 = vadd.f32 %v928, %v1095
      %v1113 = vadd.f32 %v929, %v1100
      %v1114 = vld [vmem:[%s746] sm:$0xf]
      %v1115 = vld [vmem:[%s746 + $0x4] sm:$0xf]
      %v1116 = vld [vmem:[%s746 + $0x8] sm:$0xf]
      %v1117 = vld [vmem:[%s746 + $0xc] sm:$0xf]
      %v1118 = vld [vmem:[%s746 + $0x10] sm:$0xf]
      %v1119 = vld [vmem:[%s746 + $0x14] sm:$0xf]
      %v1120 = vld [vmem:[%s746 + $0x18] sm:$0xf]
      %v1121 = vld [vmem:[%s746 + $0x1c] sm:$0xf]
      %v1122 = vld [vmem:[%s746 + $0x20] sm:$0xf]
      %v1123 = vld [vmem:[%s746 + $0x24] sm:$0x1]
      %s1124 = scalar_lea.vmem %s1, 320
      %v1125 = vld [vmem:[%s1124] sm:$0xf]
      %v1126 = vld [vmem:[%s1124 + $0x4] sm:$0xf]
      %v1127 = vld [vmem:[%s1124 + $0x8] sm:$0xf]
      %v1128 = vld [vmem:[%s1124 + $0xc] sm:$0xf]
      %v1129 = vld [vmem:[%s1124 + $0x10] sm:$0xf]
      %v1130 = vld [vmem:[%s1124 + $0x14] sm:$0xf]
      %v1131 = vld [vmem:[%s1124 + $0x18] sm:$0xf]
      %v1132 = vld [vmem:[%s1124 + $0x1c] sm:$0xf]
      %v1133 = vld [vmem:[%s1124 + $0x20] sm:$0xf]
      %v1134 = vld [vmem:[%s1124 + $0x24] sm:$0xf]
      %v1135 = vld [vmem:[%s1124 + $0x28] sm:$0xf]
      %v1136 = vld [vmem:[%s1124 + $0x2c] sm:$0xf]
      %v1137 = vld [vmem:[%s1124 + $0x30] sm:$0xf]
      %v1138 = vld [vmem:[%s1124 + $0x34] sm:$0xf]
      %v1139 = vld [vmem:[%s1124 + $0x38] sm:$0xf]
      %v1140 = vld [vmem:[%s1124 + $0x3c] sm:$0xf]
      %v1151 = vunpack.c.l.b16 %v1114
      %v1152 = vunpack.c.l.b16 %v1115
      %v1153 = vunpack.c.l.b16 %v1116
      %v1154 = vunpack.c.l.b16 %v1117
      %v1155 = vunpack.c.l.b16 %v1118
      %v1156 = vunpack.c.l.b16 %v1119
      %v1157 = vunpack.c.l.b16 %v1120
      %v1158 = vunpack.c.l.b16 %v1121
      %v1159 = vunpack.c.l.b16 %v1122
      %v1160 = vunpack.c.l.b16 %v1123
      %v1161 = vpack.c.b16 %v1152, %v1151
      %v1162 = vpack.c.b16 %v1154, %v1153
      %v1163 = vpack.c.b16 %v1156, %v1155
      %v1164 = vpack.c.b16 %v1158, %v1157
      %v1165 = vpack.c.b16 %v1160, %v1159
      %v1167 = vshrl.u32 %v1161, 16
      %v1169 = vshll.u32 %v1161, 16
      %v1171 = vrot.slane %v1169, 1
      %v1172 = vor.u32 %v1167, %v1171
      %v1174 = vshll.u32 %v1162, 16
      %v1176 = vrot.slane %v1174, 1
      %v1177 = vsel %vm572, %v1172, %v1176
      %v1178 = vshrl.u32 %v1162, 16
      %v1180 = vor.u32 %v1178, %v1176
      %v1182 = vshll.u32 %v1163, 16
      %v1184 = vrot.slane %v1182, 1
      %v1185 = vsel %vm572, %v1180, %v1184
      %v1186 = vshrl.u32 %v1163, 16
      %v1188 = vor.u32 %v1186, %v1184
      %v1190 = vshll.u32 %v1164, 16
      %v1192 = vrot.slane %v1190, 1
      %v1193 = vsel %vm572, %v1188, %v1192
      %v1194 = vshrl.u32 %v1164, 16
      %v1196 = vor.u32 %v1194, %v1192
      %v1198 = vshll.u32 %v1165, 16
      %v1200 = vrot.slane %v1198, 1
      %v1201 = vsel %vm572, %v1196, %v1200
      %v1202 = vshrl.u32 %v1165, 16
      %v1204 = vor.u32 %v1202, %v1200
      %v1226 = vunpack.c.l.b16 %v1125
      %v1227 = vunpack.c.l.b16 %v1126
      %v1228 = vunpack.c.l.b16 %v1127
      %v1229 = vunpack.c.l.b16 %v1128
      %v1230 = vunpack.c.l.b16 %v1129
      %v1231 = vunpack.c.l.b16 %v1130
      %v1232 = vunpack.c.l.b16 %v1131
      %v1233 = vunpack.c.l.b16 %v1132
      %v1234 = vunpack.c.l.b16 %v1133
      %v1235 = vunpack.c.l.b16 %v1134
      %v1236 = vunpack.c.l.b16 %v1135
      %v1237 = vunpack.c.l.b16 %v1136
      %v1238 = vunpack.c.l.b16 %v1137
      %v1239 = vunpack.c.l.b16 %v1138
      %v1240 = vunpack.c.l.b16 %v1139
      %v1241 = vunpack.c.l.b16 %v1140
      %v1242 = vpack.c.b16 %v1227, %v1226
      %v1243 = vpack.c.b16 %v1229, %v1228
      %v1244 = vpack.c.b16 %v1231, %v1230
      %v1245 = vpack.c.b16 %v1233, %v1232
      %v1246 = vpack.c.b16 %v1235, %v1234
      %v1247 = vpack.c.b16 %v1237, %v1236
      %v1248 = vpack.c.b16 %v1239, %v1238
      %v1249 = vpack.c.b16 %v1241, %v1240
      %1258 = vmatprep.subr.bf16.mxu0 0
      %1259 = vmatpush1.bf16.msra.mxu0 %v1242
      %1260 = vmatprep.subr.bf16.mxu0 0
      %1261 = vmatpush1.bf16.msra.mxu0 %v1243
      %1262 = vmatprep.subr.bf16.mxu0 0
      %1263 = vmatpush1.bf16.msra.mxu0 %v1244
      %1264 = vmatprep.subr.bf16.mxu0 0
      %1265 = vmatpush1.bf16.msra.mxu0 %v1245
      %1266 = vmatprep.subr.bf16.mxu0 0
      %1267 = vmatpush1.bf16.msra.mxu0 %v1246
      %1268 = vmatprep.subr.bf16.mxu0 0
      %1269 = vmatpush1.bf16.msra.mxu0 %v1247
      %1270 = vmatprep.subr.bf16.mxu0 0
      %1271 = vmatpush1.bf16.msra.mxu0 %v1248
      %1272 = vmatprep.subr.bf16.mxu0 0
      %1273 = vmatpush1.bf16.msra.mxu0 %v1249
      %1274 = vmatprep.subr.bf16.mxu0 0
      %1275 = vmatpush1.bf16.msra.mxu0 0
      %1276 = vmatprep.subr.bf16.mxu0 0
      %1277 = vmatpush1.bf16.msra.mxu0 0
      %1278 = vmatprep.subr.bf16.mxu0 0
      %1279 = vmatpush1.bf16.msra.mxu0 0
      %1280 = vmatprep.subr.bf16.mxu0 0
      %1281 = vmatpush1.bf16.msra.mxu0 0
      %1282 = vmatprep.subr.bf16.mxu0 0
      %1283 = vmatpush1.bf16.msra.mxu0 0
      %1284 = vmatprep.subr.bf16.mxu0 0
      %1285 = vmatpush1.bf16.msra.mxu0 0
      %1286 = vmatprep.subr.bf16.mxu0 0
      %1287 = vmatpush1.bf16.msra.mxu0 0
      %1288 = vmatprep.subr.bf16.mxu0 0
      %1289 = vmatpush1.bf16.msra.mxu0 0
      %1290 = vmatprep.mubr.bf16.mxu0 0
      %1291 = vmatmul.mubr.bf16.gmra.mrb[0].mxu0 %v1177
      %v1292 = vpop.f32.mrb[0].mxu0
      %v1293 = vadd.f32 0.0, %v1292
      %v1294 = vpop.f32.mrb[0].mxu0
      %v1295 = vpop.f32.mrb[0].mxu0
      %v1296 = vadd.f32 0.0, %v1295
      %v1297 = vpop.f32.mrb[0].mxu0
      %1298 = vmatprep.mubr.bf16.mxu0 0
      %1299 = vmatmul.mubr.bf16.gmra.mrb[0].mxu0 %v1185
      %v1300 = vpop.f32.mrb[0].mxu0
      %v1301 = vadd.f32 0.0, %v1300
      %v1302 = vpop.f32.mrb[0].mxu0
      %v1303 = vpop.f32.mrb[0].mxu0
      %v1304 = vadd.f32 0.0, %v1303
      %v1305 = vpop.f32.mrb[0].mxu0
      %1306 = vmatprep.mubr.bf16.mxu0 0
      %1307 = vmatmul.mubr.bf16.gmra.mrb[0].mxu0 %v1193
      %v1308 = vpop.f32.mrb[0].mxu0
      %v1309 = vadd.f32 0.0, %v1308
      %v1310 = vpop.f32.mrb[0].mxu0
      %v1311 = vpop.f32.mrb[0].mxu0
      %v1312 = vadd.f32 0.0, %v1311
      %v1313 = vpop.f32.mrb[0].mxu0
      %1314 = vmatprep.mubr.bf16.mxu0 0
      %1315 = vmatmul.mubr.bf16.gmra.mrb[0].mxu0 %v1201
      %v1316 = vpop.f32.mrb[0].mxu0
      %v1317 = vadd.f32 0.0, %v1316
      %v1318 = vpop.f32.mrb[0].mxu0
      %v1319 = vpop.f32.mrb[0].mxu0
      %v1320 = vadd.f32 0.0, %v1319
      %v1321 = vpop.f32.mrb[0].mxu0
      %1322 = vmatprep.mubr.bf16.mxu0 0
      %1323 = vmatmul.mubr.bf16.gmra.mrb[0].mxu0 %v1204
      %v1324 = vpop.f32.mrb[0].mxu0
      %v1325 = vadd.f32 0.0, %v1324
      %v1326 = vpop.f32.mrb[0].mxu0
      %v1327 = vpop.f32.mrb[0].mxu0
      %v1328 = vpop.f32.mrb[0].mxu0
      %1329 = vdwg.mxu0
      %v1330 = vadd.f32 %v1105, %v1293
      %v1331 = vadd.f32 %v1106, %v1296
      %v1332 = vadd.f32 %v1107, %v1301
      %v1333 = vadd.f32 %v1108, %v1304
      %v1334 = vadd.f32 %v1109, %v1309
      %v1335 = vadd.f32 %v1110, %v1312
      %v1336 = vadd.f32 %v1111, %v1317
      %v1337 = vadd.f32 %v1112, %v1320
      %v1338 = vadd.f32 %v1113, %v1325
      %v1339 = vld [vmem:[%s165 + $0x4] sm:$0xf]
      %v1340 = vld [vmem:[%s165 + $0x8] sm:$0xf]
      %v1341 = vld [vmem:[%s165 + $0xc] sm:$0xf]
      %v1342 = vld [vmem:[%s165 + $0x10] sm:$0xf]
      %v1343 = vld [vmem:[%s165 + $0x14] sm:$0xf]
      %v1344 = vld [vmem:[%s165 + $0x18] sm:$0xf]
      %v1345 = vld [vmem:[%s165 + $0x1c] sm:$0xf]
      %v1346 = vld [vmem:[%s165 + $0x20] sm:$0xf]
      %v1347 = vld [vmem:[%s165 + $0x24] sm:$0xf]
      %v1348 = vld [vmem:[%s165 + $0x28] sm:$0x1]
      %s1349 = scalar_lea.vmem %s1, 384
      %v1350 = vld [vmem:[%s1349] sm:$0xf]
      %v1351 = vld [vmem:[%s1349 + $0x4] sm:$0xf]
      %v1352 = vld [vmem:[%s1349 + $0x8] sm:$0xf]
      %v1353 = vld [vmem:[%s1349 + $0xc] sm:$0xf]
      %v1354 = vld [vmem:[%s1349 + $0x10] sm:$0xf]
      %v1355 = vld [vmem:[%s1349 + $0x14] sm:$0xf]
      %v1356 = vld [vmem:[%s1349 + $0x18] sm:$0xf]
      %v1357 = vld [vmem:[%s1349 + $0x1c] sm:$0xf]
      %v1358 = vld [vmem:[%s1349 + $0x20] sm:$0xf]
      %v1359 = vld [vmem:[%s1349 + $0x24] sm:$0xf]
      %v1360 = vld [vmem:[%s1349 + $0x28] sm:$0xf]
      %v1361 = vld [vmem:[%s1349 + $0x2c] sm:$0xf]
      %v1362 = vld [vmem:[%s1349 + $0x30] sm:$0xf]
      %v1363 = vld [vmem:[%s1349 + $0x34] sm:$0xf]
      %v1364 = vld [vmem:[%s1349 + $0x38] sm:$0xf]
      %v1365 = vld [vmem:[%s1349 + $0x3c] sm:$0xf]
      %v1376 = vunpack.c.l.b16 %v1339
      %v1377 = vunpack.c.l.b16 %v1340
      %v1378 = vunpack.c.l.b16 %v1341
      %v1379 = vunpack.c.l.b16 %v1342
      %v1380 = vunpack.c.l.b16 %v1343
      %v1381 = vunpack.c.l.b16 %v1344
      %v1382 = vunpack.c.l.b16 %v1345
      %v1383 = vunpack.c.l.b16 %v1346
      %v1384 = vunpack.c.l.b16 %v1347
      %v1385 = vunpack.c.l.b16 %v1348
      %v1386 = vpack.c.b16 %v1377, %v1376
      %v1387 = vpack.c.b16 %v1379, %v1378
      %v1388 = vpack.c.b16 %v1381, %v1380
      %v1389 = vpack.c.b16 %v1383, %v1382
      %v1390 = vpack.c.b16 %v1385, %v1384
      %v1392 = vshrl.u32 %v1386, 16
      %v1394 = vshll.u32 %v1386, 16
      %v1396 = vrot.slane %v1394, 1
      %v1397 = vor.u32 %v1392, %v1396
      %v1399 = vshll.u32 %v1387, 16
      %v1401 = vrot.slane %v1399, 1
      %v1402 = vsel %vm572, %v1397, %v1401
      %v1403 = vshrl.u32 %v1387, 16
      %v1405 = vor.u32 %v1403, %v1401
      %v1407 = vshll.u32 %v1388, 16
      %v1409 = vrot.slane %v1407, 1
      %v1410 = vsel %vm572, %v1405, %v1409
      %v1411 = vshrl.u32 %v1388, 16
      %v1413 = vor.u32 %v1411, %v1409
      %v1415 = vshll.u32 %v1389, 16
      %v1417 = vrot.slane %v1415, 1
      %v1418 = vsel %vm572, %v1413, %v1417
      %v1419 = vshrl.u32 %v1389, 16
      %v1421 = vor.u32 %v1419, %v1417
      %v1423 = vshll.u32 %v1390, 16
      %v1425 = vrot.slane %v1423, 1
      %v1426 = vsel %vm572, %v1421, %v1425
      %v1427 = vshrl.u32 %v1390, 16
      %v1429 = vor.u32 %v1427, %v1425
      %v1451 = vunpack.c.l.b16 %v1350
      %v1452 = vunpack.c.l.b16 %v1351
      %v1453 = vunpack.c.l.b16 %v1352
      %v1454 = vunpack.c.l.b16 %v1353
      %v1455 = vunpack.c.l.b16 %v1354
      %v1456 = vunpack.c.l.b16 %v1355
      %v1457 = vunpack.c.l.b16 %v1356
      %v1458 = vunpack.c.l.b16 %v1357
      %v1459 = vunpack.c.l.b16 %v1358
      %v1460 = vunpack.c.l.b16 %v1359
      %v1461 = vunpack.c.l.b16 %v1360
      %v1462 = vunpack.c.l.b16 %v1361
      %v1463 = vunpack.c.l.b16 %v1362
      %v1464 = vunpack.c.l.b16 %v1363
      %v1465 = vunpack.c.l.b16 %v1364
      %v1466 = vunpack.c.l.b16 %v1365
      %v1467 = vpack.c.b16 %v1452, %v1451
      %v1468 = vpack.c.b16 %v1454, %v1453
      %v1469 = vpack.c.b16 %v1456, %v1455
      %v1470 = vpack.c.b16 %v1458, %v1457
      %v1471 = vpack.c.b16 %v1460, %v1459
      %v1472 = vpack.c.b16 %v1462, %v1461
      %v1473 = vpack.c.b16 %v1464, %v1463
      %v1474 = vpack.c.b16 %v1466, %v1465
      %1483 = vmatprep.subr.bf16.mxu0 0
      %1484 = vmatpush1.bf16.msra.mxu0 %v1467
      %1485 = vmatprep.subr.bf16.mxu0 0
      %1486 = vmatpush1.bf16.msra.mxu0 %v1468
      %1487 = vmatprep.subr.bf16.mxu0 0
      %1488 = vmatpush1.bf16.msra.mxu0 %v1469
      %1489 = vmatprep.subr.bf16.mxu0 0
      %1490 = vmatpush1.bf16.msra.mxu0 %v1470
      %1491 = vmatprep.subr.bf16.mxu0 0
      %1492 = vmatpush1.bf16.msra.mxu0 %v1471
      %1493 = vmatprep.subr.bf16.mxu0 0
      %1494 = vmatpush1.bf16.msra.mxu0 %v1472
      %1495 = vmatprep.subr.bf16.mxu0 0
      %1496 = vmatpush1.bf16.msra.mxu0 %v1473
      %1497 = vmatprep.subr.bf16.mxu0 0
      %1498 = vmatpush1.bf16.msra.mxu0 %v1474
      %1499 = vmatprep.subr.bf16.mxu0 0
      %1500 = vmatpush1.bf16.msra.mxu0 0
      %1501 = vmatprep.subr.bf16.mxu0 0
      %1502 = vmatpush1.bf16.msra.mxu0 0
      %1503 = vmatprep.subr.bf16.mxu0 0
      %1504 = vmatpush1.bf16.msra.mxu0 0
      %1505 = vmatprep.subr.bf16.mxu0 0
      %1506 = vmatpush1.bf16.msra.mxu0 0
      %1507 = vmatprep.subr.bf16.mxu0 0
      %1508 = vmatpush1.bf16.msra.mxu0 0
      %1509 = vmatprep.subr.bf16.mxu0 0
      %1510 = vmatpush1.bf16.msra.mxu0 0
      %1511 = vmatprep.subr.bf16.mxu0 0
      %1512 = vmatpush1.bf16.msra.mxu0 0
      %1513 = vmatprep.subr.bf16.mxu0 0
      %1514 = vmatpush1.bf16.msra.mxu0 0
      %1515 = vmatprep.mubr.bf16.mxu0 0
      %1516 = vmatmul.mubr.bf16.gmra.mrb[0].mxu0 %v1402
      %v1517 = vpop.f32.mrb[0].mxu0
      %v1518 = vadd.f32 0.0, %v1517
      %v1519 = vpop.f32.mrb[0].mxu0
      %v1520 = vpop.f32.mrb[0].mxu0
      %v1521 = vadd.f32 0.0, %v1520
      %v1522 = vpop.f32.mrb[0].mxu0
      %1523 = vmatprep.mubr.bf16.mxu0 0
      %1524 = vmatmul.mubr.bf16.gmra.mrb[0].mxu0 %v1410
      %v1525 = vpop.f32.mrb[0].mxu0
      %v1526 = vadd.f32 0.0, %v1525
      %v1527 = vpop.f32.mrb[0].mxu0
      %v1528 = vpop.f32.mrb[0].mxu0
      %v1529 = vadd.f32 0.0, %v1528
      %v1530 = vpop.f32.mrb[0].mxu0
      %1531 = vmatprep.mubr.bf16.mxu0 0
      %1532 = vmatmul.mubr.bf16.gmra.mrb[0].mxu0 %v1418
      %v1533 = vpop.f32.mrb[0].mxu0
      %v1534 = vadd.f32 0.0, %v1533
      %v1535 = vpop.f32.mrb[0].mxu0
      %v1536 = vpop.f32.mrb[0].mxu0
      %v1537 = vadd.f32 0.0, %v1536
      %v1538 = vpop.f32.mrb[0].mxu0
      %1539 = vmatprep.mubr.bf16.mxu0 0
      %1540 = vmatmul.mubr.bf16.gmra.mrb[0].mxu0 %v1426
      %v1541 = vpop.f32.mrb[0].mxu0
      %v1542 = vadd.f32 0.0, %v1541
      %v1543 = vpop.f32.mrb[0].mxu0
      %v1544 = vpop.f32.mrb[0].mxu0
      %v1545 = vadd.f32 0.0, %v1544
      %v1546 = vpop.f32.mrb[0].mxu0
      %1547 = vmatprep.mubr.bf16.mxu0 0
      %1548 = vmatmul.mubr.bf16.gmra.mrb[0].mxu0 %v1429
      %v1549 = vpop.f32.mrb[0].mxu0
      %v1550 = vadd.f32 0.0, %v1549
      %v1551 = vpop.f32.mrb[0].mxu0
      %v1552 = vpop.f32.mrb[0].mxu0
      %v1553 = vpop.f32.mrb[0].mxu0
      %1554 = vdwg.mxu0
      %v1555 = vadd.f32 %v1330, %v1518
      %v1556 = vadd.f32 %v1331, %v1521
      %v1557 = vadd.f32 %v1332, %v1526
      %v1558 = vadd.f32 %v1333, %v1529
      %v1559 = vadd.f32 %v1334, %v1534
      %v1560 = vadd.f32 %v1335, %v1537
      %v1561 = vadd.f32 %v1336, %v1542
      %v1562 = vadd.f32 %v1337, %v1545
      %v1563 = vadd.f32 %v1338, %v1550
      %v1564 = vld [vmem:[%s197 + $0x4] sm:$0xf]
      %v1565 = vld [vmem:[%s197 + $0x8] sm:$0xf]
      %v1566 = vld [vmem:[%s197 + $0xc] sm:$0xf]
      %v1567 = vld [vmem:[%s197 + $0x10] sm:$0xf]
      %v1568 = vld [vmem:[%s197 + $0x14] sm:$0xf]
      %v1569 = vld [vmem:[%s197 + $0x18] sm:$0xf]
      %v1570 = vld [vmem:[%s197 + $0x1c] sm:$0xf]
      %v1571 = vld [vmem:[%s197 + $0x20] sm:$0xf]
      %v1572 = vld [vmem:[%s197 + $0x24] sm:$0xf]
      %v1573 = vld [vmem:[%s197 + $0x28] sm:$0x1]
      %s1574 = scalar_lea.vmem %s1, 448
      %v1575 = vld [vmem:[%s1574] sm:$0xf]
      %v1576 = vld [vmem:[%s1574 + $0x4] sm:$0xf]
      %v1577 = vld [vmem:[%s1574 + $0x8] sm:$0xf]
      %v1578 = vld [vmem:[%s1574 + $0xc] sm:$0xf]
      %v1579 = vld [vmem:[%s1574 + $0x10] sm:$0xf]
      %v1580 = vld [vmem:[%s1574 + $0x14] sm:$0xf]
      %v1581 = vld [vmem:[%s1574 + $0x18] sm:$0xf]
      %v1582 = vld [vmem:[%s1574 + $0x1c] sm:$0xf]
      %v1583 = vld [vmem:[%s1574 + $0x20] sm:$0xf]
      %v1584 = vld [vmem:[%s1574 + $0x24] sm:$0xf]
      %v1585 = vld [vmem:[%s1574 + $0x28] sm:$0xf]
      %v1586 = vld [vmem:[%s1574 + $0x2c] sm:$0xf]
      %v1587 = vld [vmem:[%s1574 + $0x30] sm:$0xf]
      %v1588 = vld [vmem:[%s1574 + $0x34] sm:$0xf]
      %v1589 = vld [vmem:[%s1574 + $0x38] sm:$0xf]
      %v1590 = vld [vmem:[%s1574 + $0x3c] sm:$0xf]
      %v1601 = vunpack.c.l.b16 %v1564
      %v1602 = vunpack.c.l.b16 %v1565
      %v1603 = vunpack.c.l.b16 %v1566
      %v1604 = vunpack.c.l.b16 %v1567
      %v1605 = vunpack.c.l.b16 %v1568
      %v1606 = vunpack.c.l.b16 %v1569
      %v1607 = vunpack.c.l.b16 %v1570
      %v1608 = vunpack.c.l.b16 %v1571
      %v1609 = vunpack.c.l.b16 %v1572
      %v1610 = vunpack.c.l.b16 %v1573
      %v1611 = vpack.c.b16 %v1602, %v1601
      %v1612 = vpack.c.b16 %v1604, %v1603
      %v1613 = vpack.c.b16 %v1606, %v1605
      %v1614 = vpack.c.b16 %v1608, %v1607
      %v1615 = vpack.c.b16 %v1610, %v1609
      %v1617 = vshrl.u32 %v1611, 16
      %v1619 = vshll.u32 %v1611, 16
      %v1621 = vrot.slane %v1619, 1
      %v1622 = vor.u32 %v1617, %v1621
      %v1624 = vshll.u32 %v1612, 16
      %v1626 = vrot.slane %v1624, 1
      %v1627 = vsel %vm572, %v1622, %v1626
      %v1628 = vshrl.u32 %v1612, 16
      %v1630 = vor.u32 %v1628, %v1626
      %v1632 = vshll.u32 %v1613, 16
      %v1634 = vrot.slane %v1632, 1
      %v1635 = vsel %vm572, %v1630, %v1634
      %v1636 = vshrl.u32 %v1613, 16
      %v1638 = vor.u32 %v1636, %v1634
      %v1640 = vshll.u32 %v1614, 16
      %v1642 = vrot.slane %v1640, 1
      %v1643 = vsel %vm572, %v1638, %v1642
      %v1644 = vshrl.u32 %v1614, 16
      %v1646 = vor.u32 %v1644, %v1642
      %v1648 = vshll.u32 %v1615, 16
      %v1650 = vrot.slane %v1648, 1
      %v1651 = vsel %vm572, %v1646, %v1650
      %v1652 = vshrl.u32 %v1615, 16
      %v1654 = vor.u32 %v1652, %v1650
      %v1676 = vunpack.c.l.b16 %v1575
      %v1677 = vunpack.c.l.b16 %v1576
      %v1678 = vunpack.c.l.b16 %v1577
      %v1679 = vunpack.c.l.b16 %v1578
      %v1680 = vunpack.c.l.b16 %v1579
      %v1681 = vunpack.c.l.b16 %v1580
      %v1682 = vunpack.c.l.b16 %v1581
      %v1683 = vunpack.c.l.b16 %v1582
      %v1684 = vunpack.c.l.b16 %v1583
      %v1685 = vunpack.c.l.b16 %v1584
      %v1686 = vunpack.c.l.b16 %v1585
      %v1687 = vunpack.c.l.b16 %v1586
      %v1688 = vunpack.c.l.b16 %v1587
      %v1689 = vunpack.c.l.b16 %v1588
      %v1690 = vunpack.c.l.b16 %v1589
      %v1691 = vunpack.c.l.b16 %v1590
      %v1692 = vpack.c.b16 %v1677, %v1676
      %v1693 = vpack.c.b16 %v1679, %v1678
      %v1694 = vpack.c.b16 %v1681, %v1680
      %v1695 = vpack.c.b16 %v1683, %v1682
      %v1696 = vpack.c.b16 %v1685, %v1684
      %v1697 = vpack.c.b16 %v1687, %v1686
      %v1698 = vpack.c.b16 %v1689, %v1688
      %v1699 = vpack.c.b16 %v1691, %v1690
      %1708 = vmatprep.subr.bf16.mxu0 0
      %1709 = vmatpush1.bf16.msra.mxu0 %v1692
      %1710 = vmatprep.subr.bf16.mxu0 0
      %1711 = vmatpush1.bf16.msra.mxu0 %v1693
      %1712 = vmatprep.subr.bf16.mxu0 0
      %1713 = vmatpush1.bf16.msra.mxu0 %v1694
      %1714 = vmatprep.subr.bf16.mxu0 0
      %1715 = vmatpush1.bf16.msra.mxu0 %v1695
      %1716 = vmatprep.subr.bf16.mxu0 0
      %1717 = vmatpush1.bf16.msra.mxu0 %v1696
      %1718 = vmatprep.subr.bf16.mxu0 0
      %1719 = vmatpush1.bf16.msra.mxu0 %v1697
      %1720 = vmatprep.subr.bf16.mxu0 0
      %1721 = vmatpush1.bf16.msra.mxu0 %v1698
      %1722 = vmatprep.subr.bf16.mxu0 0
      %1723 = vmatpush1.bf16.msra.mxu0 %v1699
      %1724 = vmatprep.subr.bf16.mxu0 0
      %1725 = vmatpush1.bf16.msra.mxu0 0
      %1726 = vmatprep.subr.bf16.mxu0 0
      %1727 = vmatpush1.bf16.msra.mxu0 0
      %1728 = vmatprep.subr.bf16.mxu0 0
      %1729 = vmatpush1.bf16.msra.mxu0 0
      %1730 = vmatprep.subr.bf16.mxu0 0
      %1731 = vmatpush1.bf16.msra.mxu0 0
      %1732 = vmatprep.subr.bf16.mxu0 0
      %1733 = vmatpush1.bf16.msra.mxu0 0
      %1734 = vmatprep.subr.bf16.mxu0 0
      %1735 = vmatpush1.bf16.msra.mxu0 0
      %1736 = vmatprep.subr.bf16.mxu0 0
      %1737 = vmatpush1.bf16.msra.mxu0 0
      %1738 = vmatprep.subr.bf16.mxu0 0
      %1739 = vmatpush1.bf16.msra.mxu0 0
      %1740 = vmatprep.mubr.bf16.mxu0 0
      %1741 = vmatmul.mubr.bf16.gmra.mrb[0].mxu0 %v1627
      %v1742 = vpop.f32.mrb[0].mxu0
      %v1743 = vadd.f32 0.0, %v1742
      %v1744 = vpop.f32.mrb[0].mxu0
      %v1745 = vpop.f32.mrb[0].mxu0
      %v1746 = vadd.f32 0.0, %v1745
      %v1747 = vpop.f32.mrb[0].mxu0
      %1748 = vmatprep.mubr.bf16.mxu0 0
      %1749 = vmatmul.mubr.bf16.gmra.mrb[0].mxu0 %v1635
      %v1750 = vpop.f32.mrb[0].mxu0
      %v1751 = vadd.f32 0.0, %v1750
      %v1752 = vpop.f32.mrb[0].mxu0
      %v1753 = vpop.f32.mrb[0].mxu0
      %v1754 = vadd.f32 0.0, %v1753
      %v1755 = vpop.f32.mrb[0].mxu0
      %1756 = vmatprep.mubr.bf16.mxu0 0
      %1757 = vmatmul.mubr.bf16.gmra.mrb[0].mxu0 %v1643
      %v1758 = vpop.f32.mrb[0].mxu0
      %v1759 = vadd.f32 0.0, %v1758
      %v1760 = vpop.f32.mrb[0].mxu0
      %v1761 = vpop.f32.mrb[0].mxu0
      %v1762 = vadd.f32 0.0, %v1761
      %v1763 = vpop.f32.mrb[0].mxu0
      %1764 = vmatprep.mubr.bf16.mxu0 0
      %1765 = vmatmul.mubr.bf16.gmra.mrb[0].mxu0 %v1651
      %v1766 = vpop.f32.mrb[0].mxu0
      %v1767 = vadd.f32 0.0, %v1766
      %v1768 = vpop.f32.mrb[0].mxu0
      %v1769 = vpop.f32.mrb[0].mxu0
      %v1770 = vadd.f32 0.0, %v1769
      %v1771 = vpop.f32.mrb[0].mxu0
      %1772 = vmatprep.mubr.bf16.mxu0 0
      %1773 = vmatmul.mubr.bf16.gmra.mrb[0].mxu0 %v1654
      %v1774 = vpop.f32.mrb[0].mxu0
      %v1775 = vadd.f32 0.0, %v1774
      %v1776 = vpop.f32.mrb[0].mxu0
      %v1777 = vpop.f32.mrb[0].mxu0
      %v1778 = vpop.f32.mrb[0].mxu0
      %1779 = vdwg.mxu0
      %v1780 = vadd.f32 %v1555, %v1743
      %v1781 = vadd.f32 %v1556, %v1746
      %v1782 = vadd.f32 %v1557, %v1751
      %v1783 = vadd.f32 %v1558, %v1754
      %v1784 = vadd.f32 %v1559, %v1759
      %v1785 = vadd.f32 %v1560, %v1762
      %v1786 = vadd.f32 %v1561, %v1767
      %v1787 = vadd.f32 %v1562, %v1770
      %v1788 = vadd.f32 %v1563, %v1775
      %v1789 = vld [vmem:[%s165 + $0x4] sm:$0xe]
      %s1790 = scalar_lea.vmem %s1, 512
      %v1791 = vld [vmem:[%s1790] sm:$0xf]
      %v1792 = vld [vmem:[%s1790 + $0x4] sm:$0xf]
      %v1793 = vld [vmem:[%s1790 + $0x8] sm:$0xf]
      %v1794 = vld [vmem:[%s1790 + $0xc] sm:$0xf]
      %v1795 = vld [vmem:[%s1790 + $0x10] sm:$0xf]
      %v1796 = vld [vmem:[%s1790 + $0x14] sm:$0xf]
      %v1797 = vld [vmem:[%s1790 + $0x18] sm:$0xf]
      %v1798 = vld [vmem:[%s1790 + $0x1c] sm:$0xf]
      %v1799 = vld [vmem:[%s1790 + $0x20] sm:$0xf]
      %v1800 = vld [vmem:[%s1790 + $0x24] sm:$0xf]
      %v1801 = vld [vmem:[%s1790 + $0x28] sm:$0xf]
      %v1802 = vld [vmem:[%s1790 + $0x2c] sm:$0xf]
      %v1803 = vld [vmem:[%s1790 + $0x30] sm:$0xf]
      %v1804 = vld [vmem:[%s1790 + $0x34] sm:$0xf]
      %v1805 = vld [vmem:[%s1790 + $0x38] sm:$0xf]
      %v1806 = vld [vmem:[%s1790 + $0x3c] sm:$0xf]
      %v1808 = vunpack.c.l.b16 %v1789
      %v1809 = vpack.c.b16 %v1377, %v1808
      %vm1810 = vcmask 1046528
      %v1811 = vrot.slane %v1809, 1
      %v1812 = vrot.slane %v1387, 1
      %v1813 = vsel %vm1810, %v1811, %v1812
      %v1814 = vrot.slane %v1388, 1
      %v1815 = vsel %vm1810, %v1812, %v1814
      %v1816 = vrot.slane %v1389, 1
      %v1817 = vsel %vm1810, %v1814, %v1816
      %v1818 = vrot.slane %v1390, 1
      %v1819 = vsel %vm1810, %v1816, %v1818
      %v1841 = vunpack.c.l.b16 %v1791
      %v1842 = vunpack.c.l.b16 %v1792
      %v1843 = vunpack.c.l.b16 %v1793
      %v1844 = vunpack.c.l.b16 %v1794
      %v1845 = vunpack.c.l.b16 %v1795
      %v1846 = vunpack.c.l.b16 %v1796
      %v1847 = vunpack.c.l.b16 %v1797
      %v1848 = vunpack.c.l.b16 %v1798
      %v1849 = vunpack.c.l.b16 %v1799
      %v1850 = vunpack.c.l.b16 %v1800
      %v1851 = vunpack.c.l.b16 %v1801
      %v1852 = vunpack.c.l.b16 %v1802
      %v1853 = vunpack.c.l.b16 %v1803
      %v1854 = vunpack.c.l.b16 %v1804
      %v1855 = vunpack.c.l.b16 %v1805
      %v1856 = vunpack.c.l.b16 %v1806
      %v1857 = vpack.c.b16 %v1842, %v1841
      %v1858 = vpack.c.b16 %v1844, %v1843
      %v1859 = vpack.c.b16 %v1846, %v1845
      %v1860 = vpack.c.b16 %v1848, %v1847
      %v1861 = vpack.c.b16 %v1850, %v1849
      %v1862 = vpack.c.b16 %v1852, %v1851
      %v1863 = vpack.c.b16 %v1854, %v1853
      %v1864 = vpack.c.b16 %v1856, %v1855
      %1873 = vmatprep.subr.bf16.mxu0 0
      %1874 = vmatpush1.bf16.msra.mxu0 %v1857
      %1875 = vmatprep.subr.bf16.mxu0 0
      %1876 = vmatpush1.bf16.msra.mxu0 %v1858
      %1877 = vmatprep.subr.bf16.mxu0 0
      %1878 = vmatpush1.bf16.msra.mxu0 %v1859
      %1879 = vmatprep.subr.bf16.mxu0 0
      %1880 = vmatpush1.bf16.msra.mxu0 %v1860
      %1881 = vmatprep.subr.bf16.mxu0 0
      %1882 = vmatpush1.bf16.msra.mxu0 %v1861
      %1883 = vmatprep.subr.bf16.mxu0 0
      %1884 = vmatpush1.bf16.msra.mxu0 %v1862
      %1885 = vmatprep.subr.bf16.mxu0 0
      %1886 = vmatpush1.bf16.msra.mxu0 %v1863
      %1887 = vmatprep.subr.bf16.mxu0 0
      %1888 = vmatpush1.bf16.msra.mxu0 %v1864
      %1889 = vmatprep.subr.bf16.mxu0 0
      %1890 = vmatpush1.bf16.msra.mxu0 0
      %1891 = vmatprep.subr.bf16.mxu0 0
      %1892 = vmatpush1.bf16.msra.mxu0 0
      %1893 = vmatprep.subr.bf16.mxu0 0
      %1894 = vmatpush1.bf16.msra.mxu0 0
      %1895 = vmatprep.subr.bf16.mxu0 0
      %1896 = vmatpush1.bf16.msra.mxu0 0
      %1897 = vmatprep.subr.bf16.mxu0 0
      %1898 = vmatpush1.bf16.msra.mxu0 0
      %1899 = vmatprep.subr.bf16.mxu0 0
      %1900 = vmatpush1.bf16.msra.mxu0 0
      %1901 = vmatprep.subr.bf16.mxu0 0
      %1902 = vmatpush1.bf16.msra.mxu0 0
      %1903 = vmatprep.subr.bf16.mxu0 0
      %1904 = vmatpush1.bf16.msra.mxu0 0
      %1905 = vmatprep.mubr.bf16.mxu0 0
      %1906 = vmatmul.mubr.bf16.gmra.mrb[0].mxu0 %v1813
      %v1907 = vpop.f32.mrb[0].mxu0
      %v1908 = vadd.f32 0.0, %v1907
      %v1909 = vpop.f32.mrb[0].mxu0
      %v1910 = vpop.f32.mrb[0].mxu0
      %v1911 = vadd.f32 0.0, %v1910
      %v1912 = vpop.f32.mrb[0].mxu0
      %1913 = vmatprep.mubr.bf16.mxu0 0
      %1914 = vmatmul.mubr.bf16.gmra.mrb[0].mxu0 %v1815
      %v1915 = vpop.f32.mrb[0].mxu0
      %v1916 = vadd.f32 0.0, %v1915
      %v1917 = vpop.f32.mrb[0].mxu0
      %v1918 = vpop.f32.mrb[0].mxu0
      %v1919 = vadd.f32 0.0, %v1918
      %v1920 = vpop.f32.mrb[0].mxu0
      %1921 = vmatprep.mubr.bf16.mxu0 0
      %1922 = vmatmul.mubr.bf16.gmra.mrb[0].mxu0 %v1817
      %v1923 = vpop.f32.mrb[0].mxu0
      %v1924 = vadd.f32 0.0, %v1923
      %v1925 = vpop.f32.mrb[0].mxu0
      %v1926 = vpop.f32.mrb[0].mxu0
      %v1927 = vadd.f32 0.0, %v1926
      %v1928 = vpop.f32.mrb[0].mxu0
      %1929 = vmatprep.mubr.bf16.mxu0 0
      %1930 = vmatmul.mubr.bf16.gmra.mrb[0].mxu0 %v1819
      %v1931 = vpop.f32.mrb[0].mxu0
      %v1932 = vadd.f32 0.0, %v1931
      %v1933 = vpop.f32.mrb[0].mxu0
      %v1934 = vpop.f32.mrb[0].mxu0
      %v1935 = vadd.f32 0.0, %v1934
      %v1936 = vpop.f32.mrb[0].mxu0
      %1937 = vmatprep.mubr.bf16.mxu0 0
      %1938 = vmatmul.mubr.bf16.gmra.mrb[0].mxu0 %v1818
      %v1939 = vpop.f32.mrb[0].mxu0
      %v1940 = vadd.f32 0.0, %v1939
      %v1941 = vpop.f32.mrb[0].mxu0
      %v1942 = vpop.f32.mrb[0].mxu0
      %v1943 = vpop.f32.mrb[0].mxu0
      %1944 = vdwg.mxu0
      %v1945 = vadd.f32 %v1780, %v1908
      %v1946 = vadd.f32 %v1781, %v1911
      %v1947 = vadd.f32 %v1782, %v1916
      %v1948 = vadd.f32 %v1783, %v1919
      %v1949 = vadd.f32 %v1784, %v1924
      %v1950 = vadd.f32 %v1785, %v1927
      %v1951 = vadd.f32 %v1786, %v1932
      %v1952 = vadd.f32 %v1787, %v1935
      %v1953 = vadd.f32 %v1788, %v1940
      %v1954 = vld [vmem:[%s2] sm:$0x1]
      %v1956 = vlaneseq
      %v1957 = vshrl.u32 %v1956, 7
      %v1958 = vsub.s32 0, %v1957
      %v1959 = vrot.slane %v1954, %v1958
      %v1961 = vadd.f32 %v1945, %v1959
      %v1962 = vadd.f32 %v1946, %v1959
      %v1963 = vadd.f32 %v1947, %v1959
      %v1964 = vadd.f32 %v1948, %v1959
      %v1965 = vadd.f32 %v1949, %v1959
      %v1966 = vadd.f32 %v1950, %v1959
      %v1967 = vadd.f32 %v1951, %v1959
      %v1968 = vadd.f32 %v1952, %v1959
      %v1969 = vadd.f32 %v1953, %v1959
      %v1970 = vmax.f32 %v1961, 0.0
      %v1971 = vmax.f32 %v1962, 0.0
      %v1972 = vmax.f32 %v1963, 0.0
      %v1973 = vmax.f32 %v1964, 0.0
      %v1974 = vmax.f32 %v1965, 0.0
      %v1975 = vmax.f32 %v1966, 0.0
      %v1976 = vmax.f32 %v1967, 0.0
      %v1977 = vmax.f32 %v1968, 0.0
      %v1978 = vmax.f32 %v1969, 0.0
      %v1979 = vpack.c.bf16 %v1971, %v1970
      %v1980 = vpack.c.bf16 %v1973, %v1972
      %v1981 = vpack.c.bf16 %v1975, %v1974
      %v1982 = vpack.c.bf16 %v1977, %v1976
      %v1983 = vpack.c.bf16 %v1978, %v1978
      %v1989 = vunpack.c.l.b16 %v1979
      %v1990 = vunpack.c.h.b16 %v1979
      %v1991 = vunpack.c.l.b16 %v1980
      %v1992 = vunpack.c.h.b16 %v1980
      %v1993 = vunpack.c.l.b16 %v1981
      %v1994 = vunpack.c.h.b16 %v1981
      %v1995 = vunpack.c.l.b16 %v1982
      %v1996 = vunpack.c.h.b16 %v1982
      %v1997 = vunpack.c.l.b16 %v1983
      %v1998 = vpack.c.b16 %v1989, %v1989
      %v1999 = vpack.c.b16 %v1990, %v1990
      %v2000 = vpack.c.b16 %v1991, %v1991
      %v2001 = vpack.c.b16 %v1992, %v1992
      %v2002 = vpack.c.b16 %v1993, %v1993
      %v2003 = vpack.c.b16 %v1994, %v1994
      %v2004 = vpack.c.b16 %v1995, %v1995
      %v2005 = vpack.c.b16 %v1996, %v1996
      %v2006 = vpack.c.b16 %v1997, %v1997
      %2016 = vst [vmem:[%s170] sm:$0xf] %v1998
      %2017 = vst [vmem:[%s170 + $0x4] sm:$0xf] %v1999
      %2018 = vst [vmem:[%s170 + $0x8] sm:$0xf] %v2000
      %2019 = vst [vmem:[%s170 + $0xc] sm:$0xf] %v2001
      %2020 = vst [vmem:[%s170 + $0x10] sm:$0xf] %v2002
      %2021 = vst [vmem:[%s170 + $0x14] sm:$0xf] %v2003
      %2022 = vst [vmem:[%s170 + $0x18] sm:$0xf] %v2004
      %2023 = vst [vmem:[%s170 + $0x1c] sm:$0xf] %v2005
      %2024 = vst [vmem:[%s170 + $0x20] sm:$0xf] %v2006
      %p2025 = scmp.lt.s32.totalorder %s14, 1
      %s2026 = scalar_select %p2025, %s14, 1
      %s2027 = smul.addr %s2026, 9
      %s2028 = smul.addr %s2027, 4
      %s2029 = scalar_lea.vmem %s3, %s2028
      // Predicated region
      $region33: #{basic_block_forward.2} parent=31 // pred_check
        %p2030 = pneg %p100
      $region34: #{basic_block_forward.2} parent=31 // pred_check_branch
        %2032 = sbr.rel (%p2030) target = $region36
      $region35: #{basic_block_forward.2} parent=31 // pred_region
        _
      $region36: #{basic_block_forward.2} parent=31 // pred_fallthru
        _
    $region32: #{basic_block_forward.2} parent=5 // pred_fallthru
      _
    %p2033 = scmp.le.s32.totalorder 2, %s9
    // Predicated region
    $region37: #{basic_block_forward.2} parent=5 // pred_check
      %p2034 = pneg %p2033
    $region38: #{basic_block_forward.2} parent=5 // pred_check_branch
      %2036 = sbr.rel (%p2034) target = $region40
    $region39: #{basic_block_forward.2} parent=5 // pred_region
      %s2037 = ssub.s32 %s9, 2
      // Predicated region
      $region41: #{basic_block_forward.2} parent=39 // pred_check
        %p2038 = pneg %p106
      $region42: #{basic_block_forward.2} parent=39 // pred_check_branch
        %2040 = sbr.rel (%p2038) target = $region44
      $region43: #{basic_block_forward.2} parent=39 // pred_region
        %p2041 = scmp.lt.s32.totalorder %s15, 1
        %s2042 = scalar_select %p2041, %s15, 1
        %s2043 = smul.addr %s2042, 9
        %s2044 = smul.addr %s2043, 4
        %s2045 = scalar_lea.vmem %s3, %s2044
      $region44: #{basic_block_forward.2} parent=39 // pred_fallthru
        _
    $region40: #{basic_block_forward.2} parent=5 // pred_fallthru
      _
  $region6: #{basic_block_forward.2} parent=0 // loop_footer
    %s13 = sadd.s32 1, %s9
  $region7: #{basic_block_forward.2} parent=0 // loop_footer_branch
    %8 = sbr.rel target = $region3
  $region8: #{basic_block_forward.2} parent=0 // loop_exit
    _

// kernel: basic_block_forward.3
$region0: #{basic_block_forward.3}
  #allocation0 [shape = 'u32[]', space=smem, size = 0x4, offset = 0x4, fixed_abs, tag = 'smem constant byte address 0x4 - core index']
  #allocation1 [shape = 'u32[144,128]{1,0:T(1,128)}', space=vmem, size = 0x12000, scoped, tag = 'internal scratch']
  %s0 = inlined_call_operand.vmem [shape: bf16[2,102,128], index: 0, kind: input, shape index: {}]
  %s1 = inlined_call_operand.vmem [shape: bf16[2,80,128], index: 1, kind: input, shape index: {}]
  %s2 = inlined_call_operand.vmem [shape: bf16[9,128,128], index: 2, kind: input, shape index: {}]
  %s3 = inlined_call_operand.vmem [shape: f32[1,128], index: 3, kind: input, shape index: {}]
  %s4 = inlined_call_operand.vmem [shape: bf16[128,128], index: 4, kind: input, shape index: {}]
  %s5 = inlined_call_operand.vmem [shape: bf16[128,128], index: 5, kind: input, shape index: {}]
  %s6 = inlined_call_operand.vmem [shape: f32[1,128], index: 6, kind: input, shape index: {}]
  %s7 = inlined_call_operand.vmem [shape: f32[2,80,128], index: 7, kind: output, shape index: {}]
  %s8 = sld [smem:[#allocation0]]
  $region61: #{basic_block_forward.3} parent=0
    _
  %s10 = ssub.s32 1, %s8
  %s11 = scalar_select 0, %s10, %s8
  loop: start=0, step=1, limit=4
  $region2: #{basic_block_forward.3} parent=0 // loop_pre_header
    _
  $region3: #{basic_block_forward.3} parent=0 // loop_header
    %s13 = sphi 0, %s17
    %p14 = scmp.ge.s32.totalorder %s13, 4
    %s23 = sphi 0, %s25
    %s26 = sphi 0, %s23
    %s27 = sphi 0, %s26
    %s43 = sphi 0, %s27
    %s49 = sphi 0, %s51
    %s52 = sphi 0, %s49
    %s53 = sphi 0, %s52
    %s69 = sphi 0, %s53
    %s73 = sphi 0, %s73
    %s75 = sphi 0, %s73
    %s76 = sphi 0, %s75
    %s90 = sphi 0, %s76
    %s94 = sphi 0, %s94
    %s96 = sphi 0, %s94
    %s97 = sphi 0, %s96
    %s111 = sphi 0, %s97
    %s115 = sphi 0, %s115
    %s117 = sphi 0, %s115
    %s118 = sphi 0, %s117
    %s132 = sphi 0, %s118
    %s136 = sphi 0, %s136
    %s138 = sphi 0, %s136
    %s139 = sphi 0, %s138
    %s153 = sphi 0, %s139
    %s157 = sphi 0, %s157
    %s159 = sphi 0, %s157
    %s160 = sphi 0, %s159
    %s174 = sphi 0, %s160
    %s180 = sphi 0, %s182
    %s183 = sphi 0, %s180
    %s184 = sphi 0, %s183
    %s200 = sphi 0, %s184
  $region4: #{basic_block_forward.3} parent=0 // loop_header_branch
    %16 = sbr.rel (%p14) target = $region8
  $region5: #{basic_block_forward.3} parent=0 // loop_body
    %s18 = ssub.s32 %s13, 1
    %s19 = ssub.s32 %s13, 2
    %s20 = sadd.s32 %s13, 1
    %s21 = ssub.s32 %s13, %s20
    %p22 = scmp.eq.s32.totalorder %s21, 0
    %s24 = sadd.s32 %s23, 1
    %s25 = scalar_select %p22, %s23, %s24
    %p28 = pneg %p22
    %p29 = scmp.eq.s32.totalorder %s13, 1
    %p30 = por %p28, %p29
    %p31 = scmp.ne.s32.totalorder %s23, %s26
    %p32 = scmp.eq.s32.totalorder %s13, 0
    %p33 = por %p31, %p32
    %p34 = scmp.ne.s32.totalorder %s23, %s26
    %p35 = scmp.eq.s32.totalorder %s18, 1
    %p36 = por %p34, %p35
    %p37 = scmp.ne.s32.totalorder %s26, %s27
    %p38 = scmp.eq.s32.totalorder %s18, 0
    %p39 = por %p37, %p38
    %p40 = scmp.ne.s32.totalorder %s26, %s27
    %p41 = scmp.eq.s32.totalorder %s19, 1
    %p42 = por %p40, %p41
    %p44 = scmp.ne.s32.totalorder %s27, %s43
    %p45 = scmp.eq.s32.totalorder %s19, 0
    %p46 = por %p44, %p45
    %s47 = ssub.s32 %s13, %s20
    %p48 = scmp.eq.s32.totalorder %s47, 0
    %s50 = sadd.s32 %s49, 1
    %s51 = scalar_select %p48, %s49, %s50
    %p54 = pneg %p48
    %p55 = scmp.eq.s32.totalorder %s13, 1
    %p56 = por %p54, %p55
    %p57 = scmp.ne.s32.totalorder %s49, %s52
    %p58 = scmp.eq.s32.totalorder %s13, 0
    %p59 = por %p57, %p58
    %p60 = scmp.ne.s32.totalorder %s49, %s52
    %p61 = scmp.eq.s32.totalorder %s18, 1
    %p62 = por %p60, %p61
    %p63 = scmp.ne.s32.totalorder %s52, %s53
    %p64 = scmp.eq.s32.totalorder %s18, 0
    %p65 = por %p63, %p64
    %p66 = scmp.ne.s32.totalorder %s52, %s53
    %p67 = scmp.eq.s32.totalorder %s19, 1
    %p68 = por %p66, %p67
    %p70 = scmp.ne.s32.totalorder %s53, %s69
    %p71 = scmp.eq.s32.totalorder %s19, 0
    %p72 = por %p70, %p71
    %s74 = sadd.s32 %s73, 1
    %p77 = scmp.eq.s32.totalorder %s13, 1
    %p78 = scmp.ne.s32.totalorder %s73, %s75
    %p79 = scmp.eq.s32.totalorder %s13, 0
    %p80 = por %p78, %p79
    %p81 = scmp.ne.s32.totalorder %s73, %s75
    %p82 = scmp.eq.s32.totalorder %s18, 1
    %p83 = por %p81, %p82
    %p84 = scmp.ne.s32.totalorder %s75, %s76
    %p85 = scmp.eq.s32.totalorder %s18, 0
    %p86 = por %p84, %p85
    %p87 = scmp.ne.s32.totalorder %s75, %s76
    %p88 = scmp.eq.s32.totalorder %s19, 1
    %p89 = por %p87, %p88
    %p91 = scmp.ne.s32.totalorder %s76, %s90
    %p92 = scmp.eq.s32.totalorder %s19, 0
    %p93 = por %p91, %p92
    %s95 = sadd.s32 %s94, 1
    %p98 = scmp.eq.s32.totalorder %s13, 1
    %p99 = scmp.ne.s32.totalorder %s94, %s96
    %p100 = scmp.eq.s32.totalorder %s13, 0
    %p101 = por %p99, %p100
    %p102 = scmp.ne.s32.totalorder %s94, %s96
    %p103 = scmp.eq.s32.totalorder %s18, 1
    %p104 = por %p102, %p103
    %p105 = scmp.ne.s32.totalorder %s96, %s97
    %p106 = scmp.eq.s32.totalorder %s18, 0
    %p107 = por %p105, %p106
    %p108 = scmp.ne.s32.totalorder %s96, %s97
    %p109 = scmp.eq.s32.totalorder %s19, 1
    %p110 = por %p108, %p109
    %p112 = scmp.ne.s32.totalorder %s97, %s111
    %p113 = scmp.eq.s32.totalorder %s19, 0
    %p114 = por %p112, %p113
    %s116 = sadd.s32 %s115, 1
    %p119 = scmp.eq.s32.totalorder %s13, 1
    %p120 = scmp.ne.s32.totalorder %s115, %s117
    %p121 = scmp.eq.s32.totalorder %s13, 0
    %p122 = por %p120, %p121
    %p123 = scmp.ne.s32.totalorder %s115, %s117
    %p124 = scmp.eq.s32.totalorder %s18, 1
    %p125 = por %p123, %p124
    %p126 = scmp.ne.s32.totalorder %s117, %s118
    %p127 = scmp.eq.s32.totalorder %s18, 0
    %p128 = por %p126, %p127
    %p129 = scmp.ne.s32.totalorder %s117, %s118
    %p130 = scmp.eq.s32.totalorder %s19, 1
    %p131 = por %p129, %p130
    %p133 = scmp.ne.s32.totalorder %s118, %s132
    %p134 = scmp.eq.s32.totalorder %s19, 0
    %p135 = por %p133, %p134
    %s137 = sadd.s32 %s136, 1
    %p140 = scmp.eq.s32.totalorder %s13, 1
    %p141 = scmp.ne.s32.totalorder %s136, %s138
    %p142 = scmp.eq.s32.totalorder %s13, 0
    %p143 = por %p141, %p142
    %p144 = scmp.ne.s32.totalorder %s136, %s138
    %p145 = scmp.eq.s32.totalorder %s18, 1
    %p146 = por %p144, %p145
    %p147 = scmp.ne.s32.totalorder %s138, %s139
    %p148 = scmp.eq.s32.totalorder %s18, 0
    %p149 = por %p147, %p148
    %p150 = scmp.ne.s32.totalorder %s138, %s139
    %p151 = scmp.eq.s32.totalorder %s19, 1
    %p152 = por %p150, %p151
    %p154 = scmp.ne.s32.totalorder %s139, %s153
    %p155 = scmp.eq.s32.totalorder %s19, 0
    %p156 = por %p154, %p155
    %s158 = sadd.s32 %s157, 1
    %p161 = scmp.eq.s32.totalorder %s13, 1
    %p162 = scmp.ne.s32.totalorder %s157, %s159
    %p163 = scmp.eq.s32.totalorder %s13, 0
    %p164 = por %p162, %p163
    %p165 = scmp.ne.s32.totalorder %s157, %s159
    %p166 = scmp.eq.s32.totalorder %s18, 1
    %p167 = por %p165, %p166
    %p168 = scmp.ne.s32.totalorder %s159, %s160
    %p169 = scmp.eq.s32.totalorder %s18, 0
    %p170 = por %p168, %p169
    %p171 = scmp.ne.s32.totalorder %s159, %s160
    %p172 = scmp.eq.s32.totalorder %s19, 1
    %p173 = por %p171, %p172
    %p175 = scmp.ne.s32.totalorder %s160, %s174
    %p176 = scmp.eq.s32.totalorder %s19, 0
    %p177 = por %p175, %p176
    %s178 = ssub.s32 %s13, %s20
    %p179 = scmp.eq.s32.totalorder %s178, 0
    %s181 = sadd.s32 %s180, 1
    %s182 = scalar_select %p179, %s180, %s181
    %p185 = pneg %p179
    %p186 = scmp.eq.s32.totalorder %s13, 1
    %p187 = por %p185, %p186
    %p188 = scmp.ne.s32.totalorder %s180, %s183
    %p189 = scmp.eq.s32.totalorder %s13, 0
    %p190 = por %p188, %p189
    %p191 = scmp.ne.s32.totalorder %s180, %s183
    %p192 = scmp.eq.s32.totalorder %s18, 1
    %p193 = por %p191, %p192
    %p194 = scmp.ne.s32.totalorder %s183, %s184
    %p195 = scmp.eq.s32.totalorder %s18, 0
    %p196 = por %p194, %p195
    %p197 = scmp.ne.s32.totalorder %s183, %s184
    %p198 = scmp.eq.s32.totalorder %s19, 1
    %p199 = por %p197, %p198
    %p201 = scmp.ne.s32.totalorder %s184, %s200
    %p202 = scmp.eq.s32.totalorder %s19, 0
    %p203 = por %p201, %p202
    %p204 = scmp.le.s32.totalorder 1, %s13
    %p205 = scmp.lt.s32.totalorder %s13, 3
    %p206 = pnand %p204, %p205
    %p207 = pneg %p206
    // Predicated region
    $region9: #{basic_block_forward.3} parent=5 // pred_check
      _
    $region10: #{basic_block_forward.3} parent=5 // pred_check_branch
      %209 = sbr.rel (%p206) target = $region12
    $region11: #{basic_block_forward.3} parent=5 // pred_region
      %s210 = ssub.s32 %s13, 1
      // Predicated region
      $region13: #{basic_block_forward.3} parent=11 // pred_check
        %p211 = pneg %p86
      $region14: #{basic_block_forward.3} parent=11 // pred_check_branch
        %213 = sbr.rel (%p211) target = $region16
      $region15: #{basic_block_forward.3} parent=11 // pred_region
        _
      $region16: #{basic_block_forward.3} parent=11 // pred_fallthru
        _
      // Predicated region
      $region17: #{basic_block_forward.3} parent=11 // pred_check
        %p214 = pneg %p107
      $region18: #{basic_block_forward.3} parent=11 // pred_check_branch
        %216 = sbr.rel (%p214) target = $region20
      $region19: #{basic_block_forward.3} parent=11 // pred_region
        _
      $region20: #{basic_block_forward.3} parent=11 // pred_fallthru
        _
      // Predicated region
      $region21: #{basic_block_forward.3} parent=11 // pred_check
        %p217 = pneg %p128
      $region22: #{basic_block_forward.3} parent=11 // pred_check_branch
        %219 = sbr.rel (%p217) target = $region24
      $region23: #{basic_block_forward.3} parent=11 // pred_region
        _
      $region24: #{basic_block_forward.3} parent=11 // pred_fallthru
        _
      // Predicated region
      $region25: #{basic_block_forward.3} parent=11 // pred_check
        %p220 = pneg %p149
      $region26: #{basic_block_forward.3} parent=11 // pred_check_branch
        %222 = sbr.rel (%p220) target = $region28
      $region27: #{basic_block_forward.3} parent=11 // pred_region
        _
      $region28: #{basic_block_forward.3} parent=11 // pred_fallthru
        _
      // Predicated region
      $region29: #{basic_block_forward.3} parent=11 // pred_check
        %p223 = pneg %p170
      $region30: #{basic_block_forward.3} parent=11 // pred_check_branch
        %225 = sbr.rel (%p223) target = $region32
      $region31: #{basic_block_forward.3} parent=11 // pred_region
        _
      $region32: #{basic_block_forward.3} parent=11 // pred_fallthru
        _
    $region12: #{basic_block_forward.3} parent=5 // pred_fallthru
      _
    %p226 = scmp.lt.s32.totalorder %s13, 2
    // Predicated region
    $region33: #{basic_block_forward.3} parent=5 // pred_check
      %p227 = pneg %p226
    $region34: #{basic_block_forward.3} parent=5 // pred_check_branch
      %229 = sbr.rel (%p227) target = $region36
    $region35: #{basic_block_forward.3} parent=5 // pred_region
      // Predicated region
      $region37: #{basic_block_forward.3} parent=35 // pred_check
        %p230 = pneg %p33
      $region38: #{basic_block_forward.3} parent=35 // pred_check_branch
        %232 = sbr.rel (%p230) target = $region40
      $region39: #{basic_block_forward.3} parent=35 // pred_region
        %p233 = scmp.lt.s32.totalorder %s13, 1
        %s234 = scalar_select %p233, %s13, 1
        %s235 = smul.addr %s234, 13
        %s236 = smul.addr %s235, 4
        %s237 = scalar_lea.vmem %s0, %s236
      $region40: #{basic_block_forward.3} parent=35 // pred_fallthru
        _
      // Predicated region
      $region41: #{basic_block_forward.3} parent=35 // pred_check
        %p238 = pneg %p59
      $region42: #{basic_block_forward.3} parent=35 // pred_check_branch
        %240 = sbr.rel (%p238) target = $region44
      $region43: #{basic_block_forward.3} parent=35 // pred_region
        %p241 = scmp.lt.s32.totalorder %s13, 1
        %s242 = scalar_select %p241, %s13, 1
        %s243 = smul.addr %s242, 10
        %s244 = smul.addr %s243, 4
        %s245 = scalar_lea.vmem %s1, %s244
      $region44: #{basic_block_forward.3} parent=35 // pred_fallthru
        _
    $region36: #{basic_block_forward.3} parent=5 // pred_fallthru
      _
    %p246 = scmp.le.s32.totalorder 1, %s13
    %p247 = scmp.lt.s32.totalorder %s13, 3
    %p248 = pnand %p246, %p247
    %p249 = pneg %p248
    // Predicated region
    $region45: #{basic_block_forward.3} parent=5 // pred_check
      _
    $region46: #{basic_block_forward.3} parent=5 // pred_check_branch
      %251 = sbr.rel (%p248) target = $region48
    $region47: #{basic_block_forward.3} parent=5 // pred_region
      %s252 = ssub.s32 %s13, 1
      %p253 = scmp.lt.s32.totalorder %s18, 1
      %s254 = scalar_select %p253, %s18, 1
      %s255 = smul.addr %s254, 13
      %s256 = smul.addr %s255, 4
      %s257 = scalar_lea.vmem %s0, %s256
      %p258 = pneg %p39
      %p259 = pneg %p36
      %p260 = scmp.lt.s32.totalorder %s18, 1
      %s261 = scalar_select %p260, %s18, 1
      %s262 = smul.addr %s261, 10
      %s263 = smul.addr %s262, 4
      %s264 = scalar_lea.vmem %s1, %s263
      %p265 = pneg %p65
      %p266 = pneg %p62
      %p267 = pneg %p86
      %p268 = pneg %p83
      %p269 = pneg %p107
      %p270 = pneg %p104
      %p271 = pneg %p128
      %p272 = pneg %p125
      %p273 = pneg %p149
      %p274 = pneg %p146
      %p275 = pneg %p170
      %p276 = pneg %p167
      %p277 = pneg %p196
      %p278 = pneg %p193
      %p279 = scmp.lt.s32.totalorder %s18, 1
      %s280 = scalar_select %p279, %s18, 1
      %s281 = smul.addr %s280, 10
      %s282 = smul.addr %s281, 8
      %s283 = scalar_lea.vmem %s7, %s282
      %p284 = scmp.lt.s32.totalorder %s18, 1
      %s285 = scalar_select %p284, %s18, 1
      %s286 = smul.addr %s285, 13
      %s287 = smul.addr %s286, 4
      %s288 = scalar_lea.vmem %s0, %s287
      %p289 = scmp.lt.s32.totalorder %s18, 1
      %s290 = scalar_select %p289, %s18, 1
      %s291 = smul.addr %s290, 10
      %s292 = smul.addr %s291, 4
      %s293 = scalar_lea.vmem %s1, %s292
      %p294 = scmp.lt.s32.totalorder %s18, 1
      %s295 = scalar_select %p294, %s18, 1
      %s296 = smul.addr %s295, 10
      %s297 = smul.addr %s296, 8
      %s298 = scalar_lea.vmem %s7, %s297
      %v300 = vld [vmem:[%s288] sm:$0xf]
      %v301 = vld [vmem:[%s288 + $0x4] sm:$0xf]
      %v302 = vld [vmem:[%s288 + $0x8] sm:$0xf]
      %v303 = vld [vmem:[%s288 + $0xc] sm:$0xf]
      %v304 = vld [vmem:[%s288 + $0x10] sm:$0xf]
      %v305 = vld [vmem:[%s288 + $0x14] sm:$0xf]
      %v306 = vld [vmem:[%s288 + $0x18] sm:$0xf]
      %v307 = vld [vmem:[%s288 + $0x1c] sm:$0xf]
      %v308 = vld [vmem:[%s288 + $0x20] sm:$0xf]
      %v309 = vld [vmem:[%s288 + $0x24] sm:$0xf]
      %v310 = vld [vmem:[%s2] sm:$0xf]
      %v311 = vld [vmem:[%s2 + $0x4] sm:$0xf]
      %v312 = vld [vmem:[%s2 + $0x8] sm:$0xf]
      %v313 = vld [vmem:[%s2 + $0xc] sm:$0xf]
      %v314 = vld [vmem:[%s2 + $0x10] sm:$0xf]
      %v315 = vld [vmem:[%s2 + $0x14] sm:$0xf]
      %v316 = vld [vmem:[%s2 + $0x18] sm:$0xf]
      %v317 = vld [vmem:[%s2 + $0x1c] sm:$0xf]
      %v318 = vld [vmem:[%s2 + $0x20] sm:$0xf]
      %v319 = vld [vmem:[%s2 + $0x24] sm:$0xf]
      %v320 = vld [vmem:[%s2 + $0x28] sm:$0xf]
      %v321 = vld [vmem:[%s2 + $0x2c] sm:$0xf]
      %v322 = vld [vmem:[%s2 + $0x30] sm:$0xf]
      %v323 = vld [vmem:[%s2 + $0x34] sm:$0xf]
      %v324 = vld [vmem:[%s2 + $0x38] sm:$0xf]
      %v325 = vld [vmem:[%s2 + $0x3c] sm:$0xf]
      %v326 = vld [vmem:[%s288 + $0x28] sm:$0x1]
      %s327 = scalar_lea.vmem %s2, 64
      %v328 = vld [vmem:[%s327] sm:$0xf]
      %v329 = vld [vmem:[%s327 + $0x4] sm:$0xf]
      %v330 = vld [vmem:[%s327 + $0x8] sm:$0xf]
      %v331 = vld [vmem:[%s327 + $0xc] sm:$0xf]
      %v332 = vld [vmem:[%s327 + $0x10] sm:$0xf]
      %v333 = vld [vmem:[%s327 + $0x14] sm:$0xf]
      %v334 = vld [vmem:[%s327 + $0x18] sm:$0xf]
      %v335 = vld [vmem:[%s327 + $0x1c] sm:$0xf]
      %v336 = vld [vmem:[%s327 + $0x20] sm:$0xf]
      %v337 = vld [vmem:[%s327 + $0x24] sm:$0xf]
      %v338 = vld [vmem:[%s327 + $0x28] sm:$0xf]
      %v339 = vld [vmem:[%s327 + $0x2c] sm:$0xf]
      %v340 = vld [vmem:[%s327 + $0x30] sm:$0xf]
      %v341 = vld [vmem:[%s327 + $0x34] sm:$0xf]
      %v342 = vld [vmem:[%s327 + $0x38] sm:$0xf]
      %v343 = vld [vmem:[%s327 + $0x3c] sm:$0xf]
      %v355 = vunpack.c.l.b16 %v300
      %v356 = vunpack.c.l.b16 %v301
      %v357 = vunpack.c.l.b16 %v302
      %v358 = vunpack.c.l.b16 %v303
      %v359 = vunpack.c.l.b16 %v304
      %v360 = vunpack.c.l.b16 %v305
      %v361 = vunpack.c.l.b16 %v306
      %v362 = vunpack.c.l.b16 %v307
      %v363 = vunpack.c.l.b16 %v308
      %v364 = vunpack.c.l.b16 %v309
      %v365 = vunpack.c.l.b16 %v326
      %v366 = vpack.c.b16 %v356, %v355
      %v367 = vpack.c.b16 %v358, %v357
      %v368 = vpack.c.b16 %v360, %v359
      %v369 = vpack.c.b16 %v362, %v361
      %v370 = vpack.c.b16 %v364, %v363
      %v371 = vpack.c.b16 %v365, %v365
      %vm372 = vsmask.f32 7424
      %v374 = vshrl.u32 %v366, 16
      %v376 = vshll.u32 %v366, 16
      %v378 = vrot.slane %v376, 1
      %v379 = vor.u32 %v374, %v378
      %v381 = vshll.u32 %v367, 16
      %v383 = vrot.slane %v381, 1
      %v384 = vsel %vm372, %v379, %v383
      %v385 = vshrl.u32 %v367, 16
      %v387 = vor.u32 %v385, %v383
      %v389 = vshll.u32 %v368, 16
      %v391 = vrot.slane %v389, 1
      %v392 = vsel %vm372, %v387, %v391
      %v393 = vshrl.u32 %v368, 16
      %v395 = vor.u32 %v393, %v391
      %v397 = vshll.u32 %v369, 16
      %v399 = vrot.slane %v397, 1
      %v400 = vsel %vm372, %v395, %v399
      %v401 = vshrl.u32 %v369, 16
      %v403 = vor.u32 %v401, %v399
      %v405 = vshll.u32 %v370, 16
      %v407 = vrot.slane %v405, 1
      %v408 = vsel %vm372, %v403, %v407
      %v409 = vshrl.u32 %v370, 16
      %v411 = vor.u32 %v409, %v407
      %v413 = vshll.u32 %v371, 16
      %v415 = vrot.slane %v413, 1
      %v416 = vsel %vm372, %v411, %v415
      %v438 = vunpack.c.l.b16 %v328
      %v439 = vunpack.c.l.b16 %v329
      %v440 = vunpack.c.l.b16 %v330
      %v441 = vunpack.c.l.b16 %v331
      %v442 = vunpack.c.l.b16 %v332
      %v443 = vunpack.c.l.b16 %v333
      %v444 = vunpack.c.l.b16 %v334
      %v445 = vunpack.c.l.b16 %v335
      %v446 = vunpack.c.l.b16 %v336
      %v447 = vunpack.c.l.b16 %v337
      %v448 = vunpack.c.l.b16 %v338
      %v449 = vunpack.c.l.b16 %v339
      %v450 = vunpack.c.l.b16 %v340
      %v451 = vunpack.c.l.b16 %v341
      %v452 = vunpack.c.l.b16 %v342
      %v453 = vunpack.c.l.b16 %v343
      %v454 = vpack.c.b16 %v439, %v438
      %v455 = vpack.c.b16 %v441, %v440
      %v456 = vpack.c.b16 %v443, %v442
      %v457 = vpack.c.b16 %v445, %v444
      %v458 = vpack.c.b16 %v447, %v446
      %v459 = vpack.c.b16 %v449, %v448
      %v460 = vpack.c.b16 %v451, %v450
      %v461 = vpack.c.b16 %v453, %v452
      %470 = vmatprep.subr.bf16.mxu0 0
      %471 = vmatpush1.bf16.msra.mxu0 %v454
      %472 = vmatprep.subr.bf16.mxu0 0
      %473 = vmatpush1.bf16.msra.mxu0 %v455
      %474 = vmatprep.subr.bf16.mxu0 0
      %475 = vmatpush1.bf16.msra.mxu0 %v456
      %476 = vmatprep.subr.bf16.mxu0 0
      %477 = vmatpush1.bf16.msra.mxu0 %v457
      %478 = vmatprep.subr.bf16.mxu0 0
      %479 = vmatpush1.bf16.msra.mxu0 %v458
      %480 = vmatprep.subr.bf16.mxu0 0
      %481 = vmatpush1.bf16.msra.mxu0 %v459
      %482 = vmatprep.subr.bf16.mxu0 0
      %483 = vmatpush1.bf16.msra.mxu0 %v460
      %484 = vmatprep.subr.bf16.mxu0 0
      %485 = vmatpush1.bf16.msra.mxu0 %v461
      %486 = vmatprep.subr.bf16.mxu0 0
      %487 = vmatpush1.bf16.msra.mxu0 0
      %488 = vmatprep.subr.bf16.mxu0 0
      %489 = vmatpush1.bf16.msra.mxu0 0
      %490 = vmatprep.subr.bf16.mxu0 0
      %491 = vmatpush1.bf16.msra.mxu0 0
      %492 = vmatprep.subr.bf16.mxu0 0
      %493 = vmatpush1.bf16.msra.mxu0 0
      %494 = vmatprep.subr.bf16.mxu0 0
      %495 = vmatpush1.bf16.msra.mxu0 0
      %496 = vmatprep.subr.bf16.mxu0 0
      %497 = vmatpush1.bf16.msra.mxu0 0
      %498 = vmatprep.subr.bf16.mxu0 0
      %499 = vmatpush1.bf16.msra.mxu0 0
      %500 = vmatprep.subr.bf16.mxu0 0
      %501 = vmatpush1.bf16.msra.mxu0 0
      %502 = vmatprep.mubr.bf16.mxu0 0
      %503 = vmatmul.mubr.bf16.gmra.mrb[0].mxu0 %v384
      %v504 = vpop.f32.mrb[0].mxu0
      %v505 = vadd.f32 0.0, %v504
      %v506 = vpop.f32.mrb[0].mxu0
      %v507 = vpop.f32.mrb[0].mxu0
      %v508 = vadd.f32 0.0, %v507
      %v509 = vpop.f32.mrb[0].mxu0
      %510 = vmatprep.mubr.bf16.mxu0 0
      %511 = vmatmul.mubr.bf16.gmra.mrb[0].mxu0 %v392
      %v512 = vpop.f32.mrb[0].mxu0
      %v513 = vadd.f32 0.0, %v512
      %v514 = vpop.f32.mrb[0].mxu0
      %v515 = vpop.f32.mrb[0].mxu0
      %v516 = vadd.f32 0.0, %v515
      %v517 = vpop.f32.mrb[0].mxu0
      %518 = vmatprep.mubr.bf16.mxu0 0
      %519 = vmatmul.mubr.bf16.gmra.mrb[0].mxu0 %v400
      %v520 = vpop.f32.mrb[0].mxu0
      %v521 = vadd.f32 0.0, %v520
      %v522 = vpop.f32.mrb[0].mxu0
      %v523 = vpop.f32.mrb[0].mxu0
      %v524 = vadd.f32 0.0, %v523
      %v525 = vpop.f32.mrb[0].mxu0
      %526 = vmatprep.mubr.bf16.mxu0 0
      %527 = vmatmul.mubr.bf16.gmra.mrb[0].mxu0 %v408
      %v528 = vpop.f32.mrb[0].mxu0
      %v529 = vadd.f32 0.0, %v528
      %v530 = vpop.f32.mrb[0].mxu0
      %v531 = vpop.f32.mrb[0].mxu0
      %v532 = vadd.f32 0.0, %v531
      %v533 = vpop.f32.mrb[0].mxu0
      %534 = vmatprep.mubr.bf16.mxu0 0
      %535 = vmatmul.mubr.bf16.gmra.mrb[0].mxu0 %v416
      %v536 = vpop.f32.mrb[0].mxu0
      %v537 = vadd.f32 0.0, %v536
      %v538 = vpop.f32.mrb[0].mxu0
      %v539 = vpop.f32.mrb[0].mxu0
      %v540 = vadd.f32 0.0, %v539
      %v541 = vpop.f32.mrb[0].mxu0
      %542 = vdwg.mxu0
      %v564 = vunpack.c.l.b16 %v310
      %v565 = vunpack.c.l.b16 %v311
      %v566 = vunpack.c.l.b16 %v312
      %v567 = vunpack.c.l.b16 %v313
      %v568 = vunpack.c.l.b16 %v314
      %v569 = vunpack.c.l.b16 %v315
      %v570 = vunpack.c.l.b16 %v316
      %v571 = vunpack.c.l.b16 %v317
      %v572 = vunpack.c.l.b16 %v318
      %v573 = vunpack.c.l.b16 %v319
      %v574 = vunpack.c.l.b16 %v320
      %v575 = vunpack.c.l.b16 %v321
      %v576 = vunpack.c.l.b16 %v322
      %v577 = vunpack.c.l.b16 %v323
      %v578 = vunpack.c.l.b16 %v324
      %v579 = vunpack.c.l.b16 %v325
      %v580 = vpack.c.b16 %v565, %v564
      %v581 = vpack.c.b16 %v567, %v566
      %v582 = vpack.c.b16 %v569, %v568
      %v583 = vpack.c.b16 %v571, %v570
      %v584 = vpack.c.b16 %v573, %v572
      %v585 = vpack.c.b16 %v575, %v574
      %v586 = vpack.c.b16 %v577, %v576
      %v587 = vpack.c.b16 %v579, %v578
      %596 = vmatprep.subr.bf16.mxu0 0
      %597 = vmatpush1.bf16.msra.mxu0 %v580
      %598 = vmatprep.subr.bf16.mxu0 0
      %599 = vmatpush1.bf16.msra.mxu0 %v581
      %600 = vmatprep.subr.bf16.mxu0 0
      %601 = vmatpush1.bf16.msra.mxu0 %v582
      %602 = vmatprep.subr.bf16.mxu0 0
      %603 = vmatpush1.bf16.msra.mxu0 %v583
      %604 = vmatprep.subr.bf16.mxu0 0
      %605 = vmatpush1.bf16.msra.mxu0 %v584
      %606 = vmatprep.subr.bf16.mxu0 0
      %607 = vmatpush1.bf16.msra.mxu0 %v585
      %608 = vmatprep.subr.bf16.mxu0 0
      %609 = vmatpush1.bf16.msra.mxu0 %v586
      %610 = vmatprep.subr.bf16.mxu0 0
      %611 = vmatpush1.bf16.msra.mxu0 %v587
      %612 = vmatprep.subr.bf16.mxu0 0
      %613 = vmatpush1.bf16.msra.mxu0 0
      %614 = vmatprep.subr.bf16.mxu0 0
      %615 = vmatpush1.bf16.msra.mxu0 0
      %616 = vmatprep.subr.bf16.mxu0 0
      %617 = vmatpush1.bf16.msra.mxu0 0
      %618 = vmatprep.subr.bf16.mxu0 0
      %619 = vmatpush1.bf16.msra.mxu0 0
      %620 = vmatprep.subr.bf16.mxu0 0
      %621 = vmatpush1.bf16.msra.mxu0 0
      %622 = vmatprep.subr.bf16.mxu0 0
      %623 = vmatpush1.bf16.msra.mxu0 0
      %624 = vmatprep.subr.bf16.mxu0 0
      %625 = vmatpush1.bf16.msra.mxu0 0
      %626 = vmatprep.subr.bf16.mxu0 0
      %627 = vmatpush1.bf16.msra.mxu0 0
      %628 = vmatprep.mubr.bf16.mxu0 0
      %629 = vmatmul.mubr.bf16.gmra.mrb[0].mxu0 %v366
      %v630 = vpop.f32.mrb[0].mxu0
      %v631 = vadd.f32 %v505, %v630
      %v632 = vpop.f32.mrb[0].mxu0
      %v633 = vpop.f32.mrb[0].mxu0
      %v634 = vadd.f32 %v508, %v633
      %v635 = vpop.f32.mrb[0].mxu0
      %636 = vmatprep.mubr.bf16.mxu0 0
      %637 = vmatmul.mubr.bf16.gmra.mrb[0].mxu0 %v367
      %v638 = vpop.f32.mrb[0].mxu0
      %v639 = vadd.f32 %v513, %v638
      %v640 = vpop.f32.mrb[0].mxu0
      %v641 = vpop.f32.mrb[0].mxu0
      %v642 = vadd.f32 %v516, %v641
      %v643 = vpop.f32.mrb[0].mxu0
      %644 = vmatprep.mubr.bf16.mxu0 0
      %645 = vmatmul.mubr.bf16.gmra.mrb[0].mxu0 %v368
      %v646 = vpop.f32.mrb[0].mxu0
      %v647 = vadd.f32 %v521, %v646
      %v648 = vpop.f32.mrb[0].mxu0
      %v649 = vpop.f32.mrb[0].mxu0
      %v650 = vadd.f32 %v524, %v649
      %v651 = vpop.f32.mrb[0].mxu0
      %652 = vmatprep.mubr.bf16.mxu0 0
      %653 = vmatmul.mubr.bf16.gmra.mrb[0].mxu0 %v369
      %v654 = vpop.f32.mrb[0].mxu0
      %v655 = vadd.f32 %v529, %v654
      %v656 = vpop.f32.mrb[0].mxu0
      %v657 = vpop.f32.mrb[0].mxu0
      %v658 = vadd.f32 %v532, %v657
      %v659 = vpop.f32.mrb[0].mxu0
      %660 = vmatprep.mubr.bf16.mxu0 0
      %661 = vmatmul.mubr.bf16.gmra.mrb[0].mxu0 %v370
      %v662 = vpop.f32.mrb[0].mxu0
      %v663 = vadd.f32 %v537, %v662
      %v664 = vpop.f32.mrb[0].mxu0
      %v665 = vpop.f32.mrb[0].mxu0
      %v666 = vadd.f32 %v540, %v665
      %v667 = vpop.f32.mrb[0].mxu0
      %668 = vdwg.mxu0
      %v669 = vld [vmem:[%s288] sm:$0xe]
      %s670 = scalar_lea.vmem %s2, 128
      %v671 = vld [vmem:[%s670] sm:$0xf]
      %v672 = vld [vmem:[%s670 + $0x4] sm:$0xf]
      %v673 = vld [vmem:[%s670 + $0x8] sm:$0xf]
      %v674 = vld [vmem:[%s670 + $0xc] sm:$0xf]
      %v675 = vld [vmem:[%s670 + $0x10] sm:$0xf]
      %v676 = vld [vmem:[%s670 + $0x14] sm:$0xf]
      %v677 = vld [vmem:[%s670 + $0x18] sm:$0xf]
      %v678 = vld [vmem:[%s670 + $0x1c] sm:$0xf]
      %v679 = vld [vmem:[%s670 + $0x20] sm:$0xf]
      %v680 = vld [vmem:[%s670 + $0x24] sm:$0xf]
      %v681 = vld [vmem:[%s670 + $0x28] sm:$0xf]
      %v682 = vld [vmem:[%s670 + $0x2c] sm:$0xf]
      %v683 = vld [vmem:[%s670 + $0x30] sm:$0xf]
      %v684 = vld [vmem:[%s670 + $0x34] sm:$0xf]
      %v685 = vld [vmem:[%s670 + $0x38] sm:$0xf]
      %v686 = vld [vmem:[%s670 + $0x3c] sm:$0xf]
      %v688 = vunpack.c.l.b16 %v669
      %v689 = vpack.c.b16 %v356, %v688
      %vm690 = vcmask 1046528
      %v691 = vrot.slane %v689, 1
      %v692 = vrot.slane %v367, 1
      %v693 = vsel %vm690, %v691, %v692
      %v694 = vrot.slane %v368, 1
      %v695 = vsel %vm690, %v692, %v694
      %v696 = vrot.slane %v369, 1
      %v697 = vsel %vm690, %v694, %v696
      %v698 = vrot.slane %v370, 1
      %v699 = vsel %vm690, %v696, %v698
      %v700 = vrot.slane %v371, 1
      %v701 = vsel %vm690, %v698, %v700
      %v723 = vunpack.c.l.b16 %v671
      %v724 = vunpack.c.l.b16 %v672
      %v725 = vunpack.c.l.b16 %v673
      %v726 = vunpack.c.l.b16 %v674
      %v727 = vunpack.c.l.b16 %v675
      %v728 = vunpack.c.l.b16 %v676
      %v729 = vunpack.c.l.b16 %v677
      %v730 = vunpack.c.l.b16 %v678
      %v731 = vunpack.c.l.b16 %v679
      %v732 = vunpack.c.l.b16 %v680
      %v733 = vunpack.c.l.b16 %v681
      %v734 = vunpack.c.l.b16 %v682
      %v735 = vunpack.c.l.b16 %v683
      %v736 = vunpack.c.l.b16 %v684
      %v737 = vunpack.c.l.b16 %v685
      %v738 = vunpack.c.l.b16 %v686
      %v739 = vpack.c.b16 %v724, %v723
      %v740 = vpack.c.b16 %v726, %v725
      %v741 = vpack.c.b16 %v728, %v727
      %v742 = vpack.c.b16 %v730, %v729
      %v743 = vpack.c.b16 %v732, %v731
      %v744 = vpack.c.b16 %v734, %v733
      %v745 = vpack.c.b16 %v736, %v735
      %v746 = vpack.c.b16 %v738, %v737
      %755 = vmatprep.subr.bf16.mxu0 0
      %756 = vmatpush1.bf16.msra.mxu0 %v739
      %757 = vmatprep.subr.bf16.mxu0 0
      %758 = vmatpush1.bf16.msra.mxu0 %v740
      %759 = vmatprep.subr.bf16.mxu0 0
      %760 = vmatpush1.bf16.msra.mxu0 %v741
      %761 = vmatprep.subr.bf16.mxu0 0
      %762 = vmatpush1.bf16.msra.mxu0 %v742
      %763 = vmatprep.subr.bf16.mxu0 0
      %764 = vmatpush1.bf16.msra.mxu0 %v743
      %765 = vmatprep.subr.bf16.mxu0 0
      %766 = vmatpush1.bf16.msra.mxu0 %v744
      %767 = vmatprep.subr.bf16.mxu0 0
      %768 = vmatpush1.bf16.msra.mxu0 %v745
      %769 = vmatprep.subr.bf16.mxu0 0
      %770 = vmatpush1.bf16.msra.mxu0 %v746
      %771 = vmatprep.subr.bf16.mxu0 0
      %772 = vmatpush1.bf16.msra.mxu0 0
      %773 = vmatprep.subr.bf16.mxu0 0
      %774 = vmatpush1.bf16.msra.mxu0 0
      %775 = vmatprep.subr.bf16.mxu0 0
      %776 = vmatpush1.bf16.msra.mxu0 0
      %777 = vmatprep.subr.bf16.mxu0 0
      %778 = vmatpush1.bf16.msra.mxu0 0
      %779 = vmatprep.subr.bf16.mxu0 0
      %780 = vmatpush1.bf16.msra.mxu0 0
      %781 = vmatprep.subr.bf16.mxu0 0
      %782 = vmatpush1.bf16.msra.mxu0 0
      %783 = vmatprep.subr.bf16.mxu0 0
      %784 = vmatpush1.bf16.msra.mxu0 0
      %785 = vmatprep.subr.bf16.mxu0 0
      %786 = vmatpush1.bf16.msra.mxu0 0
      %787 = vmatprep.mubr.bf16.mxu0 0
      %788 = vmatmul.mubr.bf16.gmra.mrb[0].mxu0 %v693
      %v789 = vpop.f32.mrb[0].mxu0
      %v790 = vadd.f32 0.0, %v789
      %v791 = vpop.f32.mrb[0].mxu0
      %v792 = vpop.f32.mrb[0].mxu0
      %v793 = vadd.f32 0.0, %v792
      %v794 = vpop.f32.mrb[0].mxu0
      %795 = vmatprep.mubr.bf16.mxu0 0
      %796 = vmatmul.mubr.bf16.gmra.mrb[0].mxu0 %v695
      %v797 = vpop.f32.mrb[0].mxu0
      %v798 = vadd.f32 0.0, %v797
      %v799 = vpop.f32.mrb[0].mxu0
      %v800 = vpop.f32.mrb[0].mxu0
      %v801 = vadd.f32 0.0, %v800
      %v802 = vpop.f32.mrb[0].mxu0
      %803 = vmatprep.mubr.bf16.mxu0 0
      %804 = vmatmul.mubr.bf16.gmra.mrb[0].mxu0 %v697
      %v805 = vpop.f32.mrb[0].mxu0
      %v806 = vadd.f32 0.0, %v805
      %v807 = vpop.f32.mrb[0].mxu0
      %v808 = vpop.f32.mrb[0].mxu0
      %v809 = vadd.f32 0.0, %v808
      %v810 = vpop.f32.mrb[0].mxu0
      %811 = vmatprep.mubr.bf16.mxu0 0
      %812 = vmatmul.mubr.bf16.gmra.mrb[0].mxu0 %v699
      %v813 = vpop.f32.mrb[0].mxu0
      %v814 = vadd.f32 0.0, %v813
      %v815 = vpop.f32.mrb[0].mxu0
      %v816 = vpop.f32.mrb[0].mxu0
      %v817 = vadd.f32 0.0, %v816
      %v818 = vpop.f32.mrb[0].mxu0
      %819 = vmatprep.mubr.bf16.mxu0 0
      %820 = vmatmul.mubr.bf16.gmra.mrb[0].mxu0 %v701
      %v821 = vpop.f32.mrb[0].mxu0
      %v822 = vadd.f32 0.0, %v821
      %v823 = vpop.f32.mrb[0].mxu0
      %v824 = vpop.f32.mrb[0].mxu0
      %v825 = vadd.f32 0.0, %v824
      %v826 = vpop.f32.mrb[0].mxu0
      %827 = vdwg.mxu0
      %v828 = vadd.f32 %v631, %v790
      %v829 = vadd.f32 %v634, %v793
      %v830 = vadd.f32 %v639, %v798
      %v831 = vadd.f32 %v642, %v801
      %v832 = vadd.f32 %v647, %v806
      %v833 = vadd.f32 %v650, %v809
      %v834 = vadd.f32 %v655, %v814
      %v835 = vadd.f32 %v658, %v817
      %v836 = vadd.f32 %v663, %v822
      %v837 = vadd.f32 %v666, %v825
      %v838 = vld [vmem:[%s288 + $0x4] sm:$0xe]
      %v839 = vld [vmem:[%s288 + $0x8] sm:$0xf]
      %v840 = vld [vmem:[%s288 + $0xc] sm:$0xf]
      %v841 = vld [vmem:[%s288 + $0x10] sm:$0xf]
      %v842 = vld [vmem:[%s288 + $0x14] sm:$0xf]
      %v843 = vld [vmem:[%s288 + $0x18] sm:$0xf]
      %v844 = vld [vmem:[%s288 + $0x1c] sm:$0xf]
      %v845 = vld [vmem:[%s288 + $0x20] sm:$0xf]
      %v846 = vld [vmem:[%s288 + $0x24] sm:$0xf]
      %v847 = vld [vmem:[%s288 + $0x28] sm:$0xf]
      %v848 = vld [vmem:[%s288 + $0x2c] sm:$0x1]
      %s849 = scalar_lea.vmem %s2, 192
      %v850 = vld [vmem:[%s849] sm:$0xf]
      %v851 = vld [vmem:[%s849 + $0x4] sm:$0xf]
      %v852 = vld [vmem:[%s849 + $0x8] sm:$0xf]
      %v853 = vld [vmem:[%s849 + $0xc] sm:$0xf]
      %v854 = vld [vmem:[%s849 + $0x10] sm:$0xf]
      %v855 = vld [vmem:[%s849 + $0x14] sm:$0xf]
      %v856 = vld [vmem:[%s849 + $0x18] sm:$0xf]
      %v857 = vld [vmem:[%s849 + $0x1c] sm:$0xf]
      %v858 = vld [vmem:[%s849 + $0x20] sm:$0xf]
      %v859 = vld [vmem:[%s849 + $0x24] sm:$0xf]
      %v860 = vld [vmem:[%s849 + $0x28] sm:$0xf]
      %v861 = vld [vmem:[%s849 + $0x2c] sm:$0xf]
      %v862 = vld [vmem:[%s849 + $0x30] sm:$0xf]
      %v863 = vld [vmem:[%s849 + $0x34] sm:$0xf]
      %v864 = vld [vmem:[%s849 + $0x38] sm:$0xf]
      %v865 = vld [vmem:[%s849 + $0x3c] sm:$0xf]
      %v877 = vunpack.c.l.b16 %v838
      %v878 = vunpack.c.l.b16 %v839
      %v879 = vunpack.c.l.b16 %v840
      %v880 = vunpack.c.l.b16 %v841
      %v881 = vunpack.c.l.b16 %v842
      %v882 = vunpack.c.l.b16 %v843
      %v883 = vunpack.c.l.b16 %v844
      %v884 = vunpack.c.l.b16 %v845
      %v885 = vunpack.c.l.b16 %v846
      %v886 = vunpack.c.l.b16 %v847
      %v887 = vunpack.c.l.b16 %v848
      %v888 = vpack.c.b16 %v878, %v877
      %v889 = vpack.c.b16 %v880, %v879
      %v890 = vpack.c.b16 %v882, %v881
      %v891 = vpack.c.b16 %v884, %v883
      %v892 = vpack.c.b16 %v886, %v885
      %v893 = vpack.c.b16 %v887, %v887
      %v894 = vrot.slane %v888, 1
      %v895 = vrot.slane %v889, 1
      %v896 = vsel %vm690, %v894, %v895
      %v897 = vrot.slane %v890, 1
      %v898 = vsel %vm690, %v895, %v897
      %v899 = vrot.slane %v891, 1
      %v900 = vsel %vm690, %v897, %v899
      %v901 = vrot.slane %v892, 1
      %v902 = vsel %vm690, %v899, %v901
      %v903 = vrot.slane %v893, 1
      %v904 = vsel %vm690, %v901, %v903
      %v926 = vunpack.c.l.b16 %v850
      %v927 = vunpack.c.l.b16 %v851
      %v928 = vunpack.c.l.b16 %v852
      %v929 = vunpack.c.l.b16 %v853
      %v930 = vunpack.c.l.b16 %v854
      %v931 = vunpack.c.l.b16 %v855
      %v932 = vunpack.c.l.b16 %v856
      %v933 = vunpack.c.l.b16 %v857
      %v934 = vunpack.c.l.b16 %v858
      %v935 = vunpack.c.l.b16 %v859
      %v936 = vunpack.c.l.b16 %v860
      %v937 = vunpack.c.l.b16 %v861
      %v938 = vunpack.c.l.b16 %v862
      %v939 = vunpack.c.l.b16 %v863
      %v940 = vunpack.c.l.b16 %v864
      %v941 = vunpack.c.l.b16 %v865
      %v942 = vpack.c.b16 %v927, %v926
      %v943 = vpack.c.b16 %v929, %v928
      %v944 = vpack.c.b16 %v931, %v930
      %v945 = vpack.c.b16 %v933, %v932
      %v946 = vpack.c.b16 %v935, %v934
      %v947 = vpack.c.b16 %v937, %v936
      %v948 = vpack.c.b16 %v939, %v938
      %v949 = vpack.c.b16 %v941, %v940
      %958 = vmatprep.subr.bf16.mxu0 0
      %959 = vmatpush1.bf16.msra.mxu0 %v942
      %960 = vmatprep.subr.bf16.mxu0 0
      %961 = vmatpush1.bf16.msra.mxu0 %v943
      %962 = vmatprep.subr.bf16.mxu0 0
      %963 = vmatpush1.bf16.msra.mxu0 %v944
      %964 = vmatprep.subr.bf16.mxu0 0
      %965 = vmatpush1.bf16.msra.mxu0 %v945
      %966 = vmatprep.subr.bf16.mxu0 0
      %967 = vmatpush1.bf16.msra.mxu0 %v946
      %968 = vmatprep.subr.bf16.mxu0 0
      %969 = vmatpush1.bf16.msra.mxu0 %v947
      %970 = vmatprep.subr.bf16.mxu0 0
      %971 = vmatpush1.bf16.msra.mxu0 %v948
      %972 = vmatprep.subr.bf16.mxu0 0
      %973 = vmatpush1.bf16.msra.mxu0 %v949
      %974 = vmatprep.subr.bf16.mxu0 0
      %975 = vmatpush1.bf16.msra.mxu0 0
      %976 = vmatprep.subr.bf16.mxu0 0
      %977 = vmatpush1.bf16.msra.mxu0 0
      %978 = vmatprep.subr.bf16.mxu0 0
      %979 = vmatpush1.bf16.msra.mxu0 0
      %980 = vmatprep.subr.bf16.mxu0 0
      %981 = vmatpush1.bf16.msra.mxu0 0
      %982 = vmatprep.subr.bf16.mxu0 0
      %983 = vmatpush1.bf16.msra.mxu0 0
      %984 = vmatprep.subr.bf16.mxu0 0
      %985 = vmatpush1.bf16.msra.mxu0 0
      %986 = vmatprep.subr.bf16.mxu0 0
      %987 = vmatpush1.bf16.msra.mxu0 0
      %988 = vmatprep.subr.bf16.mxu0 0
      %989 = vmatpush1.bf16.msra.mxu0 0
      %990 = vmatprep.mubr.bf16.mxu0 0
      %991 = vmatmul.mubr.bf16.gmra.mrb[0].mxu0 %v896
      %v992 = vpop.f32.mrb[0].mxu0
      %v993 = vadd.f32 0.0, %v992
      %v994 = vpop.f32.mrb[0].mxu0
      %v995 = vpop.f32.mrb[0].mxu0
      %v996 = vadd.f32 0.0, %v995
      %v997 = vpop.f32.mrb[0].mxu0
      %998 = vmatprep.mubr.bf16.mxu0 0
      %999 = vmatmul.mubr.bf16.gmra.mrb[0].mxu0 %v898
      %v1000 = vpop.f32.mrb[0].mxu0
      %v1001 = vadd.f32 0.0, %v1000
      %v1002 = vpop.f32.mrb[0].mxu0
      %v1003 = vpop.f32.mrb[0].mxu0
      %v1004 = vadd.f32 0.0, %v1003
      %v1005 = vpop.f32.mrb[0].mxu0
      %1006 = vmatprep.mubr.bf16.mxu0 0
      %1007 = vmatmul.mubr.bf16.gmra.mrb[0].mxu0 %v900
      %v1008 = vpop.f32.mrb[0].mxu0
      %v1009 = vadd.f32 0.0, %v1008
      %v1010 = vpop.f32.mrb[0].mxu0
      %v1011 = vpop.f32.mrb[0].mxu0
      %v1012 = vadd.f32 0.0, %v1011
      %v1013 = vpop.f32.mrb[0].mxu0
      %1014 = vmatprep.mubr.bf16.mxu0 0
      %1015 = vmatmul.mubr.bf16.gmra.mrb[0].mxu0 %v902
      %v1016 = vpop.f32.mrb[0].mxu0
      %v1017 = vadd.f32 0.0, %v1016
      %v1018 = vpop.f32.mrb[0].mxu0
      %v1019 = vpop.f32.mrb[0].mxu0
      %v1020 = vadd.f32 0.0, %v1019
      %v1021 = vpop.f32.mrb[0].mxu0
      %1022 = vmatprep.mubr.bf16.mxu0 0
      %1023 = vmatmul.mubr.bf16.gmra.mrb[0].mxu0 %v904
      %v1024 = vpop.f32.mrb[0].mxu0
      %v1025 = vadd.f32 0.0, %v1024
      %v1026 = vpop.f32.mrb[0].mxu0
      %v1027 = vpop.f32.mrb[0].mxu0
      %v1028 = vadd.f32 0.0, %v1027
      %v1029 = vpop.f32.mrb[0].mxu0
      %1030 = vdwg.mxu0
      %v1031 = vadd.f32 %v828, %v993
      %v1032 = vadd.f32 %v829, %v996
      %v1033 = vadd.f32 %v830, %v1001
      %v1034 = vadd.f32 %v831, %v1004
      %v1035 = vadd.f32 %v832, %v1009
      %v1036 = vadd.f32 %v833, %v1012
      %v1037 = vadd.f32 %v834, %v1017
      %v1038 = vadd.f32 %v835, %v1020
      %v1039 = vadd.f32 %v836, %v1025
      %v1040 = vadd.f32 %v837, %v1028
      %v1041 = vld [vmem:[%s288 + $0x2c] sm:$0x3]
      %s1042 = scalar_lea.vmem %s2, 256
      %v1043 = vld [vmem:[%s1042] sm:$0xf]
      %v1044 = vld [vmem:[%s1042 + $0x4] sm:$0xf]
      %v1045 = vld [vmem:[%s1042 + $0x8] sm:$0xf]
      %v1046 = vld [vmem:[%s1042 + $0xc] sm:$0xf]
      %v1047 = vld [vmem:[%s1042 + $0x10] sm:$0xf]
      %v1048 = vld [vmem:[%s1042 + $0x14] sm:$0xf]
      %v1049 = vld [vmem:[%s1042 + $0x18] sm:$0xf]
      %v1050 = vld [vmem:[%s1042 + $0x1c] sm:$0xf]
      %v1051 = vld [vmem:[%s1042 + $0x20] sm:$0xf]
      %v1052 = vld [vmem:[%s1042 + $0x24] sm:$0xf]
      %v1053 = vld [vmem:[%s1042 + $0x28] sm:$0xf]
      %v1054 = vld [vmem:[%s1042 + $0x2c] sm:$0xf]
      %v1055 = vld [vmem:[%s1042 + $0x30] sm:$0xf]
      %v1056 = vld [vmem:[%s1042 + $0x34] sm:$0xf]
      %v1057 = vld [vmem:[%s1042 + $0x38] sm:$0xf]
      %v1058 = vld [vmem:[%s1042 + $0x3c] sm:$0xf]
      %v1060 = vunpack.c.l.b16 %v1041
      %v1061 = vpack.c.b16 %v1060, %v1060
      %vm1062 = vsmask.f32 6400
      %v1064 = vshrl.u32 %v888, 16
      %v1066 = vrot.slane %v1064, 1
      %v1067 = vshll.u32 %v888, 16
      %v1069 = vrot.slane %v1067, 2
      %v1070 = vor.u32 %v1066, %v1069
      %v1072 = vshrl.u32 %v889, 16
      %v1074 = vrot.slane %v1072, 1
      %v1075 = vshll.u32 %v889, 16
      %v1077 = vrot.slane %v1075, 2
      %v1078 = vor.u32 %v1074, %v1077
      %v1079 = vsel %vm1062, %v1070, %v1078
      %v1081 = vshrl.u32 %v890, 16
      %v1083 = vrot.slane %v1081, 1
      %v1084 = vshll.u32 %v890, 16
      %v1086 = vrot.slane %v1084, 2
      %v1087 = vor.u32 %v1083, %v1086
      %v1088 = vsel %vm1062, %v1078, %v1087
      %v1090 = vshrl.u32 %v891, 16
      %v1092 = vrot.slane %v1090, 1
      %v1093 = vshll.u32 %v891, 16
      %v1095 = vrot.slane %v1093, 2
      %v1096 = vor.u32 %v1092, %v1095
      %v1097 = vsel %vm1062, %v1087, %v1096
      %v1099 = vshrl.u32 %v892, 16
      %v1101 = vrot.slane %v1099, 1
      %v1102 = vshll.u32 %v892, 16
      %v1104 = vrot.slane %v1102, 2
      %v1105 = vor.u32 %v1101, %v1104
      %v1106 = vsel %vm1062, %v1096, %v1105
      %v1108 = vshrl.u32 %v1061, 16
      %v1110 = vrot.slane %v1108, 1
      %v1111 = vshll.u32 %v1061, 16
      %v1113 = vrot.slane %v1111, 2
      %v1114 = vor.u32 %v1110, %v1113
      %v1115 = vsel %vm1062, %v1105, %v1114
      %v1137 = vunpack.c.l.b16 %v1043
      %v1138 = vunpack.c.l.b16 %v1044
      %v1139 = vunpack.c.l.b16 %v1045
      %v1140 = vunpack.c.l.b16 %v1046
      %v1141 = vunpack.c.l.b16 %v1047
      %v1142 = vunpack.c.l.b16 %v1048
      %v1143 = vunpack.c.l.b16 %v1049
      %v1144 = vunpack.c.l.b16 %v1050
      %v1145 = vunpack.c.l.b16 %v1051
      %v1146 = vunpack.c.l.b16 %v1052
      %v1147 = vunpack.c.l.b16 %v1053
      %v1148 = vunpack.c.l.b16 %v1054
      %v1149 = vunpack.c.l.b16 %v1055
      %v1150 = vunpack.c.l.b16 %v1056
      %v1151 = vunpack.c.l.b16 %v1057
      %v1152 = vunpack.c.l.b16 %v1058
      %v1153 = vpack.c.b16 %v1138, %v1137
      %v1154 = vpack.c.b16 %v1140, %v1139
      %v1155 = vpack.c.b16 %v1142, %v1141
      %v1156 = vpack.c.b16 %v1144, %v1143
      %v1157 = vpack.c.b16 %v1146, %v1145
      %v1158 = vpack.c.b16 %v1148, %v1147
      %v1159 = vpack.c.b16 %v1150, %v1149
      %v1160 = vpack.c.b16 %v1152, %v1151
      %1169 = vmatprep.subr.bf16.mxu0 0
      %1170 = vmatpush1.bf16.msra.mxu0 %v1153
      %1171 = vmatprep.subr.bf16.mxu0 0
      %1172 = vmatpush1.bf16.msra.mxu0 %v1154
      %1173 = vmatprep.subr.bf16.mxu0 0
      %1174 = vmatpush1.bf16.msra.mxu0 %v1155
      %1175 = vmatprep.subr.bf16.mxu0 0
      %1176 = vmatpush1.bf16.msra.mxu0 %v1156
      %1177 = vmatprep.subr.bf16.mxu0 0
      %1178 = vmatpush1.bf16.msra.mxu0 %v1157
      %1179 = vmatprep.subr.bf16.mxu0 0
      %1180 = vmatpush1.bf16.msra.mxu0 %v1158
      %1181 = vmatprep.subr.bf16.mxu0 0
      %1182 = vmatpush1.bf16.msra.mxu0 %v1159
      %1183 = vmatprep.subr.bf16.mxu0 0
      %1184 = vmatpush1.bf16.msra.mxu0 %v1160
      %1185 = vmatprep.subr.bf16.mxu0 0
      %1186 = vmatpush1.bf16.msra.mxu0 0
      %1187 = vmatprep.subr.bf16.mxu0 0
      %1188 = vmatpush1.bf16.msra.mxu0 0
      %1189 = vmatprep.subr.bf16.mxu0 0
      %1190 = vmatpush1.bf16.msra.mxu0 0
      %1191 = vmatprep.subr.bf16.mxu0 0
      %1192 = vmatpush1.bf16.msra.mxu0 0
      %1193 = vmatprep.subr.bf16.mxu0 0
      %1194 = vmatpush1.bf16.msra.mxu0 0
      %1195 = vmatprep.subr.bf16.mxu0 0
      %1196 = vmatpush1.bf16.msra.mxu0 0
      %1197 = vmatprep.subr.bf16.mxu0 0
      %1198 = vmatpush1.bf16.msra.mxu0 0
      %1199 = vmatprep.subr.bf16.mxu0 0
      %1200 = vmatpush1.bf16.msra.mxu0 0
      %1201 = vmatprep.mubr.bf16.mxu0 0
      %1202 = vmatmul.mubr.bf16.gmra.mrb[0].mxu0 %v1079
      %v1203 = vpop.f32.mrb[0].mxu0
      %v1204 = vadd.f32 0.0, %v1203
      %v1205 = vpop.f32.mrb[0].mxu0
      %v1206 = vpop.f32.mrb[0].mxu0
      %v1207 = vadd.f32 0.0, %v1206
      %v1208 = vpop.f32.mrb[0].mxu0
      %1209 = vmatprep.mubr.bf16.mxu0 0
      %1210 = vmatmul.mubr.bf16.gmra.mrb[0].mxu0 %v1088
      %v1211 = vpop.f32.mrb[0].mxu0
      %v1212 = vadd.f32 0.0, %v1211
      %v1213 = vpop.f32.mrb[0].mxu0
      %v1214 = vpop.f32.mrb[0].mxu0
      %v1215 = vadd.f32 0.0, %v1214
      %v1216 = vpop.f32.mrb[0].mxu0
      %1217 = vmatprep.mubr.bf16.mxu0 0
      %1218 = vmatmul.mubr.bf16.gmra.mrb[0].mxu0 %v1097
      %v1219 = vpop.f32.mrb[0].mxu0
      %v1220 = vadd.f32 0.0, %v1219
      %v1221 = vpop.f32.mrb[0].mxu0
      %v1222 = vpop.f32.mrb[0].mxu0
      %v1223 = vadd.f32 0.0, %v1222
      %v1224 = vpop.f32.mrb[0].mxu0
      %1225 = vmatprep.mubr.bf16.mxu0 0
      %1226 = vmatmul.mubr.bf16.gmra.mrb[0].mxu0 %v1106
      %v1227 = vpop.f32.mrb[0].mxu0
      %v1228 = vadd.f32 0.0, %v1227
      %v1229 = vpop.f32.mrb[0].mxu0
      %v1230 = vpop.f32.mrb[0].mxu0
      %v1231 = vadd.f32 0.0, %v1230
      %v1232 = vpop.f32.mrb[0].mxu0
      %1233 = vmatprep.mubr.bf16.mxu0 0
      %1234 = vmatmul.mubr.bf16.gmra.mrb[0].mxu0 %v1115
      %v1235 = vpop.f32.mrb[0].mxu0
      %v1236 = vadd.f32 0.0, %v1235
      %v1237 = vpop.f32.mrb[0].mxu0
      %v1238 = vpop.f32.mrb[0].mxu0
      %v1239 = vadd.f32 0.0, %v1238
      %v1240 = vpop.f32.mrb[0].mxu0
      %1241 = vdwg.mxu0
      %v1242 = vadd.f32 %v1031, %v1204
      %v1243 = vadd.f32 %v1032, %v1207
      %v1244 = vadd.f32 %v1033, %v1212
      %v1245 = vadd.f32 %v1034, %v1215
      %v1246 = vadd.f32 %v1035, %v1220
      %v1247 = vadd.f32 %v1036, %v1223
      %v1248 = vadd.f32 %v1037, %v1228
      %v1249 = vadd.f32 %v1038, %v1231
      %v1250 = vadd.f32 %v1039, %v1236
      %v1251 = vadd.f32 %v1040, %v1239
      %v1252 = vld [vmem:[%s288 + $0x4] sm:$0xc]
      %s1253 = scalar_lea.vmem %s2, 320
      %v1254 = vld [vmem:[%s1253] sm:$0xf]
      %v1255 = vld [vmem:[%s1253 + $0x4] sm:$0xf]
      %v1256 = vld [vmem:[%s1253 + $0x8] sm:$0xf]
      %v1257 = vld [vmem:[%s1253 + $0xc] sm:$0xf]
      %v1258 = vld [vmem:[%s1253 + $0x10] sm:$0xf]
      %v1259 = vld [vmem:[%s1253 + $0x14] sm:$0xf]
      %v1260 = vld [vmem:[%s1253 + $0x18] sm:$0xf]
      %v1261 = vld [vmem:[%s1253 + $0x1c] sm:$0xf]
      %v1262 = vld [vmem:[%s1253 + $0x20] sm:$0xf]
      %v1263 = vld [vmem:[%s1253 + $0x24] sm:$0xf]
      %v1264 = vld [vmem:[%s1253 + $0x28] sm:$0xf]
      %v1265 = vld [vmem:[%s1253 + $0x2c] sm:$0xf]
      %v1266 = vld [vmem:[%s1253 + $0x30] sm:$0xf]
      %v1267 = vld [vmem:[%s1253 + $0x34] sm:$0xf]
      %v1268 = vld [vmem:[%s1253 + $0x38] sm:$0xf]
      %v1269 = vld [vmem:[%s1253 + $0x3c] sm:$0xf]
      %v1271 = vunpack.c.l.b16 %v1252
      %v1272 = vpack.c.b16 %v878, %v1271
      %vm1273 = vcmask 1045504
      %v1274 = vrot.slane %v1272, 2
      %v1275 = vrot.slane %v889, 2
      %v1276 = vsel %vm1273, %v1274, %v1275
      %v1277 = vrot.slane %v890, 2
      %v1278 = vsel %vm1273, %v1275, %v1277
      %v1279 = vrot.slane %v891, 2
      %v1280 = vsel %vm1273, %v1277, %v1279
      %v1281 = vrot.slane %v892, 2
      %v1282 = vsel %vm1273, %v1279, %v1281
      %v1283 = vrot.slane %v1061, 2
      %v1284 = vsel %vm1273, %v1281, %v1283
      %v1306 = vunpack.c.l.b16 %v1254
      %v1307 = vunpack.c.l.b16 %v1255
      %v1308 = vunpack.c.l.b16 %v1256
      %v1309 = vunpack.c.l.b16 %v1257
      %v1310 = vunpack.c.l.b16 %v1258
      %v1311 = vunpack.c.l.b16 %v1259
      %v1312 = vunpack.c.l.b16 %v1260
      %v1313 = vunpack.c.l.b16 %v1261
      %v1314 = vunpack.c.l.b16 %v1262
      %v1315 = vunpack.c.l.b16 %v1263
      %v1316 = vunpack.c.l.b16 %v1264
      %v1317 = vunpack.c.l.b16 %v1265
      %v1318 = vunpack.c.l.b16 %v1266
      %v1319 = vunpack.c.l.b16 %v1267
      %v1320 = vunpack.c.l.b16 %v1268
      %v1321 = vunpack.c.l.b16 %v1269
      %v1322 = vpack.c.b16 %v1307, %v1306
      %v1323 = vpack.c.b16 %v1309, %v1308
      %v1324 = vpack.c.b16 %v1311, %v1310
      %v1325 = vpack.c.b16 %v1313, %v1312
      %v1326 = vpack.c.b16 %v1315, %v1314
      %v1327 = vpack.c.b16 %v1317, %v1316
      %v1328 = vpack.c.b16 %v1319, %v1318
      %v1329 = vpack.c.b16 %v1321, %v1320
      %1338 = vmatprep.subr.bf16.mxu0 0
      %1339 = vmatpush1.bf16.msra.mxu0 %v1322
      %1340 = vmatprep.subr.bf16.mxu0 0
      %1341 = vmatpush1.bf16.msra.mxu0 %v1323
      %1342 = vmatprep.subr.bf16.mxu0 0
      %1343 = vmatpush1.bf16.msra.mxu0 %v1324
      %1344 = vmatprep.subr.bf16.mxu0 0
      %1345 = vmatpush1.bf16.msra.mxu0 %v1325
      %1346 = vmatprep.subr.bf16.mxu0 0
      %1347 = vmatpush1.bf16.msra.mxu0 %v1326
      %1348 = vmatprep.subr.bf16.mxu0 0
      %1349 = vmatpush1.bf16.msra.mxu0 %v1327
      %1350 = vmatprep.subr.bf16.mxu0 0
      %1351 = vmatpush1.bf16.msra.mxu0 %v1328
      %1352 = vmatprep.subr.bf16.mxu0 0
      %1353 = vmatpush1.bf16.msra.mxu0 %v1329
      %1354 = vmatprep.subr.bf16.mxu0 0
      %1355 = vmatpush1.bf16.msra.mxu0 0
      %1356 = vmatprep.subr.bf16.mxu0 0
      %1357 = vmatpush1.bf16.msra.mxu0 0
      %1358 = vmatprep.subr.bf16.mxu0 0
      %1359 = vmatpush1.bf16.msra.mxu0 0
      %1360 = vmatprep.subr.bf16.mxu0 0
      %1361 = vmatpush1.bf16.msra.mxu0 0
      %1362 = vmatprep.subr.bf16.mxu0 0
      %1363 = vmatpush1.bf16.msra.mxu0 0
      %1364 = vmatprep.subr.bf16.mxu0 0
      %1365 = vmatpush1.bf16.msra.mxu0 0
      %1366 = vmatprep.subr.bf16.mxu0 0
      %1367 = vmatpush1.bf16.msra.mxu0 0
      %1368 = vmatprep.subr.bf16.mxu0 0
      %1369 = vmatpush1.bf16.msra.mxu0 0
      %1370 = vmatprep.mubr.bf16.mxu0 0
      %1371 = vmatmul.mubr.bf16.gmra.mrb[0].mxu0 %v1276
      %v1372 = vpop.f32.mrb[0].mxu0
      %v1373 = vadd.f32 0.0, %v1372
      %v1374 = vpop.f32.mrb[0].mxu0
      %v1375 = vpop.f32.mrb[0].mxu0
      %v1376 = vadd.f32 0.0, %v1375
      %v1377 = vpop.f32.mrb[0].mxu0
      %1378 = vmatprep.mubr.bf16.mxu0 0
      %1379 = vmatmul.mubr.bf16.gmra.mrb[0].mxu0 %v1278
      %v1380 = vpop.f32.mrb[0].mxu0
      %v1381 = vadd.f32 0.0, %v1380
      %v1382 = vpop.f32.mrb[0].mxu0
      %v1383 = vpop.f32.mrb[0].mxu0
      %v1384 = vadd.f32 0.0, %v1383
      %v1385 = vpop.f32.mrb[0].mxu0
      %1386 = vmatprep.mubr.bf16.mxu0 0
      %1387 = vmatmul.mubr.bf16.gmra.mrb[0].mxu0 %v1280
      %v1388 = vpop.f32.mrb[0].mxu0
      %v1389 = vadd.f32 0.0, %v1388
      %v1390 = vpop.f32.mrb[0].mxu0
      %v1391 = vpop.f32.mrb[0].mxu0
      %v1392 = vadd.f32 0.0, %v1391
      %v1393 = vpop.f32.mrb[0].mxu0
      %1394 = vmatprep.mubr.bf16.mxu0 0
      %1395 = vmatmul.mubr.bf16.gmra.mrb[0].mxu0 %v1282
      %v1396 = vpop.f32.mrb[0].mxu0
      %v1397 = vadd.f32 0.0, %v1396
      %v1398 = vpop.f32.mrb[0].mxu0
      %v1399 = vpop.f32.mrb[0].mxu0
      %v1400 = vadd.f32 0.0, %v1399
      %v1401 = vpop.f32.mrb[0].mxu0
      %1402 = vmatprep.mubr.bf16.mxu0 0
      %1403 = vmatmul.mubr.bf16.gmra.mrb[0].mxu0 %v1284
      %v1404 = vpop.f32.mrb[0].mxu0
      %v1405 = vadd.f32 0.0, %v1404
      %v1406 = vpop.f32.mrb[0].mxu0
      %v1407 = vpop.f32.mrb[0].mxu0
      %v1408 = vadd.f32 0.0, %v1407
      %v1409 = vpop.f32.mrb[0].mxu0
      %1410 = vdwg.mxu0
      %v1411 = vadd.f32 %v1242, %v1373
      %v1412 = vadd.f32 %v1243, %v1376
      %v1413 = vadd.f32 %v1244, %v1381
      %v1414 = vadd.f32 %v1245, %v1384
      %v1415 = vadd.f32 %v1246, %v1389
      %v1416 = vadd.f32 %v1247, %v1392
      %v1417 = vadd.f32 %v1248, %v1397
      %v1418 = vadd.f32 %v1249, %v1400
      %v1419 = vadd.f32 %v1250, %v1405
      %v1420 = vadd.f32 %v1251, %v1408
      %v1421 = vld [vmem:[%s288 + $0x8] sm:$0xc]
      %v1422 = vld [vmem:[%s288 + $0xc] sm:$0xf]
      %v1423 = vld [vmem:[%s288 + $0x10] sm:$0xf]
      %v1424 = vld [vmem:[%s288 + $0x14] sm:$0xf]
      %v1425 = vld [vmem:[%s288 + $0x18] sm:$0xf]
      %v1426 = vld [vmem:[%s288 + $0x1c] sm:$0xf]
      %v1427 = vld [vmem:[%s288 + $0x20] sm:$0xf]
      %v1428 = vld [vmem:[%s288 + $0x24] sm:$0xf]
      %v1429 = vld [vmem:[%s288 + $0x28] sm:$0xf]
      %v1430 = vld [vmem:[%s288 + $0x2c] sm:$0xf]
      %v1431 = vld [vmem:[%s288 + $0x30] sm:$0x3]
      %s1432 = scalar_lea.vmem %s2, 384
      %v1433 = vld [vmem:[%s1432] sm:$0xf]
      %v1434 = vld [vmem:[%s1432 + $0x4] sm:$0xf]
      %v1435 = vld [vmem:[%s1432 + $0x8] sm:$0xf]
      %v1436 = vld [vmem:[%s1432 + $0xc] sm:$0xf]
      %v1437 = vld [vmem:[%s1432 + $0x10] sm:$0xf]
      %v1438 = vld [vmem:[%s1432 + $0x14] sm:$0xf]
      %v1439 = vld [vmem:[%s1432 + $0x18] sm:$0xf]
      %v1440 = vld [vmem:[%s1432 + $0x1c] sm:$0xf]
      %v1441 = vld [vmem:[%s1432 + $0x20] sm:$0xf]
      %v1442 = vld [vmem:[%s1432 + $0x24] sm:$0xf]
      %v1443 = vld [vmem:[%s1432 + $0x28] sm:$0xf]
      %v1444 = vld [vmem:[%s1432 + $0x2c] sm:$0xf]
      %v1445 = vld [vmem:[%s1432 + $0x30] sm:$0xf]
      %v1446 = vld [vmem:[%s1432 + $0x34] sm:$0xf]
      %v1447 = vld [vmem:[%s1432 + $0x38] sm:$0xf]
      %v1448 = vld [vmem:[%s1432 + $0x3c] sm:$0xf]
      %v1460 = vunpack.c.l.b16 %v1421
      %v1461 = vunpack.c.l.b16 %v1422
      %v1462 = vunpack.c.l.b16 %v1423
      %v1463 = vunpack.c.l.b16 %v1424
      %v1464 = vunpack.c.l.b16 %v1425
      %v1465 = vunpack.c.l.b16 %v1426
      %v1466 = vunpack.c.l.b16 %v1427
      %v1467 = vunpack.c.l.b16 %v1428
      %v1468 = vunpack.c.l.b16 %v1429
      %v1469 = vunpack.c.l.b16 %v1430
      %v1470 = vunpack.c.l.b16 %v1431
      %v1471 = vpack.c.b16 %v1461, %v1460
      %v1472 = vpack.c.b16 %v1463, %v1462
      %v1473 = vpack.c.b16 %v1465, %v1464
      %v1474 = vpack.c.b16 %v1467, %v1466
      %v1475 = vpack.c.b16 %v1469, %v1468
      %v1476 = vpack.c.b16 %v1470, %v1470
      %v1477 = vrot.slane %v1471, 2
      %v1478 = vrot.slane %v1472, 2
      %v1479 = vsel %vm1273, %v1477, %v1478
      %v1480 = vrot.slane %v1473, 2
      %v1481 = vsel %vm1273, %v1478, %v1480
      %v1482 = vrot.slane %v1474, 2
      %v1483 = vsel %vm1273, %v1480, %v1482
      %v1484 = vrot.slane %v1475, 2
      %v1485 = vsel %vm1273, %v1482, %v1484
      %v1486 = vrot.slane %v1476, 2
      %v1487 = vsel %vm1273, %v1484, %v1486
      %v1509 = vunpack.c.l.b16 %v1433
      %v1510 = vunpack.c.l.b16 %v1434
      %v1511 = vunpack.c.l.b16 %v1435
      %v1512 = vunpack.c.l.b16 %v1436
      %v1513 = vunpack.c.l.b16 %v1437
      %v1514 = vunpack.c.l.b16 %v1438
      %v1515 = vunpack.c.l.b16 %v1439
      %v1516 = vunpack.c.l.b16 %v1440
      %v1517 = vunpack.c.l.b16 %v1441
      %v1518 = vunpack.c.l.b16 %v1442
      %v1519 = vunpack.c.l.b16 %v1443
      %v1520 = vunpack.c.l.b16 %v1444
      %v1521 = vunpack.c.l.b16 %v1445
      %v1522 = vunpack.c.l.b16 %v1446
      %v1523 = vunpack.c.l.b16 %v1447
      %v1524 = vunpack.c.l.b16 %v1448
      %v1525 = vpack.c.b16 %v1510, %v1509
      %v1526 = vpack.c.b16 %v1512, %v1511
      %v1527 = vpack.c.b16 %v1514, %v1513
      %v1528 = vpack.c.b16 %v1516, %v1515
      %v1529 = vpack.c.b16 %v1518, %v1517
      %v1530 = vpack.c.b16 %v1520, %v1519
      %v1531 = vpack.c.b16 %v1522, %v1521
      %v1532 = vpack.c.b16 %v1524, %v1523
      %1541 = vmatprep.subr.bf16.mxu0 0
      %1542 = vmatpush1.bf16.msra.mxu0 %v1525
      %1543 = vmatprep.subr.bf16.mxu0 0
      %1544 = vmatpush1.bf16.msra.mxu0 %v1526
      %1545 = vmatprep.subr.bf16.mxu0 0
      %1546 = vmatpush1.bf16.msra.mxu0 %v1527
      %1547 = vmatprep.subr.bf16.mxu0 0
      %1548 = vmatpush1.bf16.msra.mxu0 %v1528
      %1549 = vmatprep.subr.bf16.mxu0 0
      %1550 = vmatpush1.bf16.msra.mxu0 %v1529
      %1551 = vmatprep.subr.bf16.mxu0 0
      %1552 = vmatpush1.bf16.msra.mxu0 %v1530
      %1553 = vmatprep.subr.bf16.mxu0 0
      %1554 = vmatpush1.bf16.msra.mxu0 %v1531
      %1555 = vmatprep.subr.bf16.mxu0 0
      %1556 = vmatpush1.bf16.msra.mxu0 %v1532
      %1557 = vmatprep.subr.bf16.mxu0 0
      %1558 = vmatpush1.bf16.msra.mxu0 0
      %1559 = vmatprep.subr.bf16.mxu0 0
      %1560 = vmatpush1.bf16.msra.mxu0 0
      %1561 = vmatprep.subr.bf16.mxu0 0
      %1562 = vmatpush1.bf16.msra.mxu0 0
      %1563 = vmatprep.subr.bf16.mxu0 0
      %1564 = vmatpush1.bf16.msra.mxu0 0
      %1565 = vmatprep.subr.bf16.mxu0 0
      %1566 = vmatpush1.bf16.msra.mxu0 0
      %1567 = vmatprep.subr.bf16.mxu0 0
      %1568 = vmatpush1.bf16.msra.mxu0 0
      %1569 = vmatprep.subr.bf16.mxu0 0
      %1570 = vmatpush1.bf16.msra.mxu0 0
      %1571 = vmatprep.subr.bf16.mxu0 0
      %1572 = vmatpush1.bf16.msra.mxu0 0
      %1573 = vmatprep.mubr.bf16.mxu0 0
      %1574 = vmatmul.mubr.bf16.gmra.mrb[0].mxu0 %v1479
      %v1575 = vpop.f32.mrb[0].mxu0
      %v1576 = vadd.f32 0.0, %v1575
      %v1577 = vpop.f32.mrb[0].mxu0
      %v1578 = vpop.f32.mrb[0].mxu0
      %v1579 = vadd.f32 0.0, %v1578
      %v1580 = vpop.f32.mrb[0].mxu0
      %1581 = vmatprep.mubr.bf16.mxu0 0
      %1582 = vmatmul.mubr.bf16.gmra.mrb[0].mxu0 %v1481
      %v1583 = vpop.f32.mrb[0].mxu0
      %v1584 = vadd.f32 0.0, %v1583
      %v1585 = vpop.f32.mrb[0].mxu0
      %v1586 = vpop.f32.mrb[0].mxu0
      %v1587 = vadd.f32 0.0, %v1586
      %v1588 = vpop.f32.mrb[0].mxu0
      %1589 = vmatprep.mubr.bf16.mxu0 0
      %1590 = vmatmul.mubr.bf16.gmra.mrb[0].mxu0 %v1483
      %v1591 = vpop.f32.mrb[0].mxu0
      %v1592 = vadd.f32 0.0, %v1591
      %v1593 = vpop.f32.mrb[0].mxu0
      %v1594 = vpop.f32.mrb[0].mxu0
      %v1595 = vadd.f32 0.0, %v1594
      %v1596 = vpop.f32.mrb[0].mxu0
      %1597 = vmatprep.mubr.bf16.mxu0 0
      %1598 = vmatmul.mubr.bf16.gmra.mrb[0].mxu0 %v1485
      %v1599 = vpop.f32.mrb[0].mxu0
      %v1600 = vadd.f32 0.0, %v1599
      %v1601 = vpop.f32.mrb[0].mxu0
      %v1602 = vpop.f32.mrb[0].mxu0
      %v1603 = vadd.f32 0.0, %v1602
      %v1604 = vpop.f32.mrb[0].mxu0
      %1605 = vmatprep.mubr.bf16.mxu0 0
      %1606 = vmatmul.mubr.bf16.gmra.mrb[0].mxu0 %v1487
      %v1607 = vpop.f32.mrb[0].mxu0
      %v1608 = vadd.f32 0.0, %v1607
      %v1609 = vpop.f32.mrb[0].mxu0
      %v1610 = vpop.f32.mrb[0].mxu0
      %v1611 = vadd.f32 0.0, %v1610
      %v1612 = vpop.f32.mrb[0].mxu0
      %1613 = vdwg.mxu0
      %v1614 = vadd.f32 %v1411, %v1576
      %v1615 = vadd.f32 %v1412, %v1579
      %v1616 = vadd.f32 %v1413, %v1584
      %v1617 = vadd.f32 %v1414, %v1587
      %v1618 = vadd.f32 %v1415, %v1592
      %v1619 = vadd.f32 %v1416, %v1595
      %v1620 = vadd.f32 %v1417, %v1600
      %v1621 = vadd.f32 %v1418, %v1603
      %v1622 = vadd.f32 %v1419, %v1608
      %v1623 = vadd.f32 %v1420, %v1611
      %v1624 = vld [vmem:[%s288 + $0x30] sm:$0x7]
      %s1625 = scalar_lea.vmem %s2, 448
      %v1626 = vld [vmem:[%s1625] sm:$0xf]
      %v1627 = vld [vmem:[%s1625 + $0x4] sm:$0xf]
      %v1628 = vld [vmem:[%s1625 + $0x8] sm:$0xf]
      %v1629 = vld [vmem:[%s1625 + $0xc] sm:$0xf]
      %v1630 = vld [vmem:[%s1625 + $0x10] sm:$0xf]
      %v1631 = vld [vmem:[%s1625 + $0x14] sm:$0xf]
      %v1632 = vld [vmem:[%s1625 + $0x18] sm:$0xf]
      %v1633 = vld [vmem:[%s1625 + $0x1c] sm:$0xf]
      %v1634 = vld [vmem:[%s1625 + $0x20] sm:$0xf]
      %v1635 = vld [vmem:[%s1625 + $0x24] sm:$0xf]
      %v1636 = vld [vmem:[%s1625 + $0x28] sm:$0xf]
      %v1637 = vld [vmem:[%s1625 + $0x2c] sm:$0xf]
      %v1638 = vld [vmem:[%s1625 + $0x30] sm:$0xf]
      %v1639 = vld [vmem:[%s1625 + $0x34] sm:$0xf]
      %v1640 = vld [vmem:[%s1625 + $0x38] sm:$0xf]
      %v1641 = vld [vmem:[%s1625 + $0x3c] sm:$0xf]
      %v1643 = vunpack.c.l.b16 %v1624
      %v1644 = vpack.c.b16 %v1643, %v1643
      %vm1645 = vsmask.f32 5376
      %v1647 = vshrl.u32 %v1471, 16
      %v1649 = vrot.slane %v1647, 2
      %v1650 = vshll.u32 %v1471, 16
      %v1652 = vrot.slane %v1650, 3
      %v1653 = vor.u32 %v1649, %v1652
      %v1655 = vshrl.u32 %v1472, 16
      %v1657 = vrot.slane %v1655, 2
      %v1658 = vshll.u32 %v1472, 16
      %v1660 = vrot.slane %v1658, 3
      %v1661 = vor.u32 %v1657, %v1660
      %v1662 = vsel %vm1645, %v1653, %v1661
      %v1664 = vshrl.u32 %v1473, 16
      %v1666 = vrot.slane %v1664, 2
      %v1667 = vshll.u32 %v1473, 16
      %v1669 = vrot.slane %v1667, 3
      %v1670 = vor.u32 %v1666, %v1669
      %v1671 = vsel %vm1645, %v1661, %v1670
      %v1673 = vshrl.u32 %v1474, 16
      %v1675 = vrot.slane %v1673, 2
      %v1676 = vshll.u32 %v1474, 16
      %v1678 = vrot.slane %v1676, 3
      %v1679 = vor.u32 %v1675, %v1678
      %v1680 = vsel %vm1645, %v1670, %v1679
      %v1682 = vshrl.u32 %v1475, 16
      %v1684 = vrot.slane %v1682, 2
      %v1685 = vshll.u32 %v1475, 16
      %v1687 = vrot.slane %v1685, 3
      %v1688 = vor.u32 %v1684, %v1687
      %v1689 = vsel %vm1645, %v1679, %v1688
      %v1691 = vshrl.u32 %v1644, 16
      %v1693 = vrot.slane %v1691, 2
      %v1694 = vshll.u32 %v1644, 16
      %v1696 = vrot.slane %v1694, 3
      %v1697 = vor.u32 %v1693, %v1696
      %v1698 = vsel %vm1645, %v1688, %v1697
      %v1720 = vunpack.c.l.b16 %v1626
      %v1721 = vunpack.c.l.b16 %v1627
      %v1722 = vunpack.c.l.b16 %v1628
      %v1723 = vunpack.c.l.b16 %v1629
      %v1724 = vunpack.c.l.b16 %v1630
      %v1725 = vunpack.c.l.b16 %v1631
      %v1726 = vunpack.c.l.b16 %v1632
      %v1727 = vunpack.c.l.b16 %v1633
      %v1728 = vunpack.c.l.b16 %v1634
      %v1729 = vunpack.c.l.b16 %v1635
      %v1730 = vunpack.c.l.b16 %v1636
      %v1731 = vunpack.c.l.b16 %v1637
      %v1732 = vunpack.c.l.b16 %v1638
      %v1733 = vunpack.c.l.b16 %v1639
      %v1734 = vunpack.c.l.b16 %v1640
      %v1735 = vunpack.c.l.b16 %v1641
      %v1736 = vpack.c.b16 %v1721, %v1720
      %v1737 = vpack.c.b16 %v1723, %v1722
      %v1738 = vpack.c.b16 %v1725, %v1724
      %v1739 = vpack.c.b16 %v1727, %v1726
      %v1740 = vpack.c.b16 %v1729, %v1728
      %v1741 = vpack.c.b16 %v1731, %v1730
      %v1742 = vpack.c.b16 %v1733, %v1732
      %v1743 = vpack.c.b16 %v1735, %v1734
      %1752 = vmatprep.subr.bf16.mxu0 0
      %1753 = vmatpush1.bf16.msra.mxu0 %v1736
      %1754 = vmatprep.subr.bf16.mxu0 0
      %1755 = vmatpush1.bf16.msra.mxu0 %v1737
      %1756 = vmatprep.subr.bf16.mxu0 0
      %1757 = vmatpush1.bf16.msra.mxu0 %v1738
      %1758 = vmatprep.subr.bf16.mxu0 0
      %1759 = vmatpush1.bf16.msra.mxu0 %v1739
      %1760 = vmatprep.subr.bf16.mxu0 0
      %1761 = vmatpush1.bf16.msra.mxu0 %v1740
      %1762 = vmatprep.subr.bf16.mxu0 0
      %1763 = vmatpush1.bf16.msra.mxu0 %v1741
      %1764 = vmatprep.subr.bf16.mxu0 0
      %1765 = vmatpush1.bf16.msra.mxu0 %v1742
      %1766 = vmatprep.subr.bf16.mxu0 0
      %1767 = vmatpush1.bf16.msra.mxu0 %v1743
      %1768 = vmatprep.subr.bf16.mxu0 0
      %1769 = vmatpush1.bf16.msra.mxu0 0
      %1770 = vmatprep.subr.bf16.mxu0 0
      %1771 = vmatpush1.bf16.msra.mxu0 0
      %1772 = vmatprep.subr.bf16.mxu0 0
      %1773 = vmatpush1.bf16.msra.mxu0 0
      %1774 = vmatprep.subr.bf16.mxu0 0
      %1775 = vmatpush1.bf16.msra.mxu0 0
      %1776 = vmatprep.subr.bf16.mxu0 0
      %1777 = vmatpush1.bf16.msra.mxu0 0
      %1778 = vmatprep.subr.bf16.mxu0 0
      %1779 = vmatpush1.bf16.msra.mxu0 0
      %1780 = vmatprep.subr.bf16.mxu0 0
      %1781 = vmatpush1.bf16.msra.mxu0 0
      %1782 = vmatprep.subr.bf16.mxu0 0
      %1783 = vmatpush1.bf16.msra.mxu0 0
      %1784 = vmatprep.mubr.bf16.mxu0 0
      %1785 = vmatmul.mubr.bf16.gmra.mrb[0].mxu0 %v1662
      %v1786 = vpop.f32.mrb[0].mxu0
      %v1787 = vadd.f32 0.0, %v1786
      %v1788 = vpop.f32.mrb[0].mxu0
      %v1789 = vpop.f32.mrb[0].mxu0
      %v1790 = vadd.f32 0.0, %v1789
      %v1791 = vpop.f32.mrb[0].mxu0
      %1792 = vmatprep.mubr.bf16.mxu0 0
      %1793 = vmatmul.mubr.bf16.gmra.mrb[0].mxu0 %v1671
      %v1794 = vpop.f32.mrb[0].mxu0
      %v1795 = vadd.f32 0.0, %v1794
      %v1796 = vpop.f32.mrb[0].mxu0
      %v1797 = vpop.f32.mrb[0].mxu0
      %v1798 = vadd.f32 0.0, %v1797
      %v1799 = vpop.f32.mrb[0].mxu0
      %1800 = vmatprep.mubr.bf16.mxu0 0
      %1801 = vmatmul.mubr.bf16.gmra.mrb[0].mxu0 %v1680
      %v1802 = vpop.f32.mrb[0].mxu0
      %v1803 = vadd.f32 0.0, %v1802
      %v1804 = vpop.f32.mrb[0].mxu0
      %v1805 = vpop.f32.mrb[0].mxu0
      %v1806 = vadd.f32 0.0, %v1805
      %v1807 = vpop.f32.mrb[0].mxu0
      %1808 = vmatprep.mubr.bf16.mxu0 0
      %1809 = vmatmul.mubr.bf16.gmra.mrb[0].mxu0 %v1689
      %v1810 = vpop.f32.mrb[0].mxu0
      %v1811 = vadd.f32 0.0, %v1810
      %v1812 = vpop.f32.mrb[0].mxu0
      %v1813 = vpop.f32.mrb[0].mxu0
      %v1814 = vadd.f32 0.0, %v1813
      %v1815 = vpop.f32.mrb[0].mxu0
      %1816 = vmatprep.mubr.bf16.mxu0 0
      %1817 = vmatmul.mubr.bf16.gmra.mrb[0].mxu0 %v1698
      %v1818 = vpop.f32.mrb[0].mxu0
      %v1819 = vadd.f32 0.0, %v1818
      %v1820 = vpop.f32.mrb[0].mxu0
      %v1821 = vpop.f32.mrb[0].mxu0
      %v1822 = vadd.f32 0.0, %v1821
      %v1823 = vpop.f32.mrb[0].mxu0
      %1824 = vdwg.mxu0
      %v1825 = vadd.f32 %v1614, %v1787
      %v1826 = vadd.f32 %v1615, %v1790
      %v1827 = vadd.f32 %v1616, %v1795
      %v1828 = vadd.f32 %v1617, %v1798
      %v1829 = vadd.f32 %v1618, %v1803
      %v1830 = vadd.f32 %v1619, %v1806
      %v1831 = vadd.f32 %v1620, %v1811
      %v1832 = vadd.f32 %v1621, %v1814
      %v1833 = vadd.f32 %v1622, %v1819
      %v1834 = vadd.f32 %v1623, %v1822
      %v1835 = vld [vmem:[%s288 + $0x8] sm:$0x8]
      %s1836 = scalar_lea.vmem %s2, 512
      %v1837 = vld [vmem:[%s1836] sm:$0xf]
      %v1838 = vld [vmem:[%s1836 + $0x4] sm:$0xf]
      %v1839 = vld [vmem:[%s1836 + $0x8] sm:$0xf]
      %v1840 = vld [vmem:[%s1836 + $0xc] sm:$0xf]
      %v1841 = vld [vmem:[%s1836 + $0x10] sm:$0xf]
      %v1842 = vld [vmem:[%s1836 + $0x14] sm:$0xf]
      %v1843 = vld [vmem:[%s1836 + $0x18] sm:$0xf]
      %v1844 = vld [vmem:[%s1836 + $0x1c] sm:$0xf]
      %v1845 = vld [vmem:[%s1836 + $0x20] sm:$0xf]
      %v1846 = vld [vmem:[%s1836 + $0x24] sm:$0xf]
      %v1847 = vld [vmem:[%s1836 + $0x28] sm:$0xf]
      %v1848 = vld [vmem:[%s1836 + $0x2c] sm:$0xf]
      %v1849 = vld [vmem:[%s1836 + $0x30] sm:$0xf]
      %v1850 = vld [vmem:[%s1836 + $0x34] sm:$0xf]
      %v1851 = vld [vmem:[%s1836 + $0x38] sm:$0xf]
      %v1852 = vld [vmem:[%s1836 + $0x3c] sm:$0xf]
      %v1854 = vunpack.c.l.b16 %v1835
      %v1855 = vpack.c.b16 %v1461, %v1854
      %vm1856 = vcmask 1044480
      %v1857 = vrot.slane %v1855, 3
      %v1858 = vrot.slane %v1472, 3
      %v1859 = vsel %vm1856, %v1857, %v1858
      %v1860 = vrot.slane %v1473, 3
      %v1861 = vsel %vm1856, %v1858, %v1860
      %v1862 = vrot.slane %v1474, 3
      %v1863 = vsel %vm1856, %v1860, %v1862
      %v1864 = vrot.slane %v1475, 3
      %v1865 = vsel %vm1856, %v1862, %v1864
      %v1866 = vrot.slane %v1644, 3
      %v1867 = vsel %vm1856, %v1864, %v1866
      %v1889 = vunpack.c.l.b16 %v1837
      %v1890 = vunpack.c.l.b16 %v1838
      %v1891 = vunpack.c.l.b16 %v1839
      %v1892 = vunpack.c.l.b16 %v1840
      %v1893 = vunpack.c.l.b16 %v1841
      %v1894 = vunpack.c.l.b16 %v1842
      %v1895 = vunpack.c.l.b16 %v1843
      %v1896 = vunpack.c.l.b16 %v1844
      %v1897 = vunpack.c.l.b16 %v1845
      %v1898 = vunpack.c.l.b16 %v1846
      %v1899 = vunpack.c.l.b16 %v1847
      %v1900 = vunpack.c.l.b16 %v1848
      %v1901 = vunpack.c.l.b16 %v1849
      %v1902 = vunpack.c.l.b16 %v1850
      %v1903 = vunpack.c.l.b16 %v1851
      %v1904 = vunpack.c.l.b16 %v1852
      %v1905 = vpack.c.b16 %v1890, %v1889
      %v1906 = vpack.c.b16 %v1892, %v1891
      %v1907 = vpack.c.b16 %v1894, %v1893
      %v1908 = vpack.c.b16 %v1896, %v1895
      %v1909 = vpack.c.b16 %v1898, %v1897
      %v1910 = vpack.c.b16 %v1900, %v1899
      %v1911 = vpack.c.b16 %v1902, %v1901
      %v1912 = vpack.c.b16 %v1904, %v1903
      %1921 = vmatprep.subr.bf16.mxu0 0
      %1922 = vmatpush1.bf16.msra.mxu0 %v1905
      %1923 = vmatprep.subr.bf16.mxu0 0
      %1924 = vmatpush1.bf16.msra.mxu0 %v1906
      %1925 = vmatprep.subr.bf16.mxu0 0
      %1926 = vmatpush1.bf16.msra.mxu0 %v1907
      %1927 = vmatprep.subr.bf16.mxu0 0
      %1928 = vmatpush1.bf16.msra.mxu0 %v1908
      %1929 = vmatprep.subr.bf16.mxu0 0
      %1930 = vmatpush1.bf16.msra.mxu0 %v1909
      %1931 = vmatprep.subr.bf16.mxu0 0
      %1932 = vmatpush1.bf16.msra.mxu0 %v1910
      %1933 = vmatprep.subr.bf16.mxu0 0
      %1934 = vmatpush1.bf16.msra.mxu0 %v1911
      %1935 = vmatprep.subr.bf16.mxu0 0
      %1936 = vmatpush1.bf16.msra.mxu0 %v1912
      %1937 = vmatprep.subr.bf16.mxu0 0
      %1938 = vmatpush1.bf16.msra.mxu0 0
      %1939 = vmatprep.subr.bf16.mxu0 0
      %1940 = vmatpush1.bf16.msra.mxu0 0
      %1941 = vmatprep.subr.bf16.mxu0 0
      %1942 = vmatpush1.bf16.msra.mxu0 0
      %1943 = vmatprep.subr.bf16.mxu0 0
      %1944 = vmatpush1.bf16.msra.mxu0 0
      %1945 = vmatprep.subr.bf16.mxu0 0
      %1946 = vmatpush1.bf16.msra.mxu0 0
      %1947 = vmatprep.subr.bf16.mxu0 0
      %1948 = vmatpush1.bf16.msra.mxu0 0
      %1949 = vmatprep.subr.bf16.mxu0 0
      %1950 = vmatpush1.bf16.msra.mxu0 0
      %1951 = vmatprep.subr.bf16.mxu0 0
      %1952 = vmatpush1.bf16.msra.mxu0 0
      %1953 = vmatprep.mubr.bf16.mxu0 0
      %1954 = vmatmul.mubr.bf16.gmra.mrb[0].mxu0 %v1859
      %v1955 = vpop.f32.mrb[0].mxu0
      %v1956 = vadd.f32 0.0, %v1955
      %v1957 = vpop.f32.mrb[0].mxu0
      %v1958 = vpop.f32.mrb[0].mxu0
      %v1959 = vadd.f32 0.0, %v1958
      %v1960 = vpop.f32.mrb[0].mxu0
      %1961 = vmatprep.mubr.bf16.mxu0 0
      %1962 = vmatmul.mubr.bf16.gmra.mrb[0].mxu0 %v1861
      %v1963 = vpop.f32.mrb[0].mxu0
      %v1964 = vadd.f32 0.0, %v1963
      %v1965 = vpop.f32.mrb[0].mxu0
      %v1966 = vpop.f32.mrb[0].mxu0
      %v1967 = vadd.f32 0.0, %v1966
      %v1968 = vpop.f32.mrb[0].mxu0
      %1969 = vmatprep.mubr.bf16.mxu0 0
      %1970 = vmatmul.mubr.bf16.gmra.mrb[0].mxu0 %v1863
      %v1971 = vpop.f32.mrb[0].mxu0
      %v1972 = vadd.f32 0.0, %v1971
      %v1973 = vpop.f32.mrb[0].mxu0
      %v1974 = vpop.f32.mrb[0].mxu0
      %v1975 = vadd.f32 0.0, %v1974
      %v1976 = vpop.f32.mrb[0].mxu0
      %1977 = vmatprep.mubr.bf16.mxu0 0
      %1978 = vmatmul.mubr.bf16.gmra.mrb[0].mxu0 %v1865
      %v1979 = vpop.f32.mrb[0].mxu0
      %v1980 = vadd.f32 0.0, %v1979
      %v1981 = vpop.f32.mrb[0].mxu0
      %v1982 = vpop.f32.mrb[0].mxu0
      %v1983 = vadd.f32 0.0, %v1982
      %v1984 = vpop.f32.mrb[0].mxu0
      %1985 = vmatprep.mubr.bf16.mxu0 0
      %1986 = vmatmul.mubr.bf16.gmra.mrb[0].mxu0 %v1867
      %v1987 = vpop.f32.mrb[0].mxu0
      %v1988 = vadd.f32 0.0, %v1987
      %v1989 = vpop.f32.mrb[0].mxu0
      %v1990 = vpop.f32.mrb[0].mxu0
      %v1991 = vadd.f32 0.0, %v1990
      %v1992 = vpop.f32.mrb[0].mxu0
      %1993 = vdwg.mxu0
      %v1994 = vadd.f32 %v1825, %v1956
      %v1995 = vadd.f32 %v1826, %v1959
      %v1996 = vadd.f32 %v1827, %v1964
      %v1997 = vadd.f32 %v1828, %v1967
      %v1998 = vadd.f32 %v1829, %v1972
      %v1999 = vadd.f32 %v1830, %v1975
      %v2000 = vadd.f32 %v1831, %v1980
      %v2001 = vadd.f32 %v1832, %v1983
      %v2002 = vadd.f32 %v1833, %v1988
      %v2003 = vadd.f32 %v1834, %v1991
      %v2004 = vld [vmem:[%s3] sm:$0x1]
      %v2006 = vlaneseq
      %v2007 = vshrl.u32 %v2006, 7
      %v2008 = vsub.s32 0, %v2007
      %v2009 = vrot.slane %v2004, %v2008
      %v2011 = vadd.f32 %v1994, %v2009
      %v2012 = vadd.f32 %v1995, %v2009
      %v2013 = vadd.f32 %v1996, %v2009
      %v2014 = vadd.f32 %v1997, %v2009
      %v2015 = vadd.f32 %v1998, %v2009
      %v2016 = vadd.f32 %v1999, %v2009
      %v2017 = vadd.f32 %v2000, %v2009
      %v2018 = vadd.f32 %v2001, %v2009
      %v2019 = vadd.f32 %v2002, %v2009
      %v2020 = vadd.f32 %v2003, %v2009
      %v2021 = vmax.f32 %v2011, 0.0
      %v2022 = vmax.f32 %v2012, 0.0
      %v2023 = vmax.f32 %v2013, 0.0
      %v2024 = vmax.f32 %v2014, 0.0
      %v2025 = vmax.f32 %v2015, 0.0
      %v2026 = vmax.f32 %v2016, 0.0
      %v2027 = vmax.f32 %v2017, 0.0
      %v2028 = vmax.f32 %v2018, 0.0
      %v2029 = vmax.f32 %v2019, 0.0
      %v2030 = vmax.f32 %v2020, 0.0
      %v2031 = vpack.c.bf16 %v2022, %v2021
      %v2032 = vpack.c.bf16 %v2024, %v2023
      %v2033 = vpack.c.bf16 %v2026, %v2025
      %v2034 = vpack.c.bf16 %v2028, %v2027
      %v2035 = vpack.c.bf16 %v2030, %v2029
      %v2036 = vld [vmem:[%s4] sm:$0xf]
      %v2037 = vld [vmem:[%s4 + $0x4] sm:$0xf]
      %v2038 = vld [vmem:[%s4 + $0x8] sm:$0xf]
      %v2039 = vld [vmem:[%s4 + $0xc] sm:$0xf]
      %v2040 = vld [vmem:[%s4 + $0x10] sm:$0xf]
      %v2041 = vld [vmem:[%s4 + $0x14] sm:$0xf]
      %v2042 = vld [vmem:[%s4 + $0x18] sm:$0xf]
      %v2043 = vld [vmem:[%s4 + $0x1c] sm:$0xf]
      %v2044 = vld [vmem:[%s4 + $0x20] sm:$0xf]
      %v2045 = vld [vmem:[%s4 + $0x24] sm:$0xf]
      %v2046 = vld [vmem:[%s4 + $0x28] sm:$0xf]
      %v2047 = vld [vmem:[%s4 + $0x2c] sm:$0xf]
      %v2048 = vld [vmem:[%s4 + $0x30] sm:$0xf]
      %v2049 = vld [vmem:[%s4 + $0x34] sm:$0xf]
      %v2050 = vld [vmem:[%s4 + $0x38] sm:$0xf]
      %v2051 = vld [vmem:[%s4 + $0x3c] sm:$0xf]
      %v2052 = vld [vmem:[%s293] sm:$0xf]
      %v2053 = vld [vmem:[%s293 + $0x4] sm:$0xf]
      %v2054 = vld [vmem:[%s293 + $0x8] sm:$0xf]
      %v2055 = vld [vmem:[%s293 + $0xc] sm:$0xf]
      %v2056 = vld [vmem:[%s293 + $0x10] sm:$0xf]
      %v2057 = vld [vmem:[%s293 + $0x14] sm:$0xf]
      %v2058 = vld [vmem:[%s293 + $0x18] sm:$0xf]
      %v2059 = vld [vmem:[%s293 + $0x1c] sm:$0xf]
      %v2060 = vld [vmem:[%s293 + $0x20] sm:$0xf]
      %v2061 = vld [vmem:[%s293 + $0x24] sm:$0xf]
      %v2062 = vld [vmem:[%s5] sm:$0xf]
      %v2063 = vld [vmem:[%s5 + $0x4] sm:$0xf]
      %v2064 = vld [vmem:[%s5 + $0x8] sm:$0xf]
      %v2065 = vld [vmem:[%s5 + $0xc] sm:$0xf]
      %v2066 = vld [vmem:[%s5 + $0x10] sm:$0xf]
      %v2067 = vld [vmem:[%s5 + $0x14] sm:$0xf]
      %v2068 = vld [vmem:[%s5 + $0x18] sm:$0xf]
      %v2069 = vld [vmem:[%s5 + $0x1c] sm:$0xf]
      %v2070 = vld [vmem:[%s5 + $0x20] sm:$0xf]
      %v2071 = vld [vmem:[%s5 + $0x24] sm:$0xf]
      %v2072 = vld [vmem:[%s5 + $0x28] sm:$0xf]
      %v2073 = vld [vmem:[%s5 + $0x2c] sm:$0xf]
      %v2074 = vld [vmem:[%s5 + $0x30] sm:$0xf]
      %v2075 = vld [vmem:[%s5 + $0x34] sm:$0xf]
      %v2076 = vld [vmem:[%s5 + $0x38] sm:$0xf]
      %v2077 = vld [vmem:[%s5 + $0x3c] sm:$0xf]
      %v2078 = vld [vmem:[%s6] sm:$0x1]
      %v2080 = vlaneseq
      %v2081 = vshrl.u32 %v2080, 7
      %v2082 = vsub.s32 0, %v2081
      %v2083 = vrot.slane %v2078, %v2082
      %v2095 = vunpack.c.l.b16 %v2052
      %v2096 = vunpack.c.l.b16 %v2053
      %v2097 = vunpack.c.l.b16 %v2054
      %v2098 = vunpack.c.l.b16 %v2055
      %v2099 = vunpack.c.l.b16 %v2056
      %v2100 = vunpack.c.l.b16 %v2057
      %v2101 = vunpack.c.l.b16 %v2058
      %v2102 = vunpack.c.l.b16 %v2059
      %v2103 = vunpack.c.l.b16 %v2060
      %v2104 = vunpack.c.l.b16 %v2061
      %v2105 = vpack.c.b16 %v2096, %v2095
      %v2106 = vpack.c.b16 %v2098, %v2097
      %v2107 = vpack.c.b16 %v2100, %v2099
      %v2108 = vpack.c.b16 %v2102, %v2101
      %v2109 = vpack.c.b16 %v2104, %v2103
      %v2131 = vunpack.c.l.b16 %v2062
      %v2132 = vunpack.c.l.b16 %v2063
      %v2133 = vunpack.c.l.b16 %v2064
      %v2134 = vunpack.c.l.b16 %v2065
      %v2135 = vunpack.c.l.b16 %v2066
      %v2136 = vunpack.c.l.b16 %v2067
      %v2137 = vunpack.c.l.b16 %v2068
      %v2138 = vunpack.c.l.b16 %v2069
      %v2139 = vunpack.c.l.b16 %v2070
      %v2140 = vunpack.c.l.b16 %v2071
      %v2141 = vunpack.c.l.b16 %v2072
      %v2142 = vunpack.c.l.b16 %v2073
      %v2143 = vunpack.c.l.b16 %v2074
      %v2144 = vunpack.c.l.b16 %v2075
      %v2145 = vunpack.c.l.b16 %v2076
      %v2146 = vunpack.c.l.b16 %v2077
      %v2147 = vpack.c.b16 %v2132, %v2131
      %v2148 = vpack.c.b16 %v2134, %v2133
      %v2149 = vpack.c.b16 %v2136, %v2135
      %v2150 = vpack.c.b16 %v2138, %v2137
      %v2151 = vpack.c.b16 %v2140, %v2139
      %v2152 = vpack.c.b16 %v2142, %v2141
      %v2153 = vpack.c.b16 %v2144, %v2143
      %v2154 = vpack.c.b16 %v2146, %v2145
      %2163 = vmatprep.subr.bf16.mxu0 0
      %2164 = vmatpush1.bf16.msra.mxu0 %v2147
      %2165 = vmatprep.subr.bf16.mxu0 0
      %2166 = vmatpush1.bf16.msra.mxu0 %v2148
      %2167 = vmatprep.subr.bf16.mxu0 0
      %2168 = vmatpush1.bf16.msra.mxu0 %v2149
      %2169 = vmatprep.subr.bf16.mxu0 0
      %2170 = vmatpush1.bf16.msra.mxu0 %v2150
      %2171 = vmatprep.subr.bf16.mxu0 0
      %2172 = vmatpush1.bf16.msra.mxu0 %v2151
      %2173 = vmatprep.subr.bf16.mxu0 0
      %2174 = vmatpush1.bf16.msra.mxu0 %v2152
      %2175 = vmatprep.subr.bf16.mxu0 0
      %2176 = vmatpush1.bf16.msra.mxu0 %v2153
      %2177 = vmatprep.subr.bf16.mxu0 0
      %2178 = vmatpush1.bf16.msra.mxu0 %v2154
      %2179 = vmatprep.subr.bf16.mxu0 0
      %2180 = vmatpush1.bf16.msra.mxu0 0
      %2181 = vmatprep.subr.bf16.mxu0 0
      %2182 = vmatpush1.bf16.msra.mxu0 0
      %2183 = vmatprep.subr.bf16.mxu0 0
      %2184 = vmatpush1.bf16.msra.mxu0 0
      %2185 = vmatprep.subr.bf16.mxu0 0
      %2186 = vmatpush1.bf16.msra.mxu0 0
      %2187 = vmatprep.subr.bf16.mxu0 0
      %2188 = vmatpush1.bf16.msra.mxu0 0
      %2189 = vmatprep.subr.bf16.mxu0 0
      %2190 = vmatpush1.bf16.msra.mxu0 0
      %2191 = vmatprep.subr.bf16.mxu0 0
      %2192 = vmatpush1.bf16.msra.mxu0 0
      %2193 = vmatprep.subr.bf16.mxu0 0
      %2194 = vmatpush1.bf16.msra.mxu0 0
      %2195 = vmatprep.mubr.bf16.mxu0 0
      %2196 = vmatmul.mubr.bf16.gmra.mrb[0].mxu0 %v2105
      %v2197 = vpop.f32.mrb[0].mxu0
      %v2198 = vadd.f32 %v2083, %v2197
      %v2199 = vpop.f32.mrb[0].mxu0
      %v2200 = vpop.f32.mrb[0].mxu0
      %v2201 = vadd.f32 %v2083, %v2200
      %v2202 = vpop.f32.mrb[0].mxu0
      %2203 = vmatprep.mubr.bf16.mxu0 0
      %2204 = vmatmul.mubr.bf16.gmra.mrb[0].mxu0 %v2106
      %v2205 = vpop.f32.mrb[0].mxu0
      %v2206 = vadd.f32 %v2083, %v2205
      %v2207 = vpop.f32.mrb[0].mxu0
      %v2208 = vpop.f32.mrb[0].mxu0
      %v2209 = vadd.f32 %v2083, %v2208
      %v2210 = vpop.f32.mrb[0].mxu0
      %2211 = vmatprep.mubr.bf16.mxu0 0
      %2212 = vmatmul.mubr.bf16.gmra.mrb[0].mxu0 %v2107
      %v2213 = vpop.f32.mrb[0].mxu0
      %v2214 = vadd.f32 %v2083, %v2213
      %v2215 = vpop.f32.mrb[0].mxu0
      %v2216 = vpop.f32.mrb[0].mxu0
      %v2217 = vadd.f32 %v2083, %v2216
      %v2218 = vpop.f32.mrb[0].mxu0
      %2219 = vmatprep.mubr.bf16.mxu0 0
      %2220 = vmatmul.mubr.bf16.gmra.mrb[0].mxu0 %v2108
      %v2221 = vpop.f32.mrb[0].mxu0
      %v2222 = vadd.f32 %v2083, %v2221
      %v2223 = vpop.f32.mrb[0].mxu0
      %v2224 = vpop.f32.mrb[0].mxu0
      %v2225 = vadd.f32 %v2083, %v2224
      %v2226 = vpop.f32.mrb[0].mxu0
      %2227 = vmatprep.mubr.bf16.mxu0 0
      %2228 = vmatmul.mubr.bf16.gmra.mrb[0].mxu0 %v2109
      %v2229 = vpop.f32.mrb[0].mxu0
      %v2230 = vadd.f32 %v2083, %v2229
      %v2231 = vpop.f32.mrb[0].mxu0
      %v2232 = vpop.f32.mrb[0].mxu0
      %v2233 = vadd.f32 %v2083, %v2232
      %v2234 = vpop.f32.mrb[0].mxu0
      %2235 = vdwg.mxu0
      %v2252 = vunpack.c.l.b16 %v2036
      %v2253 = vunpack.c.l.b16 %v2037
      %v2254 = vunpack.c.l.b16 %v2038
      %v2255 = vunpack.c.l.b16 %v2039
      %v2256 = vunpack.c.l.b16 %v2040
      %v2257 = vunpack.c.l.b16 %v2041
      %v2258 = vunpack.c.l.b16 %v2042
      %v2259 = vunpack.c.l.b16 %v2043
      %v2260 = vunpack.c.l.b16 %v2044
      %v2261 = vunpack.c.l.b16 %v2045
      %v2262 = vunpack.c.l.b16 %v2046
      %v2263 = vunpack.c.l.b16 %v2047
      %v2264 = vunpack.c.l.b16 %v2048
      %v2265 = vunpack.c.l.b16 %v2049
      %v2266 = vunpack.c.l.b16 %v2050
      %v2267 = vunpack.c.l.b16 %v2051
      %v2268 = vpack.c.b16 %v2253, %v2252
      %v2269 = vpack.c.b16 %v2255, %v2254
      %v2270 = vpack.c.b16 %v2257, %v2256
      %v2271 = vpack.c.b16 %v2259, %v2258
      %v2272 = vpack.c.b16 %v2261, %v2260
      %v2273 = vpack.c.b16 %v2263, %v2262
      %v2274 = vpack.c.b16 %v2265, %v2264
      %v2275 = vpack.c.b16 %v2267, %v2266
      %2284 = vmatprep.subr.bf16.mxu0 0
      %2285 = vmatpush1.bf16.msra.mxu0 %v2268
      %2286 = vmatprep.subr.bf16.mxu0 0
      %2287 = vmatpush1.bf16.msra.mxu0 %v2269
      %2288 = vmatprep.subr.bf16.mxu0 0
      %2289 = vmatpush1.bf16.msra.mxu0 %v2270
      %2290 = vmatprep.subr.bf16.mxu0 0
      %2291 = vmatpush1.bf16.msra.mxu0 %v2271
      %2292 = vmatprep.subr.bf16.mxu0 0
      %2293 = vmatpush1.bf16.msra.mxu0 %v2272
      %2294 = vmatprep.subr.bf16.mxu0 0
      %2295 = vmatpush1.bf16.msra.mxu0 %v2273
      %2296 = vmatprep.subr.bf16.mxu0 0
      %2297 = vmatpush1.bf16.msra.mxu0 %v2274
      %2298 = vmatprep.subr.bf16.mxu0 0
      %2299 = vmatpush1.bf16.msra.mxu0 %v2275
      %2300 = vmatprep.subr.bf16.mxu0 0
      %2301 = vmatpush1.bf16.msra.mxu0 0
      %2302 = vmatprep.subr.bf16.mxu0 0
      %2303 = vmatpush1.bf16.msra.mxu0 0
      %2304 = vmatprep.subr.bf16.mxu0 0
      %2305 = vmatpush1.bf16.msra.mxu0 0
      %2306 = vmatprep.subr.bf16.mxu0 0
      %2307 = vmatpush1.bf16.msra.mxu0 0
      %2308 = vmatprep.subr.bf16.mxu0 0
      %2309 = vmatpush1.bf16.msra.mxu0 0
      %2310 = vmatprep.subr.bf16.mxu0 0
      %2311 = vmatpush1.bf16.msra.mxu0 0
      %2312 = vmatprep.subr.bf16.mxu0 0
      %2313 = vmatpush1.bf16.msra.mxu0 0
      %2314 = vmatprep.subr.bf16.mxu0 0
      %2315 = vmatpush1.bf16.msra.mxu0 0
      %2316 = vmatprep.mubr.bf16.mxu0 0
      %2317 = vmatmul.mubr.bf16.gmra.mrb[0].mxu0 %v2031
      %v2318 = vpop.f32.mrb[0].mxu0
      %v2319 = vadd.f32 %v2198, %v2318
      %v2320 = vpop.f32.mrb[0].mxu0
      %v2321 = vpop.f32.mrb[0].mxu0
      %v2322 = vadd.f32 %v2201, %v2321
      %v2323 = vpop.f32.mrb[0].mxu0
      %2324 = vmatprep.mubr.bf16.mxu0 0
      %2325 = vmatmul.mubr.bf16.gmra.mrb[0].mxu0 %v2032
      %v2326 = vpop.f32.mrb[0].mxu0
      %v2327 = vadd.f32 %v2206, %v2326
      %v2328 = vpop.f32.mrb[0].mxu0
      %v2329 = vpop.f32.mrb[0].mxu0
      %v2330 = vadd.f32 %v2209, %v2329
      %v2331 = vpop.f32.mrb[0].mxu0
      %2332 = vmatprep.mubr.bf16.mxu0 0
      %2333 = vmatmul.mubr.bf16.gmra.mrb[0].mxu0 %v2033
      %v2334 = vpop.f32.mrb[0].mxu0
      %v2335 = vadd.f32 %v2214, %v2334
      %v2336 = vpop.f32.mrb[0].mxu0
      %v2337 = vpop.f32.mrb[0].mxu0
      %v2338 = vadd.f32 %v2217, %v2337
      %v2339 = vpop.f32.mrb[0].mxu0
      %2340 = vmatprep.mubr.bf16.mxu0 0
      %2341 = vmatmul.mubr.bf16.gmra.mrb[0].mxu0 %v2034
      %v2342 = vpop.f32.mrb[0].mxu0
      %v2343 = vadd.f32 %v2222, %v2342
      %v2344 = vpop.f32.mrb[0].mxu0
      %v2345 = vpop.f32.mrb[0].mxu0
      %v2346 = vadd.f32 %v2225, %v2345
      %v2347 = vpop.f32.mrb[0].mxu0
      %2348 = vmatprep.mubr.bf16.mxu0 0
      %2349 = vmatmul.mubr.bf16.gmra.mrb[0].mxu0 %v2035
      %v2350 = vpop.f32.mrb[0].mxu0
      %v2351 = vadd.f32 %v2230, %v2350
      %v2352 = vpop.f32.mrb[0].mxu0
      %v2353 = vpop.f32.mrb[0].mxu0
      %v2354 = vadd.f32 %v2233, %v2353
      %v2355 = vpop.f32.mrb[0].mxu0
      %2356 = vdwg.mxu0
      %v2357 = vmax.f32 %v2319, 0.0
      %v2358 = vmax.f32 %v2322, 0.0
      %v2359 = vmax.f32 %v2327, 0.0
      %v2360 = vmax.f32 %v2330, 0.0
      %v2361 = vmax.f32 %v2335, 0.0
      %v2362 = vmax.f32 %v2338, 0.0
      %v2363 = vmax.f32 %v2343, 0.0
      %v2364 = vmax.f32 %v2346, 0.0
      %v2365 = vmax.f32 %v2351, 0.0
      %v2366 = vmax.f32 %v2354, 0.0
      %2367 = vst [vmem:[%s298] sm:$0xff] %v2357
      %2368 = vst [vmem:[%s298 + $0x8] sm:$0xff] %v2358
      %2369 = vst [vmem:[%s298 + $0x10] sm:$0xff] %v2359
      %2370 = vst [vmem:[%s298 + $0x18] sm:$0xff] %v2360
      %2371 = vst [vmem:[%s298 + $0x20] sm:$0xff] %v2361
      %2372 = vst [vmem:[%s298 + $0x28] sm:$0xff] %v2362
      %2373 = vst [vmem:[%s298 + $0x30] sm:$0xff] %v2363
      %2374 = vst [vmem:[%s298 + $0x38] sm:$0xff] %v2364
      %2375 = vst [vmem:[%s298 + $0x40] sm:$0xff] %v2365
      %2376 = vst [vmem:[%s298 + $0x48] sm:$0xff] %v2366
      %p2377 = scmp.lt.s32.totalorder %s18, 1
      %s2378 = scalar_select %p2377, %s18, 1
      %s2379 = smul.addr %s2378, 10
      %s2380 = smul.addr %s2379, 8
      %s2381 = scalar_lea.vmem %s7, %s2380
      // Predicated region
      $region49: #{basic_block_forward.3} parent=47 // pred_check
        %p2382 = pneg %p193
      $region50: #{basic_block_forward.3} parent=47 // pred_check_branch
        %2384 = sbr.rel (%p2382) target = $region52
      $region51: #{basic_block_forward.3} parent=47 // pred_region
        _
      $region52: #{basic_block_forward.3} parent=47 // pred_fallthru
        _
    $region48: #{basic_block_forward.3} parent=5 // pred_fallthru
      _
    %p2385 = scmp.le.s32.totalorder 2, %s13
    // Predicated region
    $region53: #{basic_block_forward.3} parent=5 // pred_check
      %p2386 = pneg %p2385
    $region54: #{basic_block_forward.3} parent=5 // pred_check_branch
      %2388 = sbr.rel (%p2386) target = $region56
    $region55: #{basic_block_forward.3} parent=5 // pred_region
      %s2389 = ssub.s32 %s13, 2
      // Predicated region
      $region57: #{basic_block_forward.3} parent=55 // pred_check
        %p2390 = pneg %p199
      $region58: #{basic_block_forward.3} parent=55 // pred_check_branch
        %2392 = sbr.rel (%p2390) target = $region60
      $region59: #{basic_block_forward.3} parent=55 // pred_region
        %p2393 = scmp.lt.s32.totalorder %s19, 1
        %s2394 = scalar_select %p2393, %s19, 1
        %s2395 = smul.addr %s2394, 10
        %s2396 = smul.addr %s2395, 8
        %s2397 = scalar_lea.vmem %s7, %s2396
      $region60: #{basic_block_forward.3} parent=55 // pred_fallthru
        _
    $region56: #{basic_block_forward.3} parent=5 // pred_fallthru
      _
  $region6: #{basic_block_forward.3} parent=0 // loop_footer
    %s17 = sadd.s32 1, %s13
  $region7: #{basic_block_forward.3} parent=0 // loop_footer_branch
    %12 = sbr.rel target = $region3
  $region8: #{basic_block_forward.3} parent=0 // loop_exit
    _

</llo_original>
